<compile_context>
chip_gen: v7x
topology: tpu7x:2x2x1
jax: 0.10.0
libtpu: 0.0.40
codegen_flags: <defaults>
</compile_context>

<pallas_src>
import functools

import jax
import jax.numpy as jnp
import numpy as np
from jax.experimental import pallas as pl
from jax.experimental.pallas import tpu as pltpu

SAMPLE_RATE = 16000
N_FFT = 1024
HOP_LENGTH = 512
N_MELS = 64
N_FREQS = N_FFT // 2 + 1          # 513 (torchaudio onesided)
N_HALF = N_FFT // 2               # 512 bins actually carried through the kernel
FB_COLS = 128                     # mel columns padded to a full lane group

assert N_FFT == 2 * HOP_LENGTH, "overlap-reshape framing requires n_fft == 2*hop"


# ---------------------------------------------------------------------------
# Deterministic "parameters" (analytic, matching torchaudio defaults).
# ---------------------------------------------------------------------------
def hann_window(n_fft):
    # torch.hann_window(periodic=True)
    n = np.arange(n_fft, dtype=np.float64)
    return (0.5 - 0.5 * np.cos(2.0 * np.pi * n / n_fft)).astype(np.float32)


def dft_matrices(n_fft):
    # X[k] = sum_n x[n] * exp(-2*pi*i*n*k/N), onesided (k = 0..N/2)
    n = np.arange(n_fft, dtype=np.float64)[:, None]
    k = np.arange(N_FREQS, dtype=np.float64)[None, :]
    ang = 2.0 * np.pi * n * k / n_fft
    cos_m = np.cos(ang).astype(np.float32)           # real-part basis
    sin_m = (-np.sin(ang)).astype(np.float32)        # imag-part basis
    return cos_m, sin_m


def mel_filterbank(n_freqs, n_mels, sample_rate, f_min=0.0, f_max=None):
    # torchaudio.functional.melscale_fbanks, mel_scale='htk', norm=None
    if f_max is None:
        f_max = sample_rate / 2.0
    hz_to_mel = lambda f: 2595.0 * np.log10(1.0 + f / 700.0)
    mel_to_hz = lambda m: 700.0 * (10.0 ** (m / 2595.0) - 1.0)
    all_freqs = np.linspace(0.0, sample_rate / 2.0, n_freqs)
    m_pts = np.linspace(hz_to_mel(f_min), hz_to_mel(f_max), n_mels + 2)
    f_pts = mel_to_hz(m_pts)
    f_diff = f_pts[1:] - f_pts[:-1]                              # (n_mels+1,)
    slopes = f_pts[None, :] - all_freqs[:, None]                 # (n_freqs, n_mels+2)
    down = -slopes[:, :-2] / f_diff[:-1]
    up = slopes[:, 2:] / f_diff[1:]
    fb = np.maximum(0.0, np.minimum(down, up))
    return fb.astype(np.float32)                                 # (n_freqs, n_mels)


def build_kernel_constants():
    """Windowed concatenated DFT matrix (bf16) + lane-padded mel filterbank (f32)."""
    window = hann_window(N_FFT)
    cos_m, sin_m = dft_matrices(N_FFT)
    # Drop the Nyquist column (k = 512): the mel filterbank row at f = sr/2 is
    # (numerically) zero, so it never contributes to the output.
    fb = mel_filterbank(N_FREQS, N_MELS, SAMPLE_RATE)             # (513, 64)
    assert float(np.abs(fb[N_HALF:, :]).max()) < 1e-6, (
        "Nyquist-and-above filterbank rows must be ~0 to drop bin 512")

    w_cat = np.concatenate([cos_m[:, :N_HALF], sin_m[:, :N_HALF]], axis=1)
    w_cat = (window[:, None] * w_cat)                             # (1024, 1024) f64->f32
    w_cat_bf16 = w_cat.astype(jnp.bfloat16)                       # MXU-native operand

    fb_pad = np.zeros((N_HALF, FB_COLS), dtype=np.float32)        # (512, 128)
    fb_pad[:, :N_MELS] = fb[:N_HALF, :]
    return w_cat_bf16, fb_pad, window, cos_m, sin_m, fb


def _round_up(v, m):
    return ((v + m - 1) // m) * m


def _num_tensorcores():
    """2 TensorCores per chip on v4/v5p/v7x (megacore), 1 on v5e/v6e."""
    try:
        kind = jax.devices()[0].device_kind.lower()
    except Exception:  # pragma: no cover - defensive
        return 1
    return 2 if ("v7" in kind or "v4" in kind or "v5p" in kind) else 1


def _choose_tile(M, n_cores):
    """Pick (tm, m_pad).

    tm is a multiple of 16 (bf16 sublane tile is (16,128)); for large M it is a
    multiple of 256 (full MXU M-pass on v6e/v7x) capped at 512 rows
    (~13 MiB VMEM footprint).  On 2-TC chips the grid length is kept even so
    the "parallel" axis shards evenly; on 1-TC chips small M is a single tile
    (no pointless serial-loop split).
    """
    if M <= 512:
        if n_cores > 1 and M > 16:
            tm = _round_up(-(-M // 2), 16)        # two steps -> one per TensorCore
            return tm, 2 * tm
        tm = _round_up(M, 16)                     # single tile on 1-TC chips
        return tm, tm
    tm = 512 if M >= 2048 else 256
    m_pad = _round_up(M, tm)
    if n_cores > 1 and (m_pad // tm) % 2:
        m_pad += tm                               # even split across the 2 TCs
    return tm, m_pad


# ---------------------------------------------------------------------------
# Pallas kernel: one M-tile of frames -> mel powers.
#   frames_ref: (tm, 1024) bf16    w_ref: (1024, 1024) bf16
#   fb_ref:     (512, 128) f32     out_ref: (tm, 128) f32
# (out cols 64.. are zero padding, sliced off in the wrapper)
# ---------------------------------------------------------------------------
def mel_kernel(frames_ref, w_ref, fb_ref, out_ref):
    # Single native-bf16 MXU pass: [re | im] for all 512 bins, f32 accumulate.
    ri = jnp.dot(frames_ref[...], w_ref[...],
                 preferred_element_type=jnp.float32)              # (tm, 1024) f32
    re = ri[:, :N_HALF]
    im = ri[:, N_HALF:]
    power = re * re + im * im                                     # |STFT|^2, f32
    out_ref[...] = jnp.dot(power, fb_ref[...],
                           preferred_element_type=jnp.float32)    # (tm, 128) f32


@functools.partial(jax.jit, static_argnames=("n_channels",))
def mel_spectrogram_3channel(x, w_cat, fb_pad, *, n_channels):
    B, T = x.shape
    n_frames = 1 + T // HOP_LENGTH            # center=True
    pad = N_FFT // 2
    assert T > pad, "reflect padding with pad=512 requires T >= 513"

    # --- glue: reflect pad + gather-free framing (50% overlap), cast to bf16 ---
    xp = jnp.pad(x, ((0, 0), (pad, pad)), mode="reflect")
    n_halves = n_frames + 1
    halves = xp[:, : n_halves * HOP_LENGTH].reshape(B, n_halves, HOP_LENGTH)
    halves = halves.astype(jnp.bfloat16)      # halves frames HBM traffic too
    # frame f = [half f | half f+1]  (each frame = two consecutive hop chunks)
    frames = jnp.concatenate([halves[:, :-1, :], halves[:, 1:, :]], axis=-1)

    # Collapse (B, F) into one M axis and tile it for the MXU / pipeline.
    M = B * n_frames
    frames = frames.reshape(M, N_FFT)
    tm, m_pad = _choose_tile(M, _num_tensorcores())
    if m_pad != M:
        frames = jnp.pad(frames, ((0, m_pad - M), (0, 0)))

    flops = 2 * m_pad * N_FFT * (2 * N_HALF) + 2 * m_pad * N_HALF * FB_COLS
    bytes_accessed = (2 * m_pad * N_FFT + 2 * N_FFT * 2 * N_HALF   # bf16 inputs
                      + 4 * N_HALF * FB_COLS + 4 * m_pad * FB_COLS)

    out = pl.pallas_call(
        mel_kernel,
        out_shape=jax.ShapeDtypeStruct((m_pad, FB_COLS), jnp.float32),
        grid_spec=pltpu.PrefetchScalarGridSpec(
            num_scalar_prefetch=0,
            grid=(m_pad // tm,),
            in_specs=[
                pl.BlockSpec((tm, N_FFT), lambda i: (i, 0)),
                pl.BlockSpec((N_FFT, 2 * N_HALF), lambda i: (0, 0)),  # grid-invariant
                pl.BlockSpec((N_HALF, FB_COLS), lambda i: (0, 0)),    # grid-invariant
            ],
            out_specs=pl.BlockSpec((tm, FB_COLS), lambda i: (i, 0)),
        ),
        compiler_params=pltpu.CompilerParams(
            dimension_semantics=("parallel",),
            vmem_limit_bytes=32 << 20,   # real footprint ~13 MiB with bf16 operands
        ),
        cost_estimate=pl.CostEstimate(
            flops=flops, transcendentals=0, bytes_accessed=bytes_accessed),
    )(frames, w_cat, fb_pad)

    # (M_pad, 128) -> (B, F, n_mels) -> (B, n_mels, F) -> (B, C, n_mels, F)
    mel = out[:M, :N_MELS].reshape(B, n_frames, N_MELS)
    mel = jnp.transpose(mel, (0, 2, 1))
    return jnp.broadcast_to(mel[:, None, :, :], (B, n_channels, N_MELS, n_frames))


# ---------------------------------------------------------------------------
# Pure-JAX f32 reference (full 513-bin torchaudio math) for verification.
# ---------------------------------------------------------------------------
def reference(x, window, cos_m, sin_m, fb, n_channels):
    B, T = x.shape
    n_frames = 1 + T // HOP_LENGTH
    pad = N_FFT // 2
    xp = jnp.pad(x, ((0, 0), (pad, pad)), mode="reflect")
    idx = (jnp.arange(n_frames)[:, None] * HOP_LENGTH
           + jnp.arange(N_FFT)[None, :])
    frames = xp[:, idx] * window[None, None, :]
    re = jnp.einsum("bfn,nk->bfk", frames, cos_m)
    im = jnp.einsum("bfn,nk->bfk", frames, sin_m)
    mel = jnp.einsum("bfk,km->bfm", re * re + im * im, fb)
    mel = jnp.transpose(mel, (0, 2, 1))
    return jnp.broadcast_to(mel[:, None], (B, n_channels, N_MELS, n_frames))


if __name__ == "__main__":
    key = jax.random.PRNGKey(0)
    B, T = 2, 4096            # small waveform: 2 clips of 4096 samples
    n_channels = 3
    x = jax.random.normal(key, (B, T), dtype=jnp.float32)

    w_cat_np, fb_pad_np, window_np, cos_np, sin_np, fb_np = build_kernel_constants()
    w_cat = jnp.asarray(w_cat_np)      # bf16
    fb_pad = jnp.asarray(fb_pad_np)    # f32

    out = mel_spectrogram_3channel(x, w_cat, fb_pad, n_channels=n_channels)
    out = jax.block_until_ready(out)
    n_frames = 1 + T // HOP_LENGTH
    assert out.shape == (B, n_channels, N_MELS, n_frames), out.shape

    ref = jax.block_until_ready(
        reference(x, jnp.asarray(window_np), jnp.asarray(cos_np),
                  jnp.asarray(sin_np), jnp.asarray(fb_np), n_channels))
    # bf16 MXU operands (f32 accumulation): measured/expected relative error of
    # the mel powers is ~0.2-0.7%; tolerance set accordingly (values are O(1e2-1e4)).
    np.testing.assert_allclose(np.asarray(out), np.asarray(ref),
                               rtol=2e-2, atol=1.0)
    print("KERNEL_OK")
</pallas_src>

<mosaic_0001>
module attributes {stable_mosaic.version = 11 : i64} {
  func.func @mel_kernel(%arg0: i32, %arg1: memref<32x1024xbf16, #tpu.memory_space<vmem>>, %arg2: memref<1024x1024xbf16, #tpu.memory_space<vmem>>, %arg3: memref<512x128xf32, #tpu.memory_space<vmem>>, %arg4: memref<32x128xf32, #tpu.memory_space<vmem>>) attributes {dimension_semantics = [#tpu.dimension_semantics<parallel>], iteration_bounds = array<i64: 1>, scalar_prefetch = 0 : i64, scratch_operands = 0 : i64, tpu.core_type = #tpu.core_type<tc>, window_params = [{transform_indices = @transform_0, window_bounds = array<i64: 32, 1024>}, {pipeline_mode = #tpu.pipeline_mode<synchronous>, transform_indices = @transform_1, window_bounds = array<i64: 1024, 1024>}, {pipeline_mode = #tpu.pipeline_mode<synchronous>, transform_indices = @transform_2, window_bounds = array<i64: 512, 128>}, {transform_indices = @transform_3, window_bounds = array<i64: 32, 128>}]} {
    %c0 = arith.constant 0 : index
    %c0_0 = arith.constant 0 : index
    %0 = vector.load %arg1[%c0, %c0_0] : memref<32x1024xbf16, #tpu.memory_space<vmem>>, vector<32x1024xbf16>
    %c0_1 = arith.constant 0 : index
    %c0_2 = arith.constant 0 : index
    %1 = vector.load %arg2[%c0_1, %c0_2] : memref<1024x1024xbf16, #tpu.memory_space<vmem>>, vector<1024x1024xbf16>
    %cst = arith.constant dense<0.000000e+00> : vector<32x1024xf32>
    %2 = tpu.matmul %0, %1, %cst {dimension_numbers = #tpu.dot_dimension_numbers<[1], [0], [0], [1], [0, 0, 1, 1], [], []>} : vector<32x1024xbf16>, vector<1024x1024xbf16>, vector<32x1024xf32> -> vector<32x1024xf32>
    %3 = vector.extract_strided_slice %2 {offsets = [0, 0], sizes = [32, 512], strides = [1, 1]} : vector<32x1024xf32> to vector<32x512xf32>
    %4 = vector.extract_strided_slice %2 {offsets = [0, 512], sizes = [32, 512], strides = [1, 1]} : vector<32x1024xf32> to vector<32x512xf32>
    %5 = arith.mulf %3, %3 : vector<32x512xf32>
    %6 = arith.mulf %4, %4 : vector<32x512xf32>
    %7 = arith.addf %5, %6 : vector<32x512xf32>
    %c0_3 = arith.constant 0 : index
    %c0_4 = arith.constant 0 : index
    %8 = vector.load %arg3[%c0_3, %c0_4] : memref<512x128xf32, #tpu.memory_space<vmem>>, vector<512x128xf32>
    %cst_5 = arith.constant dense<0.000000e+00> : vector<32x128xf32>
    %9 = tpu.matmul %7, %8, %cst_5 {dimension_numbers = #tpu.dot_dimension_numbers<[1], [0], [0], [1], [0, 0, 1, 1], [], []>} : vector<32x512xf32>, vector<512x128xf32>, vector<32x128xf32> -> vector<32x128xf32>
    %c0_6 = arith.constant 0 : index
    %c0_7 = arith.constant 0 : index
    %10 = vector.load %arg4[%c0_6, %c0_7] : memref<32x128xf32, #tpu.memory_space<vmem>>, vector<32x128xf32>
    tpu.vector_store %arg4[%c0_6, %c0_7], %9 {strides = array<i32>} : memref<32x128xf32, #tpu.memory_space<vmem>>, vector<32x128xf32>,
    return
  }
  func.func @transform_0(%arg0: i32) -> (i32, i32) {
    %c0_i32 = arith.constant 0 : i32
    %c0_i32_0 = arith.constant 0 : i32
    return %arg0, %c0_i32 : i32, i32
  }
  func.func @transform_1(%arg0: i32) -> (i32, i32) {
    %c0_i32 = arith.constant 0 : i32
    %c0_i32_0 = arith.constant 0 : i32
    %c0_i32_1 = arith.constant 0 : i32
    return %c0_i32, %c0_i32_0 : i32, i32
  }
  func.func @transform_2(%arg0: i32) -> (i32, i32) {
    %c0_i32 = arith.constant 0 : i32
    %c0_i32_0 = arith.constant 0 : i32
    %c0_i32_1 = arith.constant 0 : i32
    return %c0_i32, %c0_i32_0 : i32, i32
  }
  func.func @transform_3(%arg0: i32) -> (i32, i32) {
    %c0_i32 = arith.constant 0 : i32
    %c0_i32_0 = arith.constant 0 : i32
    return %arg0, %c0_i32 : i32, i32
  }
}

</mosaic_0001>

<llo_original>
// kernel: mel_spectrogram_3channel.1
$region0: #{mel_spectrogram_3channel.1}
  #allocation0 [shape = 'u32[]', space=smem, size = 0x4, offset = 0x4, fixed_abs, tag = 'smem constant byte address 0x4 - core index']
  #allocation1 [shape = 'u32[144,128]{1,0:T(1,128)}', space=vmem, size = 0x12000, scoped, tag = 'internal scratch']
  %s0 = inlined_call_operand.vmem [shape: bf16[32,1024], index: 0, kind: input, shape index: {}]
  %s1 = inlined_call_operand.hbm [shape: bf16[1024,1024], index: 1, kind: input, shape index: {}]
  %s2 = inlined_call_operand.hbm [shape: f32[512,128], index: 2, kind: input, shape index: {}]
  %s3 = inlined_call_operand.vmem [shape: f32[32,128], index: 3, kind: output, shape index: {}]
  %s4 = sld [smem:[#allocation0]]
  $region30: #{mel_spectrogram_3channel.1} parent=0
    _
  %s6 = ssub.s32 1, %s4
  %s7 = scalar_select 0, %s6, %s4
  $region1: #{mel_spectrogram_3channel.1} parent=0
    #allocation2 [shape = 'u8[2097152]{0}', space=vmem, size = 0x200000, scoped, tag = 'input window, operand 1, single buffered']
    #allocation3 [shape = 's32[1]{0}', space=sflag, size = 0x4, scoped, tag = 'scoped memory for mel_spectrogram_3channel.1']
    #allocation4 [shape = 'u8[262144]{0}', space=vmem, size = 0x40000, scoped, tag = 'input window, operand 2, single buffered']
    #allocation5 [shape = 's32[1]{0}', space=sflag, size = 0x4, scoped, tag = 'scoped memory for mel_spectrogram_3channel.1']
    %8 = vsyncpa [#allocation3], 0
    %9 = vsyncpa [#allocation5], 0
    // Predicated region
    $region2: #{mel_spectrogram_3channel.1} parent=1 // pred_check
      _
    $region3: #{mel_spectrogram_3channel.1} parent=1 // pred_check_branch
      %11 = sbr.rel (0) target = $region5
    $region4: #{mel_spectrogram_3channel.1} parent=1 // pred_region
      _
    $region5: #{mel_spectrogram_3channel.1} parent=1 // pred_fallthru
      _
    // Predicated region
    $region6: #{mel_spectrogram_3channel.1} parent=1 // pred_check
      _
    $region7: #{mel_spectrogram_3channel.1} parent=1 // pred_check_branch
      %13 = sbr.rel (0) target = $region9
    $region8: #{mel_spectrogram_3channel.1} parent=1 // pred_region
      %s15 = ssub.s32 65536, 65536
      %16 = vsyncadd [#allocation3], %s15
      %s17 = sshll.u32 [#allocation2], 4
      %s18 = int_to_ptr.vmem [resolvable:$true] %s17
      %23 = dma.hbm_to_vmem [thread:$0]  %s1, 65536, %s18, [#allocation3], 512, 512, 32
    $region9: #{mel_spectrogram_3channel.1} parent=1 // pred_fallthru
      _
    // Predicated region
    $region10: #{mel_spectrogram_3channel.1} parent=1 // pred_check
      _
    $region11: #{mel_spectrogram_3channel.1} parent=1 // pred_check_branch
      %25 = sbr.rel (0) target = $region13
    $region12: #{mel_spectrogram_3channel.1} parent=1 // pred_region
      %s27 = ssub.s32 8192, 8192
      %28 = vsyncadd [#allocation5], %s27
      %s29 = sshll.u32 [#allocation4], 4
      %s30 = int_to_ptr.vmem [resolvable:$true] %s29
      %35 = dma.hbm_to_vmem [thread:$0]  %s2, 8192, %s30, [#allocation5], 128, 128, 8
    $region13: #{mel_spectrogram_3channel.1} parent=1 // pred_fallthru
      _
    // Predicated region
    $region14: #{mel_spectrogram_3channel.1} parent=1 // pred_check
      _
    $region15: #{mel_spectrogram_3channel.1} parent=1 // pred_check_branch
      %37 = sbr.rel (0) target = $region17
    $region16: #{mel_spectrogram_3channel.1} parent=1 // pred_region
      %38 = dma.done [#allocation3], 65536
    $region17: #{mel_spectrogram_3channel.1} parent=1 // pred_fallthru
      _
    // Predicated region
    $region18: #{mel_spectrogram_3channel.1} parent=1 // pred_check
      _
    $region19: #{mel_spectrogram_3channel.1} parent=1 // pred_check_branch
      %40 = sbr.rel (0) target = $region21
    $region20: #{mel_spectrogram_3channel.1} parent=1 // pred_region
      %41 = dma.done [#allocation5], 8192
    $region21: #{mel_spectrogram_3channel.1} parent=1 // pred_fallthru
      _
    %v42 = vld [vmem:[%s0] sm:$0xff]
    %v43 = vld [vmem:[%s0 + $0x8] sm:$0xff]
    %v44 = vld [vmem:[%s0 + $0x10] sm:$0xff]
    %v45 = vld [vmem:[%s0 + $0x18] sm:$0xff]
    %v46 = vld [vmem:[%s0 + $0x20] sm:$0xff]
    %v47 = vld [vmem:[%s0 + $0x28] sm:$0xff]
    %v48 = vld [vmem:[%s0 + $0x30] sm:$0xff]
    %v49 = vld [vmem:[%s0 + $0x38] sm:$0xff]
    %v50 = vld [vmem:[%s0 + $0x40] sm:$0xff]
    %v51 = vld [vmem:[%s0 + $0x48] sm:$0xff]
    %v52 = vld [vmem:[%s0 + $0x50] sm:$0xff]
    %v53 = vld [vmem:[%s0 + $0x58] sm:$0xff]
    %v54 = vld [vmem:[%s0 + $0x60] sm:$0xff]
    %v55 = vld [vmem:[%s0 + $0x68] sm:$0xff]
    %v56 = vld [vmem:[%s0 + $0x70] sm:$0xff]
    %v57 = vld [vmem:[%s0 + $0x78] sm:$0xff]
    %v58 = vld [vmem:[#allocation2] sm:$0xff]
    %v59 = vld [vmem:[#allocation2 + $0x8] sm:$0xff]
    %v60 = vld [vmem:[#allocation2 + $0x10] sm:$0xff]
    %v61 = vld [vmem:[#allocation2 + $0x18] sm:$0xff]
    %v62 = vld [vmem:[#allocation2 + $0x20] sm:$0xff]
    %v63 = vld [vmem:[#allocation2 + $0x28] sm:$0xff]
    %v64 = vld [vmem:[#allocation2 + $0x30] sm:$0xff]
    %v65 = vld [vmem:[#allocation2 + $0x38] sm:$0xff]
    %v66 = vld [vmem:[#allocation2 + $0x40] sm:$0xff]
    %v67 = vld [vmem:[#allocation2 + $0x48] sm:$0xff]
    %v68 = vld [vmem:[#allocation2 + $0x50] sm:$0xff]
    %v69 = vld [vmem:[#allocation2 + $0x58] sm:$0xff]
    %v70 = vld [vmem:[#allocation2 + $0x60] sm:$0xff]
    %v71 = vld [vmem:[#allocation2 + $0x68] sm:$0xff]
    %v72 = vld [vmem:[#allocation2 + $0x70] sm:$0xff]
    %v73 = vld [vmem:[#allocation2 + $0x78] sm:$0xff]
    %v74 = vld [vmem:[#allocation2 + $0x80] sm:$0xff]
    %v75 = vld [vmem:[#allocation2 + $0x88] sm:$0xff]
    %v76 = vld [vmem:[#allocation2 + $0x90] sm:$0xff]
    %v77 = vld [vmem:[#allocation2 + $0x98] sm:$0xff]
    %v78 = vld [vmem:[#allocation2 + $0xa0] sm:$0xff]
    %v79 = vld [vmem:[#allocation2 + $0xa8] sm:$0xff]
    %v80 = vld [vmem:[#allocation2 + $0xb0] sm:$0xff]
    %v81 = vld [vmem:[#allocation2 + $0xb8] sm:$0xff]
    %v82 = vld [vmem:[#allocation2 + $0xc0] sm:$0xff]
    %v83 = vld [vmem:[#allocation2 + $0xc8] sm:$0xff]
    %v84 = vld [vmem:[#allocation2 + $0xd0] sm:$0xff]
    %v85 = vld [vmem:[#allocation2 + $0xd8] sm:$0xff]
    %v86 = vld [vmem:[#allocation2 + $0xe0] sm:$0xff]
    %v87 = vld [vmem:[#allocation2 + $0xe8] sm:$0xff]
    %v88 = vld [vmem:[#allocation2 + $0xf0] sm:$0xff]
    %v89 = vld [vmem:[#allocation2 + $0xf8] sm:$0xff]
    %v90 = vld [vmem:[#allocation2 + $0x100] sm:$0xff]
    %v91 = vld [vmem:[#allocation2 + $0x108] sm:$0xff]
    %v92 = vld [vmem:[#allocation2 + $0x110] sm:$0xff]
    %v93 = vld [vmem:[#allocation2 + $0x118] sm:$0xff]
    %v94 = vld [vmem:[#allocation2 + $0x120] sm:$0xff]
    %v95 = vld [vmem:[#allocation2 + $0x128] sm:$0xff]
    %v96 = vld [vmem:[#allocation2 + $0x130] sm:$0xff]
    %v97 = vld [vmem:[#allocation2 + $0x138] sm:$0xff]
    %v98 = vld [vmem:[#allocation2 + $0x140] sm:$0xff]
    %v99 = vld [vmem:[#allocation2 + $0x148] sm:$0xff]
    %v100 = vld [vmem:[#allocation2 + $0x150] sm:$0xff]
    %v101 = vld [vmem:[#allocation2 + $0x158] sm:$0xff]
    %v102 = vld [vmem:[#allocation2 + $0x160] sm:$0xff]
    %v103 = vld [vmem:[#allocation2 + $0x168] sm:$0xff]
    %v104 = vld [vmem:[#allocation2 + $0x170] sm:$0xff]
    %v105 = vld [vmem:[#allocation2 + $0x178] sm:$0xff]
    %v106 = vld [vmem:[#allocation2 + $0x180] sm:$0xff]
    %v107 = vld [vmem:[#allocation2 + $0x188] sm:$0xff]
    %v108 = vld [vmem:[#allocation2 + $0x190] sm:$0xff]
    %v109 = vld [vmem:[#allocation2 + $0x198] sm:$0xff]
    %v110 = vld [vmem:[#allocation2 + $0x1a0] sm:$0xff]
    %v111 = vld [vmem:[#allocation2 + $0x1a8] sm:$0xff]
    %v112 = vld [vmem:[#allocation2 + $0x1b0] sm:$0xff]
    %v113 = vld [vmem:[#allocation2 + $0x1b8] sm:$0xff]
    %v114 = vld [vmem:[#allocation2 + $0x1c0] sm:$0xff]
    %v115 = vld [vmem:[#allocation2 + $0x1c8] sm:$0xff]
    %v116 = vld [vmem:[#allocation2 + $0x1d0] sm:$0xff]
    %v117 = vld [vmem:[#allocation2 + $0x1d8] sm:$0xff]
    %v118 = vld [vmem:[#allocation2 + $0x1e0] sm:$0xff]
    %v119 = vld [vmem:[#allocation2 + $0x1e8] sm:$0xff]
    %v120 = vld [vmem:[#allocation2 + $0x1f0] sm:$0xff]
    %v121 = vld [vmem:[#allocation2 + $0x1f8] sm:$0xff]
    %v122 = vld [vmem:[#allocation2 + $0x200] sm:$0xff]
    %v123 = vld [vmem:[#allocation2 + $0x208] sm:$0xff]
    %v124 = vld [vmem:[#allocation2 + $0x210] sm:$0xff]
    %v125 = vld [vmem:[#allocation2 + $0x218] sm:$0xff]
    %v126 = vld [vmem:[#allocation2 + $0x220] sm:$0xff]
    %v127 = vld [vmem:[#allocation2 + $0x228] sm:$0xff]
    %v128 = vld [vmem:[#allocation2 + $0x230] sm:$0xff]
    %v129 = vld [vmem:[#allocation2 + $0x238] sm:$0xff]
    %v130 = vld [vmem:[#allocation2 + $0x240] sm:$0xff]
    %v131 = vld [vmem:[#allocation2 + $0x248] sm:$0xff]
    %v132 = vld [vmem:[#allocation2 + $0x250] sm:$0xff]
    %v133 = vld [vmem:[#allocation2 + $0x258] sm:$0xff]
    %v134 = vld [vmem:[#allocation2 + $0x260] sm:$0xff]
    %v135 = vld [vmem:[#allocation2 + $0x268] sm:$0xff]
    %v136 = vld [vmem:[#allocation2 + $0x270] sm:$0xff]
    %v137 = vld [vmem:[#allocation2 + $0x278] sm:$0xff]
    %v138 = vld [vmem:[#allocation2 + $0x280] sm:$0xff]
    %v139 = vld [vmem:[#allocation2 + $0x288] sm:$0xff]
    %v140 = vld [vmem:[#allocation2 + $0x290] sm:$0xff]
    %v141 = vld [vmem:[#allocation2 + $0x298] sm:$0xff]
    %v142 = vld [vmem:[#allocation2 + $0x2a0] sm:$0xff]
    %v143 = vld [vmem:[#allocation2 + $0x2a8] sm:$0xff]
    %v144 = vld [vmem:[#allocation2 + $0x2b0] sm:$0xff]
    %v145 = vld [vmem:[#allocation2 + $0x2b8] sm:$0xff]
    %v146 = vld [vmem:[#allocation2 + $0x2c0] sm:$0xff]
    %v147 = vld [vmem:[#allocation2 + $0x2c8] sm:$0xff]
    %v148 = vld [vmem:[#allocation2 + $0x2d0] sm:$0xff]
    %v149 = vld [vmem:[#allocation2 + $0x2d8] sm:$0xff]
    %v150 = vld [vmem:[#allocation2 + $0x2e0] sm:$0xff]
    %v151 = vld [vmem:[#allocation2 + $0x2e8] sm:$0xff]
    %v152 = vld [vmem:[#allocation2 + $0x2f0] sm:$0xff]
    %v153 = vld [vmem:[#allocation2 + $0x2f8] sm:$0xff]
    %v154 = vld [vmem:[#allocation2 + $0x300] sm:$0xff]
    %v155 = vld [vmem:[#allocation2 + $0x308] sm:$0xff]
    %v156 = vld [vmem:[#allocation2 + $0x310] sm:$0xff]
    %v157 = vld [vmem:[#allocation2 + $0x318] sm:$0xff]
    %v158 = vld [vmem:[#allocation2 + $0x320] sm:$0xff]
    %v159 = vld [vmem:[#allocation2 + $0x328] sm:$0xff]
    %v160 = vld [vmem:[#allocation2 + $0x330] sm:$0xff]
    %v161 = vld [vmem:[#allocation2 + $0x338] sm:$0xff]
    %v162 = vld [vmem:[#allocation2 + $0x340] sm:$0xff]
    %v163 = vld [vmem:[#allocation2 + $0x348] sm:$0xff]
    %v164 = vld [vmem:[#allocation2 + $0x350] sm:$0xff]
    %v165 = vld [vmem:[#allocation2 + $0x358] sm:$0xff]
    %v166 = vld [vmem:[#allocation2 + $0x360] sm:$0xff]
    %v167 = vld [vmem:[#allocation2 + $0x368] sm:$0xff]
    %v168 = vld [vmem:[#allocation2 + $0x370] sm:$0xff]
    %v169 = vld [vmem:[#allocation2 + $0x378] sm:$0xff]
    %v170 = vld [vmem:[#allocation2 + $0x380] sm:$0xff]
    %v171 = vld [vmem:[#allocation2 + $0x388] sm:$0xff]
    %v172 = vld [vmem:[#allocation2 + $0x390] sm:$0xff]
    %v173 = vld [vmem:[#allocation2 + $0x398] sm:$0xff]
    %v174 = vld [vmem:[#allocation2 + $0x3a0] sm:$0xff]
    %v175 = vld [vmem:[#allocation2 + $0x3a8] sm:$0xff]
    %v176 = vld [vmem:[#allocation2 + $0x3b0] sm:$0xff]
    %v177 = vld [vmem:[#allocation2 + $0x3b8] sm:$0xff]
    %v178 = vld [vmem:[#allocation2 + $0x3c0] sm:$0xff]
    %v179 = vld [vmem:[#allocation2 + $0x3c8] sm:$0xff]
    %v180 = vld [vmem:[#allocation2 + $0x3d0] sm:$0xff]
    %v181 = vld [vmem:[#allocation2 + $0x3d8] sm:$0xff]
    %v182 = vld [vmem:[#allocation2 + $0x3e0] sm:$0xff]
    %v183 = vld [vmem:[#allocation2 + $0x3e8] sm:$0xff]
    %v184 = vld [vmem:[#allocation2 + $0x3f0] sm:$0xff]
    %v185 = vld [vmem:[#allocation2 + $0x3f8] sm:$0xff]
    %v186 = vld [vmem:[#allocation2 + $0x400] sm:$0xff]
    %v187 = vld [vmem:[#allocation2 + $0x408] sm:$0xff]
    %v188 = vld [vmem:[#allocation2 + $0x410] sm:$0xff]
    %v189 = vld [vmem:[#allocation2 + $0x418] sm:$0xff]
    %v190 = vld [vmem:[#allocation2 + $0x420] sm:$0xff]
    %v191 = vld [vmem:[#allocation2 + $0x428] sm:$0xff]
    %v192 = vld [vmem:[#allocation2 + $0x430] sm:$0xff]
    %v193 = vld [vmem:[#allocation2 + $0x438] sm:$0xff]
    %v194 = vld [vmem:[#allocation2 + $0x440] sm:$0xff]
    %v195 = vld [vmem:[#allocation2 + $0x448] sm:$0xff]
    %v196 = vld [vmem:[#allocation2 + $0x450] sm:$0xff]
    %v197 = vld [vmem:[#allocation2 + $0x458] sm:$0xff]
    %v198 = vld [vmem:[#allocation2 + $0x460] sm:$0xff]
    %v199 = vld [vmem:[#allocation2 + $0x468] sm:$0xff]
    %v200 = vld [vmem:[#allocation2 + $0x470] sm:$0xff]
    %v201 = vld [vmem:[#allocation2 + $0x478] sm:$0xff]
    %v202 = vld [vmem:[#allocation2 + $0x480] sm:$0xff]
    %v203 = vld [vmem:[#allocation2 + $0x488] sm:$0xff]
    %v204 = vld [vmem:[#allocation2 + $0x490] sm:$0xff]
    %v205 = vld [vmem:[#allocation2 + $0x498] sm:$0xff]
    %v206 = vld [vmem:[#allocation2 + $0x4a0] sm:$0xff]
    %v207 = vld [vmem:[#allocation2 + $0x4a8] sm:$0xff]
    %v208 = vld [vmem:[#allocation2 + $0x4b0] sm:$0xff]
    %v209 = vld [vmem:[#allocation2 + $0x4b8] sm:$0xff]
    %v210 = vld [vmem:[#allocation2 + $0x4c0] sm:$0xff]
    %v211 = vld [vmem:[#allocation2 + $0x4c8] sm:$0xff]
    %v212 = vld [vmem:[#allocation2 + $0x4d0] sm:$0xff]
    %v213 = vld [vmem:[#allocation2 + $0x4d8] sm:$0xff]
    %v214 = vld [vmem:[#allocation2 + $0x4e0] sm:$0xff]
    %v215 = vld [vmem:[#allocation2 + $0x4e8] sm:$0xff]
    %v216 = vld [vmem:[#allocation2 + $0x4f0] sm:$0xff]
    %v217 = vld [vmem:[#allocation2 + $0x4f8] sm:$0xff]
    %v218 = vld [vmem:[#allocation2 + $0x500] sm:$0xff]
    %v219 = vld [vmem:[#allocation2 + $0x508] sm:$0xff]
    %v220 = vld [vmem:[#allocation2 + $0x510] sm:$0xff]
    %v221 = vld [vmem:[#allocation2 + $0x518] sm:$0xff]
    %v222 = vld [vmem:[#allocation2 + $0x520] sm:$0xff]
    %v223 = vld [vmem:[#allocation2 + $0x528] sm:$0xff]
    %v224 = vld [vmem:[#allocation2 + $0x530] sm:$0xff]
    %v225 = vld [vmem:[#allocation2 + $0x538] sm:$0xff]
    %v226 = vld [vmem:[#allocation2 + $0x540] sm:$0xff]
    %v227 = vld [vmem:[#allocation2 + $0x548] sm:$0xff]
    %v228 = vld [vmem:[#allocation2 + $0x550] sm:$0xff]
    %v229 = vld [vmem:[#allocation2 + $0x558] sm:$0xff]
    %v230 = vld [vmem:[#allocation2 + $0x560] sm:$0xff]
    %v231 = vld [vmem:[#allocation2 + $0x568] sm:$0xff]
    %v232 = vld [vmem:[#allocation2 + $0x570] sm:$0xff]
    %v233 = vld [vmem:[#allocation2 + $0x578] sm:$0xff]
    %v234 = vld [vmem:[#allocation2 + $0x580] sm:$0xff]
    %v235 = vld [vmem:[#allocation2 + $0x588] sm:$0xff]
    %v236 = vld [vmem:[#allocation2 + $0x590] sm:$0xff]
    %v237 = vld [vmem:[#allocation2 + $0x598] sm:$0xff]
    %v238 = vld [vmem:[#allocation2 + $0x5a0] sm:$0xff]
    %v239 = vld [vmem:[#allocation2 + $0x5a8] sm:$0xff]
    %v240 = vld [vmem:[#allocation2 + $0x5b0] sm:$0xff]
    %v241 = vld [vmem:[#allocation2 + $0x5b8] sm:$0xff]
    %v242 = vld [vmem:[#allocation2 + $0x5c0] sm:$0xff]
    %v243 = vld [vmem:[#allocation2 + $0x5c8] sm:$0xff]
    %v244 = vld [vmem:[#allocation2 + $0x5d0] sm:$0xff]
    %v245 = vld [vmem:[#allocation2 + $0x5d8] sm:$0xff]
    %v246 = vld [vmem:[#allocation2 + $0x5e0] sm:$0xff]
    %v247 = vld [vmem:[#allocation2 + $0x5e8] sm:$0xff]
    %v248 = vld [vmem:[#allocation2 + $0x5f0] sm:$0xff]
    %v249 = vld [vmem:[#allocation2 + $0x5f8] sm:$0xff]
    %v250 = vld [vmem:[#allocation2 + $0x600] sm:$0xff]
    %v251 = vld [vmem:[#allocation2 + $0x608] sm:$0xff]
    %v252 = vld [vmem:[#allocation2 + $0x610] sm:$0xff]
    %v253 = vld [vmem:[#allocation2 + $0x618] sm:$0xff]
    %v254 = vld [vmem:[#allocation2 + $0x620] sm:$0xff]
    %v255 = vld [vmem:[#allocation2 + $0x628] sm:$0xff]
    %v256 = vld [vmem:[#allocation2 + $0x630] sm:$0xff]
    %v257 = vld [vmem:[#allocation2 + $0x638] sm:$0xff]
    %v258 = vld [vmem:[#allocation2 + $0x640] sm:$0xff]
    %v259 = vld [vmem:[#allocation2 + $0x648] sm:$0xff]
    %v260 = vld [vmem:[#allocation2 + $0x650] sm:$0xff]
    %v261 = vld [vmem:[#allocation2 + $0x658] sm:$0xff]
    %v262 = vld [vmem:[#allocation2 + $0x660] sm:$0xff]
    %v263 = vld [vmem:[#allocation2 + $0x668] sm:$0xff]
    %v264 = vld [vmem:[#allocation2 + $0x670] sm:$0xff]
    %v265 = vld [vmem:[#allocation2 + $0x678] sm:$0xff]
    %v266 = vld [vmem:[#allocation2 + $0x680] sm:$0xff]
    %v267 = vld [vmem:[#allocation2 + $0x688] sm:$0xff]
    %v268 = vld [vmem:[#allocation2 + $0x690] sm:$0xff]
    %v269 = vld [vmem:[#allocation2 + $0x698] sm:$0xff]
    %v270 = vld [vmem:[#allocation2 + $0x6a0] sm:$0xff]
    %v271 = vld [vmem:[#allocation2 + $0x6a8] sm:$0xff]
    %v272 = vld [vmem:[#allocation2 + $0x6b0] sm:$0xff]
    %v273 = vld [vmem:[#allocation2 + $0x6b8] sm:$0xff]
    %v274 = vld [vmem:[#allocation2 + $0x6c0] sm:$0xff]
    %v275 = vld [vmem:[#allocation2 + $0x6c8] sm:$0xff]
    %v276 = vld [vmem:[#allocation2 + $0x6d0] sm:$0xff]
    %v277 = vld [vmem:[#allocation2 + $0x6d8] sm:$0xff]
    %v278 = vld [vmem:[#allocation2 + $0x6e0] sm:$0xff]
    %v279 = vld [vmem:[#allocation2 + $0x6e8] sm:$0xff]
    %v280 = vld [vmem:[#allocation2 + $0x6f0] sm:$0xff]
    %v281 = vld [vmem:[#allocation2 + $0x6f8] sm:$0xff]
    %v282 = vld [vmem:[#allocation2 + $0x700] sm:$0xff]
    %v283 = vld [vmem:[#allocation2 + $0x708] sm:$0xff]
    %v284 = vld [vmem:[#allocation2 + $0x710] sm:$0xff]
    %v285 = vld [vmem:[#allocation2 + $0x718] sm:$0xff]
    %v286 = vld [vmem:[#allocation2 + $0x720] sm:$0xff]
    %v287 = vld [vmem:[#allocation2 + $0x728] sm:$0xff]
    %v288 = vld [vmem:[#allocation2 + $0x730] sm:$0xff]
    %v289 = vld [vmem:[#allocation2 + $0x738] sm:$0xff]
    %v290 = vld [vmem:[#allocation2 + $0x740] sm:$0xff]
    %v291 = vld [vmem:[#allocation2 + $0x748] sm:$0xff]
    %v292 = vld [vmem:[#allocation2 + $0x750] sm:$0xff]
    %v293 = vld [vmem:[#allocation2 + $0x758] sm:$0xff]
    %v294 = vld [vmem:[#allocation2 + $0x760] sm:$0xff]
    %v295 = vld [vmem:[#allocation2 + $0x768] sm:$0xff]
    %v296 = vld [vmem:[#allocation2 + $0x770] sm:$0xff]
    %v297 = vld [vmem:[#allocation2 + $0x778] sm:$0xff]
    %v298 = vld [vmem:[#allocation2 + $0x780] sm:$0xff]
    %v299 = vld [vmem:[#allocation2 + $0x788] sm:$0xff]
    %v300 = vld [vmem:[#allocation2 + $0x790] sm:$0xff]
    %v301 = vld [vmem:[#allocation2 + $0x798] sm:$0xff]
    %v302 = vld [vmem:[#allocation2 + $0x7a0] sm:$0xff]
    %v303 = vld [vmem:[#allocation2 + $0x7a8] sm:$0xff]
    %v304 = vld [vmem:[#allocation2 + $0x7b0] sm:$0xff]
    %v305 = vld [vmem:[#allocation2 + $0x7b8] sm:$0xff]
    %v306 = vld [vmem:[#allocation2 + $0x7c0] sm:$0xff]
    %v307 = vld [vmem:[#allocation2 + $0x7c8] sm:$0xff]
    %v308 = vld [vmem:[#allocation2 + $0x7d0] sm:$0xff]
    %v309 = vld [vmem:[#allocation2 + $0x7d8] sm:$0xff]
    %v310 = vld [vmem:[#allocation2 + $0x7e0] sm:$0xff]
    %v311 = vld [vmem:[#allocation2 + $0x7e8] sm:$0xff]
    %v312 = vld [vmem:[#allocation2 + $0x7f0] sm:$0xff]
    %v313 = vld [vmem:[#allocation2 + $0x7f8] sm:$0xff]
    %v314 = vld [vmem:[#allocation2 + $0x800] sm:$0xff]
    %v315 = vld [vmem:[#allocation2 + $0x808] sm:$0xff]
    %v316 = vld [vmem:[#allocation2 + $0x810] sm:$0xff]
    %v317 = vld [vmem:[#allocation2 + $0x818] sm:$0xff]
    %v318 = vld [vmem:[#allocation2 + $0x820] sm:$0xff]
    %v319 = vld [vmem:[#allocation2 + $0x828] sm:$0xff]
    %v320 = vld [vmem:[#allocation2 + $0x830] sm:$0xff]
    %v321 = vld [vmem:[#allocation2 + $0x838] sm:$0xff]
    %v322 = vld [vmem:[#allocation2 + $0x840] sm:$0xff]
    %v323 = vld [vmem:[#allocation2 + $0x848] sm:$0xff]
    %v324 = vld [vmem:[#allocation2 + $0x850] sm:$0xff]
    %v325 = vld [vmem:[#allocation2 + $0x858] sm:$0xff]
    %v326 = vld [vmem:[#allocation2 + $0x860] sm:$0xff]
    %v327 = vld [vmem:[#allocation2 + $0x868] sm:$0xff]
    %v328 = vld [vmem:[#allocation2 + $0x870] sm:$0xff]
    %v329 = vld [vmem:[#allocation2 + $0x878] sm:$0xff]
    %v330 = vld [vmem:[#allocation2 + $0x880] sm:$0xff]
    %v331 = vld [vmem:[#allocation2 + $0x888] sm:$0xff]
    %v332 = vld [vmem:[#allocation2 + $0x890] sm:$0xff]
    %v333 = vld [vmem:[#allocation2 + $0x898] sm:$0xff]
    %v334 = vld [vmem:[#allocation2 + $0x8a0] sm:$0xff]
    %v335 = vld [vmem:[#allocation2 + $0x8a8] sm:$0xff]
    %v336 = vld [vmem:[#allocation2 + $0x8b0] sm:$0xff]
    %v337 = vld [vmem:[#allocation2 + $0x8b8] sm:$0xff]
    %v338 = vld [vmem:[#allocation2 + $0x8c0] sm:$0xff]
    %v339 = vld [vmem:[#allocation2 + $0x8c8] sm:$0xff]
    %v340 = vld [vmem:[#allocation2 + $0x8d0] sm:$0xff]
    %v341 = vld [vmem:[#allocation2 + $0x8d8] sm:$0xff]
    %v342 = vld [vmem:[#allocation2 + $0x8e0] sm:$0xff]
    %v343 = vld [vmem:[#allocation2 + $0x8e8] sm:$0xff]
    %v344 = vld [vmem:[#allocation2 + $0x8f0] sm:$0xff]
    %v345 = vld [vmem:[#allocation2 + $0x8f8] sm:$0xff]
    %v346 = vld [vmem:[#allocation2 + $0x900] sm:$0xff]
    %v347 = vld [vmem:[#allocation2 + $0x908] sm:$0xff]
    %v348 = vld [vmem:[#allocation2 + $0x910] sm:$0xff]
    %v349 = vld [vmem:[#allocation2 + $0x918] sm:$0xff]
    %v350 = vld [vmem:[#allocation2 + $0x920] sm:$0xff]
    %v351 = vld [vmem:[#allocation2 + $0x928] sm:$0xff]
    %v352 = vld [vmem:[#allocation2 + $0x930] sm:$0xff]
    %v353 = vld [vmem:[#allocation2 + $0x938] sm:$0xff]
    %v354 = vld [vmem:[#allocation2 + $0x940] sm:$0xff]
    %v355 = vld [vmem:[#allocation2 + $0x948] sm:$0xff]
    %v356 = vld [vmem:[#allocation2 + $0x950] sm:$0xff]
    %v357 = vld [vmem:[#allocation2 + $0x958] sm:$0xff]
    %v358 = vld [vmem:[#allocation2 + $0x960] sm:$0xff]
    %v359 = vld [vmem:[#allocation2 + $0x968] sm:$0xff]
    %v360 = vld [vmem:[#allocation2 + $0x970] sm:$0xff]
    %v361 = vld [vmem:[#allocation2 + $0x978] sm:$0xff]
    %v362 = vld [vmem:[#allocation2 + $0x980] sm:$0xff]
    %v363 = vld [vmem:[#allocation2 + $0x988] sm:$0xff]
    %v364 = vld [vmem:[#allocation2 + $0x990] sm:$0xff]
    %v365 = vld [vmem:[#allocation2 + $0x998] sm:$0xff]
    %v366 = vld [vmem:[#allocation2 + $0x9a0] sm:$0xff]
    %v367 = vld [vmem:[#allocation2 + $0x9a8] sm:$0xff]
    %v368 = vld [vmem:[#allocation2 + $0x9b0] sm:$0xff]
    %v369 = vld [vmem:[#allocation2 + $0x9b8] sm:$0xff]
    %v370 = vld [vmem:[#allocation2 + $0x9c0] sm:$0xff]
    %v371 = vld [vmem:[#allocation2 + $0x9c8] sm:$0xff]
    %v372 = vld [vmem:[#allocation2 + $0x9d0] sm:$0xff]
    %v373 = vld [vmem:[#allocation2 + $0x9d8] sm:$0xff]
    %v374 = vld [vmem:[#allocation2 + $0x9e0] sm:$0xff]
    %v375 = vld [vmem:[#allocation2 + $0x9e8] sm:$0xff]
    %v376 = vld [vmem:[#allocation2 + $0x9f0] sm:$0xff]
    %v377 = vld [vmem:[#allocation2 + $0x9f8] sm:$0xff]
    %v378 = vld [vmem:[#allocation2 + $0xa00] sm:$0xff]
    %v379 = vld [vmem:[#allocation2 + $0xa08] sm:$0xff]
    %v380 = vld [vmem:[#allocation2 + $0xa10] sm:$0xff]
    %v381 = vld [vmem:[#allocation2 + $0xa18] sm:$0xff]
    %v382 = vld [vmem:[#allocation2 + $0xa20] sm:$0xff]
    %v383 = vld [vmem:[#allocation2 + $0xa28] sm:$0xff]
    %v384 = vld [vmem:[#allocation2 + $0xa30] sm:$0xff]
    %v385 = vld [vmem:[#allocation2 + $0xa38] sm:$0xff]
    %v386 = vld [vmem:[#allocation2 + $0xa40] sm:$0xff]
    %v387 = vld [vmem:[#allocation2 + $0xa48] sm:$0xff]
    %v388 = vld [vmem:[#allocation2 + $0xa50] sm:$0xff]
    %v389 = vld [vmem:[#allocation2 + $0xa58] sm:$0xff]
    %v390 = vld [vmem:[#allocation2 + $0xa60] sm:$0xff]
    %v391 = vld [vmem:[#allocation2 + $0xa68] sm:$0xff]
    %v392 = vld [vmem:[#allocation2 + $0xa70] sm:$0xff]
    %v393 = vld [vmem:[#allocation2 + $0xa78] sm:$0xff]
    %v394 = vld [vmem:[#allocation2 + $0xa80] sm:$0xff]
    %v395 = vld [vmem:[#allocation2 + $0xa88] sm:$0xff]
    %v396 = vld [vmem:[#allocation2 + $0xa90] sm:$0xff]
    %v397 = vld [vmem:[#allocation2 + $0xa98] sm:$0xff]
    %v398 = vld [vmem:[#allocation2 + $0xaa0] sm:$0xff]
    %v399 = vld [vmem:[#allocation2 + $0xaa8] sm:$0xff]
    %v400 = vld [vmem:[#allocation2 + $0xab0] sm:$0xff]
    %v401 = vld [vmem:[#allocation2 + $0xab8] sm:$0xff]
    %v402 = vld [vmem:[#allocation2 + $0xac0] sm:$0xff]
    %v403 = vld [vmem:[#allocation2 + $0xac8] sm:$0xff]
    %v404 = vld [vmem:[#allocation2 + $0xad0] sm:$0xff]
    %v405 = vld [vmem:[#allocation2 + $0xad8] sm:$0xff]
    %v406 = vld [vmem:[#allocation2 + $0xae0] sm:$0xff]
    %v407 = vld [vmem:[#allocation2 + $0xae8] sm:$0xff]
    %v408 = vld [vmem:[#allocation2 + $0xaf0] sm:$0xff]
    %v409 = vld [vmem:[#allocation2 + $0xaf8] sm:$0xff]
    %v410 = vld [vmem:[#allocation2 + $0xb00] sm:$0xff]
    %v411 = vld [vmem:[#allocation2 + $0xb08] sm:$0xff]
    %v412 = vld [vmem:[#allocation2 + $0xb10] sm:$0xff]
    %v413 = vld [vmem:[#allocation2 + $0xb18] sm:$0xff]
    %v414 = vld [vmem:[#allocation2 + $0xb20] sm:$0xff]
    %v415 = vld [vmem:[#allocation2 + $0xb28] sm:$0xff]
    %v416 = vld [vmem:[#allocation2 + $0xb30] sm:$0xff]
    %v417 = vld [vmem:[#allocation2 + $0xb38] sm:$0xff]
    %v418 = vld [vmem:[#allocation2 + $0xb40] sm:$0xff]
    %v419 = vld [vmem:[#allocation2 + $0xb48] sm:$0xff]
    %v420 = vld [vmem:[#allocation2 + $0xb50] sm:$0xff]
    %v421 = vld [vmem:[#allocation2 + $0xb58] sm:$0xff]
    %v422 = vld [vmem:[#allocation2 + $0xb60] sm:$0xff]
    %v423 = vld [vmem:[#allocation2 + $0xb68] sm:$0xff]
    %v424 = vld [vmem:[#allocation2 + $0xb70] sm:$0xff]
    %v425 = vld [vmem:[#allocation2 + $0xb78] sm:$0xff]
    %v426 = vld [vmem:[#allocation2 + $0xb80] sm:$0xff]
    %v427 = vld [vmem:[#allocation2 + $0xb88] sm:$0xff]
    %v428 = vld [vmem:[#allocation2 + $0xb90] sm:$0xff]
    %v429 = vld [vmem:[#allocation2 + $0xb98] sm:$0xff]
    %v430 = vld [vmem:[#allocation2 + $0xba0] sm:$0xff]
    %v431 = vld [vmem:[#allocation2 + $0xba8] sm:$0xff]
    %v432 = vld [vmem:[#allocation2 + $0xbb0] sm:$0xff]
    %v433 = vld [vmem:[#allocation2 + $0xbb8] sm:$0xff]
    %v434 = vld [vmem:[#allocation2 + $0xbc0] sm:$0xff]
    %v435 = vld [vmem:[#allocation2 + $0xbc8] sm:$0xff]
    %v436 = vld [vmem:[#allocation2 + $0xbd0] sm:$0xff]
    %v437 = vld [vmem:[#allocation2 + $0xbd8] sm:$0xff]
    %v438 = vld [vmem:[#allocation2 + $0xbe0] sm:$0xff]
    %v439 = vld [vmem:[#allocation2 + $0xbe8] sm:$0xff]
    %v440 = vld [vmem:[#allocation2 + $0xbf0] sm:$0xff]
    %v441 = vld [vmem:[#allocation2 + $0xbf8] sm:$0xff]
    %v442 = vld [vmem:[#allocation2 + $0xc00] sm:$0xff]
    %v443 = vld [vmem:[#allocation2 + $0xc08] sm:$0xff]
    %v444 = vld [vmem:[#allocation2 + $0xc10] sm:$0xff]
    %v445 = vld [vmem:[#allocation2 + $0xc18] sm:$0xff]
    %v446 = vld [vmem:[#allocation2 + $0xc20] sm:$0xff]
    %v447 = vld [vmem:[#allocation2 + $0xc28] sm:$0xff]
    %v448 = vld [vmem:[#allocation2 + $0xc30] sm:$0xff]
    %v449 = vld [vmem:[#allocation2 + $0xc38] sm:$0xff]
    %v450 = vld [vmem:[#allocation2 + $0xc40] sm:$0xff]
    %v451 = vld [vmem:[#allocation2 + $0xc48] sm:$0xff]
    %v452 = vld [vmem:[#allocation2 + $0xc50] sm:$0xff]
    %v453 = vld [vmem:[#allocation2 + $0xc58] sm:$0xff]
    %v454 = vld [vmem:[#allocation2 + $0xc60] sm:$0xff]
    %v455 = vld [vmem:[#allocation2 + $0xc68] sm:$0xff]
    %v456 = vld [vmem:[#allocation2 + $0xc70] sm:$0xff]
    %v457 = vld [vmem:[#allocation2 + $0xc78] sm:$0xff]
    %v458 = vld [vmem:[#allocation2 + $0xc80] sm:$0xff]
    %v459 = vld [vmem:[#allocation2 + $0xc88] sm:$0xff]
    %v460 = vld [vmem:[#allocation2 + $0xc90] sm:$0xff]
    %v461 = vld [vmem:[#allocation2 + $0xc98] sm:$0xff]
    %v462 = vld [vmem:[#allocation2 + $0xca0] sm:$0xff]
    %v463 = vld [vmem:[#allocation2 + $0xca8] sm:$0xff]
    %v464 = vld [vmem:[#allocation2 + $0xcb0] sm:$0xff]
    %v465 = vld [vmem:[#allocation2 + $0xcb8] sm:$0xff]
    %v466 = vld [vmem:[#allocation2 + $0xcc0] sm:$0xff]
    %v467 = vld [vmem:[#allocation2 + $0xcc8] sm:$0xff]
    %v468 = vld [vmem:[#allocation2 + $0xcd0] sm:$0xff]
    %v469 = vld [vmem:[#allocation2 + $0xcd8] sm:$0xff]
    %v470 = vld [vmem:[#allocation2 + $0xce0] sm:$0xff]
    %v471 = vld [vmem:[#allocation2 + $0xce8] sm:$0xff]
    %v472 = vld [vmem:[#allocation2 + $0xcf0] sm:$0xff]
    %v473 = vld [vmem:[#allocation2 + $0xcf8] sm:$0xff]
    %v474 = vld [vmem:[#allocation2 + $0xd00] sm:$0xff]
    %v475 = vld [vmem:[#allocation2 + $0xd08] sm:$0xff]
    %v476 = vld [vmem:[#allocation2 + $0xd10] sm:$0xff]
    %v477 = vld [vmem:[#allocation2 + $0xd18] sm:$0xff]
    %v478 = vld [vmem:[#allocation2 + $0xd20] sm:$0xff]
    %v479 = vld [vmem:[#allocation2 + $0xd28] sm:$0xff]
    %v480 = vld [vmem:[#allocation2 + $0xd30] sm:$0xff]
    %v481 = vld [vmem:[#allocation2 + $0xd38] sm:$0xff]
    %v482 = vld [vmem:[#allocation2 + $0xd40] sm:$0xff]
    %v483 = vld [vmem:[#allocation2 + $0xd48] sm:$0xff]
    %v484 = vld [vmem:[#allocation2 + $0xd50] sm:$0xff]
    %v485 = vld [vmem:[#allocation2 + $0xd58] sm:$0xff]
    %v486 = vld [vmem:[#allocation2 + $0xd60] sm:$0xff]
    %v487 = vld [vmem:[#allocation2 + $0xd68] sm:$0xff]
    %v488 = vld [vmem:[#allocation2 + $0xd70] sm:$0xff]
    %v489 = vld [vmem:[#allocation2 + $0xd78] sm:$0xff]
    %v490 = vld [vmem:[#allocation2 + $0xd80] sm:$0xff]
    %v491 = vld [vmem:[#allocation2 + $0xd88] sm:$0xff]
    %v492 = vld [vmem:[#allocation2 + $0xd90] sm:$0xff]
    %v493 = vld [vmem:[#allocation2 + $0xd98] sm:$0xff]
    %v494 = vld [vmem:[#allocation2 + $0xda0] sm:$0xff]
    %v495 = vld [vmem:[#allocation2 + $0xda8] sm:$0xff]
    %v496 = vld [vmem:[#allocation2 + $0xdb0] sm:$0xff]
    %v497 = vld [vmem:[#allocation2 + $0xdb8] sm:$0xff]
    %v498 = vld [vmem:[#allocation2 + $0xdc0] sm:$0xff]
    %v499 = vld [vmem:[#allocation2 + $0xdc8] sm:$0xff]
    %v500 = vld [vmem:[#allocation2 + $0xdd0] sm:$0xff]
    %v501 = vld [vmem:[#allocation2 + $0xdd8] sm:$0xff]
    %v502 = vld [vmem:[#allocation2 + $0xde0] sm:$0xff]
    %v503 = vld [vmem:[#allocation2 + $0xde8] sm:$0xff]
    %v504 = vld [vmem:[#allocation2 + $0xdf0] sm:$0xff]
    %v505 = vld [vmem:[#allocation2 + $0xdf8] sm:$0xff]
    %v506 = vld [vmem:[#allocation2 + $0xe00] sm:$0xff]
    %v507 = vld [vmem:[#allocation2 + $0xe08] sm:$0xff]
    %v508 = vld [vmem:[#allocation2 + $0xe10] sm:$0xff]
    %v509 = vld [vmem:[#allocation2 + $0xe18] sm:$0xff]
    %v510 = vld [vmem:[#allocation2 + $0xe20] sm:$0xff]
    %v511 = vld [vmem:[#allocation2 + $0xe28] sm:$0xff]
    %v512 = vld [vmem:[#allocation2 + $0xe30] sm:$0xff]
    %v513 = vld [vmem:[#allocation2 + $0xe38] sm:$0xff]
    %v514 = vld [vmem:[#allocation2 + $0xe40] sm:$0xff]
    %v515 = vld [vmem:[#allocation2 + $0xe48] sm:$0xff]
    %v516 = vld [vmem:[#allocation2 + $0xe50] sm:$0xff]
    %v517 = vld [vmem:[#allocation2 + $0xe58] sm:$0xff]
    %v518 = vld [vmem:[#allocation2 + $0xe60] sm:$0xff]
    %v519 = vld [vmem:[#allocation2 + $0xe68] sm:$0xff]
    %v520 = vld [vmem:[#allocation2 + $0xe70] sm:$0xff]
    %v521 = vld [vmem:[#allocation2 + $0xe78] sm:$0xff]
    %v522 = vld [vmem:[#allocation2 + $0xe80] sm:$0xff]
    %v523 = vld [vmem:[#allocation2 + $0xe88] sm:$0xff]
    %v524 = vld [vmem:[#allocation2 + $0xe90] sm:$0xff]
    %v525 = vld [vmem:[#allocation2 + $0xe98] sm:$0xff]
    %v526 = vld [vmem:[#allocation2 + $0xea0] sm:$0xff]
    %v527 = vld [vmem:[#allocation2 + $0xea8] sm:$0xff]
    %v528 = vld [vmem:[#allocation2 + $0xeb0] sm:$0xff]
    %v529 = vld [vmem:[#allocation2 + $0xeb8] sm:$0xff]
    %v530 = vld [vmem:[#allocation2 + $0xec0] sm:$0xff]
    %v531 = vld [vmem:[#allocation2 + $0xec8] sm:$0xff]
    %v532 = vld [vmem:[#allocation2 + $0xed0] sm:$0xff]
    %v533 = vld [vmem:[#allocation2 + $0xed8] sm:$0xff]
    %v534 = vld [vmem:[#allocation2 + $0xee0] sm:$0xff]
    %v535 = vld [vmem:[#allocation2 + $0xee8] sm:$0xff]
    %v536 = vld [vmem:[#allocation2 + $0xef0] sm:$0xff]
    %v537 = vld [vmem:[#allocation2 + $0xef8] sm:$0xff]
    %v538 = vld [vmem:[#allocation2 + $0xf00] sm:$0xff]
    %v539 = vld [vmem:[#allocation2 + $0xf08] sm:$0xff]
    %v540 = vld [vmem:[#allocation2 + $0xf10] sm:$0xff]
    %v541 = vld [vmem:[#allocation2 + $0xf18] sm:$0xff]
    %v542 = vld [vmem:[#allocation2 + $0xf20] sm:$0xff]
    %v543 = vld [vmem:[#allocation2 + $0xf28] sm:$0xff]
    %v544 = vld [vmem:[#allocation2 + $0xf30] sm:$0xff]
    %v545 = vld [vmem:[#allocation2 + $0xf38] sm:$0xff]
    %v546 = vld [vmem:[#allocation2 + $0xf40] sm:$0xff]
    %v547 = vld [vmem:[#allocation2 + $0xf48] sm:$0xff]
    %v548 = vld [vmem:[#allocation2 + $0xf50] sm:$0xff]
    %v549 = vld [vmem:[#allocation2 + $0xf58] sm:$0xff]
    %v550 = vld [vmem:[#allocation2 + $0xf60] sm:$0xff]
    %v551 = vld [vmem:[#allocation2 + $0xf68] sm:$0xff]
    %v552 = vld [vmem:[#allocation2 + $0xf70] sm:$0xff]
    %v553 = vld [vmem:[#allocation2 + $0xf78] sm:$0xff]
    %v554 = vld [vmem:[#allocation2 + $0xf80] sm:$0xff]
    %v555 = vld [vmem:[#allocation2 + $0xf88] sm:$0xff]
    %v556 = vld [vmem:[#allocation2 + $0xf90] sm:$0xff]
    %v557 = vld [vmem:[#allocation2 + $0xf98] sm:$0xff]
    %v558 = vld [vmem:[#allocation2 + $0xfa0] sm:$0xff]
    %v559 = vld [vmem:[#allocation2 + $0xfa8] sm:$0xff]
    %v560 = vld [vmem:[#allocation2 + $0xfb0] sm:$0xff]
    %v561 = vld [vmem:[#allocation2 + $0xfb8] sm:$0xff]
    %v562 = vld [vmem:[#allocation2 + $0xfc0] sm:$0xff]
    %v563 = vld [vmem:[#allocation2 + $0xfc8] sm:$0xff]
    %v564 = vld [vmem:[#allocation2 + $0xfd0] sm:$0xff]
    %v565 = vld [vmem:[#allocation2 + $0xfd8] sm:$0xff]
    %v566 = vld [vmem:[#allocation2 + $0xfe0] sm:$0xff]
    %v567 = vld [vmem:[#allocation2 + $0xfe8] sm:$0xff]
    %v568 = vld [vmem:[#allocation2 + $0xff0] sm:$0xff]
    %v569 = vld [vmem:[#allocation2 + $0xff8] sm:$0xff]
    %v586 = vunpack.c.l.b16 %v42
    %v587 = vunpack.c.h.b16 %v42
    %v588 = vunpack.c.l.b16 %v43
    %v589 = vunpack.c.h.b16 %v43
    %v590 = vunpack.c.l.b16 %v44
    %v591 = vunpack.c.h.b16 %v44
    %v592 = vunpack.c.l.b16 %v45
    %v593 = vunpack.c.h.b16 %v45
    %v594 = vunpack.c.l.b16 %v46
    %v595 = vunpack.c.h.b16 %v46
    %v596 = vunpack.c.l.b16 %v47
    %v597 = vunpack.c.h.b16 %v47
    %v598 = vunpack.c.l.b16 %v48
    %v599 = vunpack.c.h.b16 %v48
    %v600 = vunpack.c.l.b16 %v49
    %v601 = vunpack.c.h.b16 %v49
    %v602 = vunpack.c.l.b16 %v50
    %v603 = vunpack.c.h.b16 %v50
    %v604 = vunpack.c.l.b16 %v51
    %v605 = vunpack.c.h.b16 %v51
    %v606 = vunpack.c.l.b16 %v52
    %v607 = vunpack.c.h.b16 %v52
    %v608 = vunpack.c.l.b16 %v53
    %v609 = vunpack.c.h.b16 %v53
    %v610 = vunpack.c.l.b16 %v54
    %v611 = vunpack.c.h.b16 %v54
    %v612 = vunpack.c.l.b16 %v55
    %v613 = vunpack.c.h.b16 %v55
    %v614 = vunpack.c.l.b16 %v56
    %v615 = vunpack.c.h.b16 %v56
    %v616 = vunpack.c.l.b16 %v57
    %v617 = vunpack.c.h.b16 %v57
    %v618 = vpack.c.b16 %v594, %v586
    %v619 = vpack.c.b16 %v595, %v587
    %v620 = vpack.c.b16 %v596, %v588
    %v621 = vpack.c.b16 %v597, %v589
    %v622 = vpack.c.b16 %v598, %v590
    %v623 = vpack.c.b16 %v599, %v591
    %v624 = vpack.c.b16 %v600, %v592
    %v625 = vpack.c.b16 %v601, %v593
    %v626 = vpack.c.b16 %v610, %v602
    %v627 = vpack.c.b16 %v611, %v603
    %v628 = vpack.c.b16 %v612, %v604
    %v629 = vpack.c.b16 %v613, %v605
    %v630 = vpack.c.b16 %v614, %v606
    %v631 = vpack.c.b16 %v615, %v607
    %v632 = vpack.c.b16 %v616, %v608
    %v633 = vpack.c.b16 %v617, %v609
    %v1162 = vunpack.c.l.b16 %v58
    %v1163 = vunpack.c.h.b16 %v58
    %v1164 = vunpack.c.l.b16 %v59
    %v1165 = vunpack.c.h.b16 %v59
    %v1166 = vunpack.c.l.b16 %v60
    %v1167 = vunpack.c.h.b16 %v60
    %v1168 = vunpack.c.l.b16 %v61
    %v1169 = vunpack.c.h.b16 %v61
    %v1170 = vunpack.c.l.b16 %v62
    %v1171 = vunpack.c.h.b16 %v62
    %v1172 = vunpack.c.l.b16 %v63
    %v1173 = vunpack.c.h.b16 %v63
    %v1174 = vunpack.c.l.b16 %v64
    %v1175 = vunpack.c.h.b16 %v64
    %v1176 = vunpack.c.l.b16 %v65
    %v1177 = vunpack.c.h.b16 %v65
    %v1178 = vunpack.c.l.b16 %v66
    %v1179 = vunpack.c.h.b16 %v66
    %v1180 = vunpack.c.l.b16 %v67
    %v1181 = vunpack.c.h.b16 %v67
    %v1182 = vunpack.c.l.b16 %v68
    %v1183 = vunpack.c.h.b16 %v68
    %v1184 = vunpack.c.l.b16 %v69
    %v1185 = vunpack.c.h.b16 %v69
    %v1186 = vunpack.c.l.b16 %v70
    %v1187 = vunpack.c.h.b16 %v70
    %v1188 = vunpack.c.l.b16 %v71
    %v1189 = vunpack.c.h.b16 %v71
    %v1190 = vunpack.c.l.b16 %v72
    %v1191 = vunpack.c.h.b16 %v72
    %v1192 = vunpack.c.l.b16 %v73
    %v1193 = vunpack.c.h.b16 %v73
    %v1194 = vunpack.c.l.b16 %v74
    %v1195 = vunpack.c.h.b16 %v74
    %v1196 = vunpack.c.l.b16 %v75
    %v1197 = vunpack.c.h.b16 %v75
    %v1198 = vunpack.c.l.b16 %v76
    %v1199 = vunpack.c.h.b16 %v76
    %v1200 = vunpack.c.l.b16 %v77
    %v1201 = vunpack.c.h.b16 %v77
    %v1202 = vunpack.c.l.b16 %v78
    %v1203 = vunpack.c.h.b16 %v78
    %v1204 = vunpack.c.l.b16 %v79
    %v1205 = vunpack.c.h.b16 %v79
    %v1206 = vunpack.c.l.b16 %v80
    %v1207 = vunpack.c.h.b16 %v80
    %v1208 = vunpack.c.l.b16 %v81
    %v1209 = vunpack.c.h.b16 %v81
    %v1210 = vunpack.c.l.b16 %v82
    %v1211 = vunpack.c.h.b16 %v82
    %v1212 = vunpack.c.l.b16 %v83
    %v1213 = vunpack.c.h.b16 %v83
    %v1214 = vunpack.c.l.b16 %v84
    %v1215 = vunpack.c.h.b16 %v84
    %v1216 = vunpack.c.l.b16 %v85
    %v1217 = vunpack.c.h.b16 %v85
    %v1218 = vunpack.c.l.b16 %v86
    %v1219 = vunpack.c.h.b16 %v86
    %v1220 = vunpack.c.l.b16 %v87
    %v1221 = vunpack.c.h.b16 %v87
    %v1222 = vunpack.c.l.b16 %v88
    %v1223 = vunpack.c.h.b16 %v88
    %v1224 = vunpack.c.l.b16 %v89
    %v1225 = vunpack.c.h.b16 %v89
    %v1226 = vunpack.c.l.b16 %v90
    %v1227 = vunpack.c.h.b16 %v90
    %v1228 = vunpack.c.l.b16 %v91
    %v1229 = vunpack.c.h.b16 %v91
    %v1230 = vunpack.c.l.b16 %v92
    %v1231 = vunpack.c.h.b16 %v92
    %v1232 = vunpack.c.l.b16 %v93
    %v1233 = vunpack.c.h.b16 %v93
    %v1234 = vunpack.c.l.b16 %v94
    %v1235 = vunpack.c.h.b16 %v94
    %v1236 = vunpack.c.l.b16 %v95
    %v1237 = vunpack.c.h.b16 %v95
    %v1238 = vunpack.c.l.b16 %v96
    %v1239 = vunpack.c.h.b16 %v96
    %v1240 = vunpack.c.l.b16 %v97
    %v1241 = vunpack.c.h.b16 %v97
    %v1242 = vunpack.c.l.b16 %v98
    %v1243 = vunpack.c.h.b16 %v98
    %v1244 = vunpack.c.l.b16 %v99
    %v1245 = vunpack.c.h.b16 %v99
    %v1246 = vunpack.c.l.b16 %v100
    %v1247 = vunpack.c.h.b16 %v100
    %v1248 = vunpack.c.l.b16 %v101
    %v1249 = vunpack.c.h.b16 %v101
    %v1250 = vunpack.c.l.b16 %v102
    %v1251 = vunpack.c.h.b16 %v102
    %v1252 = vunpack.c.l.b16 %v103
    %v1253 = vunpack.c.h.b16 %v103
    %v1254 = vunpack.c.l.b16 %v104
    %v1255 = vunpack.c.h.b16 %v104
    %v1256 = vunpack.c.l.b16 %v105
    %v1257 = vunpack.c.h.b16 %v105
    %v1258 = vunpack.c.l.b16 %v106
    %v1259 = vunpack.c.h.b16 %v106
    %v1260 = vunpack.c.l.b16 %v107
    %v1261 = vunpack.c.h.b16 %v107
    %v1262 = vunpack.c.l.b16 %v108
    %v1263 = vunpack.c.h.b16 %v108
    %v1264 = vunpack.c.l.b16 %v109
    %v1265 = vunpack.c.h.b16 %v109
    %v1266 = vunpack.c.l.b16 %v110
    %v1267 = vunpack.c.h.b16 %v110
    %v1268 = vunpack.c.l.b16 %v111
    %v1269 = vunpack.c.h.b16 %v111
    %v1270 = vunpack.c.l.b16 %v112
    %v1271 = vunpack.c.h.b16 %v112
    %v1272 = vunpack.c.l.b16 %v113
    %v1273 = vunpack.c.h.b16 %v113
    %v1274 = vunpack.c.l.b16 %v114
    %v1275 = vunpack.c.h.b16 %v114
    %v1276 = vunpack.c.l.b16 %v115
    %v1277 = vunpack.c.h.b16 %v115
    %v1278 = vunpack.c.l.b16 %v116
    %v1279 = vunpack.c.h.b16 %v116
    %v1280 = vunpack.c.l.b16 %v117
    %v1281 = vunpack.c.h.b16 %v117
    %v1282 = vunpack.c.l.b16 %v118
    %v1283 = vunpack.c.h.b16 %v118
    %v1284 = vunpack.c.l.b16 %v119
    %v1285 = vunpack.c.h.b16 %v119
    %v1286 = vunpack.c.l.b16 %v120
    %v1287 = vunpack.c.h.b16 %v120
    %v1288 = vunpack.c.l.b16 %v121
    %v1289 = vunpack.c.h.b16 %v121
    %v1290 = vunpack.c.l.b16 %v122
    %v1291 = vunpack.c.h.b16 %v122
    %v1292 = vunpack.c.l.b16 %v123
    %v1293 = vunpack.c.h.b16 %v123
    %v1294 = vunpack.c.l.b16 %v124
    %v1295 = vunpack.c.h.b16 %v124
    %v1296 = vunpack.c.l.b16 %v125
    %v1297 = vunpack.c.h.b16 %v125
    %v1298 = vunpack.c.l.b16 %v126
    %v1299 = vunpack.c.h.b16 %v126
    %v1300 = vunpack.c.l.b16 %v127
    %v1301 = vunpack.c.h.b16 %v127
    %v1302 = vunpack.c.l.b16 %v128
    %v1303 = vunpack.c.h.b16 %v128
    %v1304 = vunpack.c.l.b16 %v129
    %v1305 = vunpack.c.h.b16 %v129
    %v1306 = vunpack.c.l.b16 %v130
    %v1307 = vunpack.c.h.b16 %v130
    %v1308 = vunpack.c.l.b16 %v131
    %v1309 = vunpack.c.h.b16 %v131
    %v1310 = vunpack.c.l.b16 %v132
    %v1311 = vunpack.c.h.b16 %v132
    %v1312 = vunpack.c.l.b16 %v133
    %v1313 = vunpack.c.h.b16 %v133
    %v1314 = vunpack.c.l.b16 %v134
    %v1315 = vunpack.c.h.b16 %v134
    %v1316 = vunpack.c.l.b16 %v135
    %v1317 = vunpack.c.h.b16 %v135
    %v1318 = vunpack.c.l.b16 %v136
    %v1319 = vunpack.c.h.b16 %v136
    %v1320 = vunpack.c.l.b16 %v137
    %v1321 = vunpack.c.h.b16 %v137
    %v1322 = vunpack.c.l.b16 %v138
    %v1323 = vunpack.c.h.b16 %v138
    %v1324 = vunpack.c.l.b16 %v139
    %v1325 = vunpack.c.h.b16 %v139
    %v1326 = vunpack.c.l.b16 %v140
    %v1327 = vunpack.c.h.b16 %v140
    %v1328 = vunpack.c.l.b16 %v141
    %v1329 = vunpack.c.h.b16 %v141
    %v1330 = vunpack.c.l.b16 %v142
    %v1331 = vunpack.c.h.b16 %v142
    %v1332 = vunpack.c.l.b16 %v143
    %v1333 = vunpack.c.h.b16 %v143
    %v1334 = vunpack.c.l.b16 %v144
    %v1335 = vunpack.c.h.b16 %v144
    %v1336 = vunpack.c.l.b16 %v145
    %v1337 = vunpack.c.h.b16 %v145
    %v1338 = vunpack.c.l.b16 %v146
    %v1339 = vunpack.c.h.b16 %v146
    %v1340 = vunpack.c.l.b16 %v147
    %v1341 = vunpack.c.h.b16 %v147
    %v1342 = vunpack.c.l.b16 %v148
    %v1343 = vunpack.c.h.b16 %v148
    %v1344 = vunpack.c.l.b16 %v149
    %v1345 = vunpack.c.h.b16 %v149
    %v1346 = vunpack.c.l.b16 %v150
    %v1347 = vunpack.c.h.b16 %v150
    %v1348 = vunpack.c.l.b16 %v151
    %v1349 = vunpack.c.h.b16 %v151
    %v1350 = vunpack.c.l.b16 %v152
    %v1351 = vunpack.c.h.b16 %v152
    %v1352 = vunpack.c.l.b16 %v153
    %v1353 = vunpack.c.h.b16 %v153
    %v1354 = vunpack.c.l.b16 %v154
    %v1355 = vunpack.c.h.b16 %v154
    %v1356 = vunpack.c.l.b16 %v155
    %v1357 = vunpack.c.h.b16 %v155
    %v1358 = vunpack.c.l.b16 %v156
    %v1359 = vunpack.c.h.b16 %v156
    %v1360 = vunpack.c.l.b16 %v157
    %v1361 = vunpack.c.h.b16 %v157
    %v1362 = vunpack.c.l.b16 %v158
    %v1363 = vunpack.c.h.b16 %v158
    %v1364 = vunpack.c.l.b16 %v159
    %v1365 = vunpack.c.h.b16 %v159
    %v1366 = vunpack.c.l.b16 %v160
    %v1367 = vunpack.c.h.b16 %v160
    %v1368 = vunpack.c.l.b16 %v161
    %v1369 = vunpack.c.h.b16 %v161
    %v1370 = vunpack.c.l.b16 %v162
    %v1371 = vunpack.c.h.b16 %v162
    %v1372 = vunpack.c.l.b16 %v163
    %v1373 = vunpack.c.h.b16 %v163
    %v1374 = vunpack.c.l.b16 %v164
    %v1375 = vunpack.c.h.b16 %v164
    %v1376 = vunpack.c.l.b16 %v165
    %v1377 = vunpack.c.h.b16 %v165
    %v1378 = vunpack.c.l.b16 %v166
    %v1379 = vunpack.c.h.b16 %v166
    %v1380 = vunpack.c.l.b16 %v167
    %v1381 = vunpack.c.h.b16 %v167
    %v1382 = vunpack.c.l.b16 %v168
    %v1383 = vunpack.c.h.b16 %v168
    %v1384 = vunpack.c.l.b16 %v169
    %v1385 = vunpack.c.h.b16 %v169
    %v1386 = vunpack.c.l.b16 %v170
    %v1387 = vunpack.c.h.b16 %v170
    %v1388 = vunpack.c.l.b16 %v171
    %v1389 = vunpack.c.h.b16 %v171
    %v1390 = vunpack.c.l.b16 %v172
    %v1391 = vunpack.c.h.b16 %v172
    %v1392 = vunpack.c.l.b16 %v173
    %v1393 = vunpack.c.h.b16 %v173
    %v1394 = vunpack.c.l.b16 %v174
    %v1395 = vunpack.c.h.b16 %v174
    %v1396 = vunpack.c.l.b16 %v175
    %v1397 = vunpack.c.h.b16 %v175
    %v1398 = vunpack.c.l.b16 %v176
    %v1399 = vunpack.c.h.b16 %v176
    %v1400 = vunpack.c.l.b16 %v177
    %v1401 = vunpack.c.h.b16 %v177
    %v1402 = vunpack.c.l.b16 %v178
    %v1403 = vunpack.c.h.b16 %v178
    %v1404 = vunpack.c.l.b16 %v179
    %v1405 = vunpack.c.h.b16 %v179
    %v1406 = vunpack.c.l.b16 %v180
    %v1407 = vunpack.c.h.b16 %v180
    %v1408 = vunpack.c.l.b16 %v181
    %v1409 = vunpack.c.h.b16 %v181
    %v1410 = vunpack.c.l.b16 %v182
    %v1411 = vunpack.c.h.b16 %v182
    %v1412 = vunpack.c.l.b16 %v183
    %v1413 = vunpack.c.h.b16 %v183
    %v1414 = vunpack.c.l.b16 %v184
    %v1415 = vunpack.c.h.b16 %v184
    %v1416 = vunpack.c.l.b16 %v185
    %v1417 = vunpack.c.h.b16 %v185
    %v1418 = vunpack.c.l.b16 %v186
    %v1419 = vunpack.c.h.b16 %v186
    %v1420 = vunpack.c.l.b16 %v187
    %v1421 = vunpack.c.h.b16 %v187
    %v1422 = vunpack.c.l.b16 %v188
    %v1423 = vunpack.c.h.b16 %v188
    %v1424 = vunpack.c.l.b16 %v189
    %v1425 = vunpack.c.h.b16 %v189
    %v1426 = vunpack.c.l.b16 %v190
    %v1427 = vunpack.c.h.b16 %v190
    %v1428 = vunpack.c.l.b16 %v191
    %v1429 = vunpack.c.h.b16 %v191
    %v1430 = vunpack.c.l.b16 %v192
    %v1431 = vunpack.c.h.b16 %v192
    %v1432 = vunpack.c.l.b16 %v193
    %v1433 = vunpack.c.h.b16 %v193
    %v1434 = vunpack.c.l.b16 %v194
    %v1435 = vunpack.c.h.b16 %v194
    %v1436 = vunpack.c.l.b16 %v195
    %v1437 = vunpack.c.h.b16 %v195
    %v1438 = vunpack.c.l.b16 %v196
    %v1439 = vunpack.c.h.b16 %v196
    %v1440 = vunpack.c.l.b16 %v197
    %v1441 = vunpack.c.h.b16 %v197
    %v1442 = vunpack.c.l.b16 %v198
    %v1443 = vunpack.c.h.b16 %v198
    %v1444 = vunpack.c.l.b16 %v199
    %v1445 = vunpack.c.h.b16 %v199
    %v1446 = vunpack.c.l.b16 %v200
    %v1447 = vunpack.c.h.b16 %v200
    %v1448 = vunpack.c.l.b16 %v201
    %v1449 = vunpack.c.h.b16 %v201
    %v1450 = vunpack.c.l.b16 %v202
    %v1451 = vunpack.c.h.b16 %v202
    %v1452 = vunpack.c.l.b16 %v203
    %v1453 = vunpack.c.h.b16 %v203
    %v1454 = vunpack.c.l.b16 %v204
    %v1455 = vunpack.c.h.b16 %v204
    %v1456 = vunpack.c.l.b16 %v205
    %v1457 = vunpack.c.h.b16 %v205
    %v1458 = vunpack.c.l.b16 %v206
    %v1459 = vunpack.c.h.b16 %v206
    %v1460 = vunpack.c.l.b16 %v207
    %v1461 = vunpack.c.h.b16 %v207
    %v1462 = vunpack.c.l.b16 %v208
    %v1463 = vunpack.c.h.b16 %v208
    %v1464 = vunpack.c.l.b16 %v209
    %v1465 = vunpack.c.h.b16 %v209
    %v1466 = vunpack.c.l.b16 %v210
    %v1467 = vunpack.c.h.b16 %v210
    %v1468 = vunpack.c.l.b16 %v211
    %v1469 = vunpack.c.h.b16 %v211
    %v1470 = vunpack.c.l.b16 %v212
    %v1471 = vunpack.c.h.b16 %v212
    %v1472 = vunpack.c.l.b16 %v213
    %v1473 = vunpack.c.h.b16 %v213
    %v1474 = vunpack.c.l.b16 %v214
    %v1475 = vunpack.c.h.b16 %v214
    %v1476 = vunpack.c.l.b16 %v215
    %v1477 = vunpack.c.h.b16 %v215
    %v1478 = vunpack.c.l.b16 %v216
    %v1479 = vunpack.c.h.b16 %v216
    %v1480 = vunpack.c.l.b16 %v217
    %v1481 = vunpack.c.h.b16 %v217
    %v1482 = vunpack.c.l.b16 %v218
    %v1483 = vunpack.c.h.b16 %v218
    %v1484 = vunpack.c.l.b16 %v219
    %v1485 = vunpack.c.h.b16 %v219
    %v1486 = vunpack.c.l.b16 %v220
    %v1487 = vunpack.c.h.b16 %v220
    %v1488 = vunpack.c.l.b16 %v221
    %v1489 = vunpack.c.h.b16 %v221
    %v1490 = vunpack.c.l.b16 %v222
    %v1491 = vunpack.c.h.b16 %v222
    %v1492 = vunpack.c.l.b16 %v223
    %v1493 = vunpack.c.h.b16 %v223
    %v1494 = vunpack.c.l.b16 %v224
    %v1495 = vunpack.c.h.b16 %v224
    %v1496 = vunpack.c.l.b16 %v225
    %v1497 = vunpack.c.h.b16 %v225
    %v1498 = vunpack.c.l.b16 %v226
    %v1499 = vunpack.c.h.b16 %v226
    %v1500 = vunpack.c.l.b16 %v227
    %v1501 = vunpack.c.h.b16 %v227
    %v1502 = vunpack.c.l.b16 %v228
    %v1503 = vunpack.c.h.b16 %v228
    %v1504 = vunpack.c.l.b16 %v229
    %v1505 = vunpack.c.h.b16 %v229
    %v1506 = vunpack.c.l.b16 %v230
    %v1507 = vunpack.c.h.b16 %v230
    %v1508 = vunpack.c.l.b16 %v231
    %v1509 = vunpack.c.h.b16 %v231
    %v1510 = vunpack.c.l.b16 %v232
    %v1511 = vunpack.c.h.b16 %v232
    %v1512 = vunpack.c.l.b16 %v233
    %v1513 = vunpack.c.h.b16 %v233
    %v1514 = vunpack.c.l.b16 %v234
    %v1515 = vunpack.c.h.b16 %v234
    %v1516 = vunpack.c.l.b16 %v235
    %v1517 = vunpack.c.h.b16 %v235
    %v1518 = vunpack.c.l.b16 %v236
    %v1519 = vunpack.c.h.b16 %v236
    %v1520 = vunpack.c.l.b16 %v237
    %v1521 = vunpack.c.h.b16 %v237
    %v1522 = vunpack.c.l.b16 %v238
    %v1523 = vunpack.c.h.b16 %v238
    %v1524 = vunpack.c.l.b16 %v239
    %v1525 = vunpack.c.h.b16 %v239
    %v1526 = vunpack.c.l.b16 %v240
    %v1527 = vunpack.c.h.b16 %v240
    %v1528 = vunpack.c.l.b16 %v241
    %v1529 = vunpack.c.h.b16 %v241
    %v1530 = vunpack.c.l.b16 %v242
    %v1531 = vunpack.c.h.b16 %v242
    %v1532 = vunpack.c.l.b16 %v243
    %v1533 = vunpack.c.h.b16 %v243
    %v1534 = vunpack.c.l.b16 %v244
    %v1535 = vunpack.c.h.b16 %v244
    %v1536 = vunpack.c.l.b16 %v245
    %v1537 = vunpack.c.h.b16 %v245
    %v1538 = vunpack.c.l.b16 %v246
    %v1539 = vunpack.c.h.b16 %v246
    %v1540 = vunpack.c.l.b16 %v247
    %v1541 = vunpack.c.h.b16 %v247
    %v1542 = vunpack.c.l.b16 %v248
    %v1543 = vunpack.c.h.b16 %v248
    %v1544 = vunpack.c.l.b16 %v249
    %v1545 = vunpack.c.h.b16 %v249
    %v1546 = vunpack.c.l.b16 %v250
    %v1547 = vunpack.c.h.b16 %v250
    %v1548 = vunpack.c.l.b16 %v251
    %v1549 = vunpack.c.h.b16 %v251
    %v1550 = vunpack.c.l.b16 %v252
    %v1551 = vunpack.c.h.b16 %v252
    %v1552 = vunpack.c.l.b16 %v253
    %v1553 = vunpack.c.h.b16 %v253
    %v1554 = vunpack.c.l.b16 %v254
    %v1555 = vunpack.c.h.b16 %v254
    %v1556 = vunpack.c.l.b16 %v255
    %v1557 = vunpack.c.h.b16 %v255
    %v1558 = vunpack.c.l.b16 %v256
    %v1559 = vunpack.c.h.b16 %v256
    %v1560 = vunpack.c.l.b16 %v257
    %v1561 = vunpack.c.h.b16 %v257
    %v1562 = vunpack.c.l.b16 %v258
    %v1563 = vunpack.c.h.b16 %v258
    %v1564 = vunpack.c.l.b16 %v259
    %v1565 = vunpack.c.h.b16 %v259
    %v1566 = vunpack.c.l.b16 %v260
    %v1567 = vunpack.c.h.b16 %v260
    %v1568 = vunpack.c.l.b16 %v261
    %v1569 = vunpack.c.h.b16 %v261
    %v1570 = vunpack.c.l.b16 %v262
    %v1571 = vunpack.c.h.b16 %v262
    %v1572 = vunpack.c.l.b16 %v263
    %v1573 = vunpack.c.h.b16 %v263
    %v1574 = vunpack.c.l.b16 %v264
    %v1575 = vunpack.c.h.b16 %v264
    %v1576 = vunpack.c.l.b16 %v265
    %v1577 = vunpack.c.h.b16 %v265
    %v1578 = vunpack.c.l.b16 %v266
    %v1579 = vunpack.c.h.b16 %v266
    %v1580 = vunpack.c.l.b16 %v267
    %v1581 = vunpack.c.h.b16 %v267
    %v1582 = vunpack.c.l.b16 %v268
    %v1583 = vunpack.c.h.b16 %v268
    %v1584 = vunpack.c.l.b16 %v269
    %v1585 = vunpack.c.h.b16 %v269
    %v1586 = vunpack.c.l.b16 %v270
    %v1587 = vunpack.c.h.b16 %v270
    %v1588 = vunpack.c.l.b16 %v271
    %v1589 = vunpack.c.h.b16 %v271
    %v1590 = vunpack.c.l.b16 %v272
    %v1591 = vunpack.c.h.b16 %v272
    %v1592 = vunpack.c.l.b16 %v273
    %v1593 = vunpack.c.h.b16 %v273
    %v1594 = vunpack.c.l.b16 %v274
    %v1595 = vunpack.c.h.b16 %v274
    %v1596 = vunpack.c.l.b16 %v275
    %v1597 = vunpack.c.h.b16 %v275
    %v1598 = vunpack.c.l.b16 %v276
    %v1599 = vunpack.c.h.b16 %v276
    %v1600 = vunpack.c.l.b16 %v277
    %v1601 = vunpack.c.h.b16 %v277
    %v1602 = vunpack.c.l.b16 %v278
    %v1603 = vunpack.c.h.b16 %v278
    %v1604 = vunpack.c.l.b16 %v279
    %v1605 = vunpack.c.h.b16 %v279
    %v1606 = vunpack.c.l.b16 %v280
    %v1607 = vunpack.c.h.b16 %v280
    %v1608 = vunpack.c.l.b16 %v281
    %v1609 = vunpack.c.h.b16 %v281
    %v1610 = vunpack.c.l.b16 %v282
    %v1611 = vunpack.c.h.b16 %v282
    %v1612 = vunpack.c.l.b16 %v283
    %v1613 = vunpack.c.h.b16 %v283
    %v1614 = vunpack.c.l.b16 %v284
    %v1615 = vunpack.c.h.b16 %v284
    %v1616 = vunpack.c.l.b16 %v285
    %v1617 = vunpack.c.h.b16 %v285
    %v1618 = vunpack.c.l.b16 %v286
    %v1619 = vunpack.c.h.b16 %v286
    %v1620 = vunpack.c.l.b16 %v287
    %v1621 = vunpack.c.h.b16 %v287
    %v1622 = vunpack.c.l.b16 %v288
    %v1623 = vunpack.c.h.b16 %v288
    %v1624 = vunpack.c.l.b16 %v289
    %v1625 = vunpack.c.h.b16 %v289
    %v1626 = vunpack.c.l.b16 %v290
    %v1627 = vunpack.c.h.b16 %v290
    %v1628 = vunpack.c.l.b16 %v291
    %v1629 = vunpack.c.h.b16 %v291
    %v1630 = vunpack.c.l.b16 %v292
    %v1631 = vunpack.c.h.b16 %v292
    %v1632 = vunpack.c.l.b16 %v293
    %v1633 = vunpack.c.h.b16 %v293
    %v1634 = vunpack.c.l.b16 %v294
    %v1635 = vunpack.c.h.b16 %v294
    %v1636 = vunpack.c.l.b16 %v295
    %v1637 = vunpack.c.h.b16 %v295
    %v1638 = vunpack.c.l.b16 %v296
    %v1639 = vunpack.c.h.b16 %v296
    %v1640 = vunpack.c.l.b16 %v297
    %v1641 = vunpack.c.h.b16 %v297
    %v1642 = vunpack.c.l.b16 %v298
    %v1643 = vunpack.c.h.b16 %v298
    %v1644 = vunpack.c.l.b16 %v299
    %v1645 = vunpack.c.h.b16 %v299
    %v1646 = vunpack.c.l.b16 %v300
    %v1647 = vunpack.c.h.b16 %v300
    %v1648 = vunpack.c.l.b16 %v301
    %v1649 = vunpack.c.h.b16 %v301
    %v1650 = vunpack.c.l.b16 %v302
    %v1651 = vunpack.c.h.b16 %v302
    %v1652 = vunpack.c.l.b16 %v303
    %v1653 = vunpack.c.h.b16 %v303
    %v1654 = vunpack.c.l.b16 %v304
    %v1655 = vunpack.c.h.b16 %v304
    %v1656 = vunpack.c.l.b16 %v305
    %v1657 = vunpack.c.h.b16 %v305
    %v1658 = vunpack.c.l.b16 %v306
    %v1659 = vunpack.c.h.b16 %v306
    %v1660 = vunpack.c.l.b16 %v307
    %v1661 = vunpack.c.h.b16 %v307
    %v1662 = vunpack.c.l.b16 %v308
    %v1663 = vunpack.c.h.b16 %v308
    %v1664 = vunpack.c.l.b16 %v309
    %v1665 = vunpack.c.h.b16 %v309
    %v1666 = vunpack.c.l.b16 %v310
    %v1667 = vunpack.c.h.b16 %v310
    %v1668 = vunpack.c.l.b16 %v311
    %v1669 = vunpack.c.h.b16 %v311
    %v1670 = vunpack.c.l.b16 %v312
    %v1671 = vunpack.c.h.b16 %v312
    %v1672 = vunpack.c.l.b16 %v313
    %v1673 = vunpack.c.h.b16 %v313
    %v1674 = vunpack.c.l.b16 %v314
    %v1675 = vunpack.c.h.b16 %v314
    %v1676 = vunpack.c.l.b16 %v315
    %v1677 = vunpack.c.h.b16 %v315
    %v1678 = vunpack.c.l.b16 %v316
    %v1679 = vunpack.c.h.b16 %v316
    %v1680 = vunpack.c.l.b16 %v317
    %v1681 = vunpack.c.h.b16 %v317
    %v1682 = vunpack.c.l.b16 %v318
    %v1683 = vunpack.c.h.b16 %v318
    %v1684 = vunpack.c.l.b16 %v319
    %v1685 = vunpack.c.h.b16 %v319
    %v1686 = vunpack.c.l.b16 %v320
    %v1687 = vunpack.c.h.b16 %v320
    %v1688 = vunpack.c.l.b16 %v321
    %v1689 = vunpack.c.h.b16 %v321
    %v1690 = vunpack.c.l.b16 %v322
    %v1691 = vunpack.c.h.b16 %v322
    %v1692 = vunpack.c.l.b16 %v323
    %v1693 = vunpack.c.h.b16 %v323
    %v1694 = vunpack.c.l.b16 %v324
    %v1695 = vunpack.c.h.b16 %v324
    %v1696 = vunpack.c.l.b16 %v325
    %v1697 = vunpack.c.h.b16 %v325
    %v1698 = vunpack.c.l.b16 %v326
    %v1699 = vunpack.c.h.b16 %v326
    %v1700 = vunpack.c.l.b16 %v327
    %v1701 = vunpack.c.h.b16 %v327
    %v1702 = vunpack.c.l.b16 %v328
    %v1703 = vunpack.c.h.b16 %v328
    %v1704 = vunpack.c.l.b16 %v329
    %v1705 = vunpack.c.h.b16 %v329
    %v1706 = vunpack.c.l.b16 %v330
    %v1707 = vunpack.c.h.b16 %v330
    %v1708 = vunpack.c.l.b16 %v331
    %v1709 = vunpack.c.h.b16 %v331
    %v1710 = vunpack.c.l.b16 %v332
    %v1711 = vunpack.c.h.b16 %v332
    %v1712 = vunpack.c.l.b16 %v333
    %v1713 = vunpack.c.h.b16 %v333
    %v1714 = vunpack.c.l.b16 %v334
    %v1715 = vunpack.c.h.b16 %v334
    %v1716 = vunpack.c.l.b16 %v335
    %v1717 = vunpack.c.h.b16 %v335
    %v1718 = vunpack.c.l.b16 %v336
    %v1719 = vunpack.c.h.b16 %v336
    %v1720 = vunpack.c.l.b16 %v337
    %v1721 = vunpack.c.h.b16 %v337
    %v1722 = vunpack.c.l.b16 %v338
    %v1723 = vunpack.c.h.b16 %v338
    %v1724 = vunpack.c.l.b16 %v339
    %v1725 = vunpack.c.h.b16 %v339
    %v1726 = vunpack.c.l.b16 %v340
    %v1727 = vunpack.c.h.b16 %v340
    %v1728 = vunpack.c.l.b16 %v341
    %v1729 = vunpack.c.h.b16 %v341
    %v1730 = vunpack.c.l.b16 %v342
    %v1731 = vunpack.c.h.b16 %v342
    %v1732 = vunpack.c.l.b16 %v343
    %v1733 = vunpack.c.h.b16 %v343
    %v1734 = vunpack.c.l.b16 %v344
    %v1735 = vunpack.c.h.b16 %v344
    %v1736 = vunpack.c.l.b16 %v345
    %v1737 = vunpack.c.h.b16 %v345
    %v1738 = vunpack.c.l.b16 %v346
    %v1739 = vunpack.c.h.b16 %v346
    %v1740 = vunpack.c.l.b16 %v347
    %v1741 = vunpack.c.h.b16 %v347
    %v1742 = vunpack.c.l.b16 %v348
    %v1743 = vunpack.c.h.b16 %v348
    %v1744 = vunpack.c.l.b16 %v349
    %v1745 = vunpack.c.h.b16 %v349
    %v1746 = vunpack.c.l.b16 %v350
    %v1747 = vunpack.c.h.b16 %v350
    %v1748 = vunpack.c.l.b16 %v351
    %v1749 = vunpack.c.h.b16 %v351
    %v1750 = vunpack.c.l.b16 %v352
    %v1751 = vunpack.c.h.b16 %v352
    %v1752 = vunpack.c.l.b16 %v353
    %v1753 = vunpack.c.h.b16 %v353
    %v1754 = vunpack.c.l.b16 %v354
    %v1755 = vunpack.c.h.b16 %v354
    %v1756 = vunpack.c.l.b16 %v355
    %v1757 = vunpack.c.h.b16 %v355
    %v1758 = vunpack.c.l.b16 %v356
    %v1759 = vunpack.c.h.b16 %v356
    %v1760 = vunpack.c.l.b16 %v357
    %v1761 = vunpack.c.h.b16 %v357
    %v1762 = vunpack.c.l.b16 %v358
    %v1763 = vunpack.c.h.b16 %v358
    %v1764 = vunpack.c.l.b16 %v359
    %v1765 = vunpack.c.h.b16 %v359
    %v1766 = vunpack.c.l.b16 %v360
    %v1767 = vunpack.c.h.b16 %v360
    %v1768 = vunpack.c.l.b16 %v361
    %v1769 = vunpack.c.h.b16 %v361
    %v1770 = vunpack.c.l.b16 %v362
    %v1771 = vunpack.c.h.b16 %v362
    %v1772 = vunpack.c.l.b16 %v363
    %v1773 = vunpack.c.h.b16 %v363
    %v1774 = vunpack.c.l.b16 %v364
    %v1775 = vunpack.c.h.b16 %v364
    %v1776 = vunpack.c.l.b16 %v365
    %v1777 = vunpack.c.h.b16 %v365
    %v1778 = vunpack.c.l.b16 %v366
    %v1779 = vunpack.c.h.b16 %v366
    %v1780 = vunpack.c.l.b16 %v367
    %v1781 = vunpack.c.h.b16 %v367
    %v1782 = vunpack.c.l.b16 %v368
    %v1783 = vunpack.c.h.b16 %v368
    %v1784 = vunpack.c.l.b16 %v369
    %v1785 = vunpack.c.h.b16 %v369
    %v1786 = vunpack.c.l.b16 %v370
    %v1787 = vunpack.c.h.b16 %v370
    %v1788 = vunpack.c.l.b16 %v371
    %v1789 = vunpack.c.h.b16 %v371
    %v1790 = vunpack.c.l.b16 %v372
    %v1791 = vunpack.c.h.b16 %v372
    %v1792 = vunpack.c.l.b16 %v373
    %v1793 = vunpack.c.h.b16 %v373
    %v1794 = vunpack.c.l.b16 %v374
    %v1795 = vunpack.c.h.b16 %v374
    %v1796 = vunpack.c.l.b16 %v375
    %v1797 = vunpack.c.h.b16 %v375
    %v1798 = vunpack.c.l.b16 %v376
    %v1799 = vunpack.c.h.b16 %v376
    %v1800 = vunpack.c.l.b16 %v377
    %v1801 = vunpack.c.h.b16 %v377
    %v1802 = vunpack.c.l.b16 %v378
    %v1803 = vunpack.c.h.b16 %v378
    %v1804 = vunpack.c.l.b16 %v379
    %v1805 = vunpack.c.h.b16 %v379
    %v1806 = vunpack.c.l.b16 %v380
    %v1807 = vunpack.c.h.b16 %v380
    %v1808 = vunpack.c.l.b16 %v381
    %v1809 = vunpack.c.h.b16 %v381
    %v1810 = vunpack.c.l.b16 %v382
    %v1811 = vunpack.c.h.b16 %v382
    %v1812 = vunpack.c.l.b16 %v383
    %v1813 = vunpack.c.h.b16 %v383
    %v1814 = vunpack.c.l.b16 %v384
    %v1815 = vunpack.c.h.b16 %v384
    %v1816 = vunpack.c.l.b16 %v385
    %v1817 = vunpack.c.h.b16 %v385
    %v1818 = vunpack.c.l.b16 %v386
    %v1819 = vunpack.c.h.b16 %v386
    %v1820 = vunpack.c.l.b16 %v387
    %v1821 = vunpack.c.h.b16 %v387
    %v1822 = vunpack.c.l.b16 %v388
    %v1823 = vunpack.c.h.b16 %v388
    %v1824 = vunpack.c.l.b16 %v389
    %v1825 = vunpack.c.h.b16 %v389
    %v1826 = vunpack.c.l.b16 %v390
    %v1827 = vunpack.c.h.b16 %v390
    %v1828 = vunpack.c.l.b16 %v391
    %v1829 = vunpack.c.h.b16 %v391
    %v1830 = vunpack.c.l.b16 %v392
    %v1831 = vunpack.c.h.b16 %v392
    %v1832 = vunpack.c.l.b16 %v393
    %v1833 = vunpack.c.h.b16 %v393
    %v1834 = vunpack.c.l.b16 %v394
    %v1835 = vunpack.c.h.b16 %v394
    %v1836 = vunpack.c.l.b16 %v395
    %v1837 = vunpack.c.h.b16 %v395
    %v1838 = vunpack.c.l.b16 %v396
    %v1839 = vunpack.c.h.b16 %v396
    %v1840 = vunpack.c.l.b16 %v397
    %v1841 = vunpack.c.h.b16 %v397
    %v1842 = vunpack.c.l.b16 %v398
    %v1843 = vunpack.c.h.b16 %v398
    %v1844 = vunpack.c.l.b16 %v399
    %v1845 = vunpack.c.h.b16 %v399
    %v1846 = vunpack.c.l.b16 %v400
    %v1847 = vunpack.c.h.b16 %v400
    %v1848 = vunpack.c.l.b16 %v401
    %v1849 = vunpack.c.h.b16 %v401
    %v1850 = vunpack.c.l.b16 %v402
    %v1851 = vunpack.c.h.b16 %v402
    %v1852 = vunpack.c.l.b16 %v403
    %v1853 = vunpack.c.h.b16 %v403
    %v1854 = vunpack.c.l.b16 %v404
    %v1855 = vunpack.c.h.b16 %v404
    %v1856 = vunpack.c.l.b16 %v405
    %v1857 = vunpack.c.h.b16 %v405
    %v1858 = vunpack.c.l.b16 %v406
    %v1859 = vunpack.c.h.b16 %v406
    %v1860 = vunpack.c.l.b16 %v407
    %v1861 = vunpack.c.h.b16 %v407
    %v1862 = vunpack.c.l.b16 %v408
    %v1863 = vunpack.c.h.b16 %v408
    %v1864 = vunpack.c.l.b16 %v409
    %v1865 = vunpack.c.h.b16 %v409
    %v1866 = vunpack.c.l.b16 %v410
    %v1867 = vunpack.c.h.b16 %v410
    %v1868 = vunpack.c.l.b16 %v411
    %v1869 = vunpack.c.h.b16 %v411
    %v1870 = vunpack.c.l.b16 %v412
    %v1871 = vunpack.c.h.b16 %v412
    %v1872 = vunpack.c.l.b16 %v413
    %v1873 = vunpack.c.h.b16 %v413
    %v1874 = vunpack.c.l.b16 %v414
    %v1875 = vunpack.c.h.b16 %v414
    %v1876 = vunpack.c.l.b16 %v415
    %v1877 = vunpack.c.h.b16 %v415
    %v1878 = vunpack.c.l.b16 %v416
    %v1879 = vunpack.c.h.b16 %v416
    %v1880 = vunpack.c.l.b16 %v417
    %v1881 = vunpack.c.h.b16 %v417
    %v1882 = vunpack.c.l.b16 %v418
    %v1883 = vunpack.c.h.b16 %v418
    %v1884 = vunpack.c.l.b16 %v419
    %v1885 = vunpack.c.h.b16 %v419
    %v1886 = vunpack.c.l.b16 %v420
    %v1887 = vunpack.c.h.b16 %v420
    %v1888 = vunpack.c.l.b16 %v421
    %v1889 = vunpack.c.h.b16 %v421
    %v1890 = vunpack.c.l.b16 %v422
    %v1891 = vunpack.c.h.b16 %v422
    %v1892 = vunpack.c.l.b16 %v423
    %v1893 = vunpack.c.h.b16 %v423
    %v1894 = vunpack.c.l.b16 %v424
    %v1895 = vunpack.c.h.b16 %v424
    %v1896 = vunpack.c.l.b16 %v425
    %v1897 = vunpack.c.h.b16 %v425
    %v1898 = vunpack.c.l.b16 %v426
    %v1899 = vunpack.c.h.b16 %v426
    %v1900 = vunpack.c.l.b16 %v427
    %v1901 = vunpack.c.h.b16 %v427
    %v1902 = vunpack.c.l.b16 %v428
    %v1903 = vunpack.c.h.b16 %v428
    %v1904 = vunpack.c.l.b16 %v429
    %v1905 = vunpack.c.h.b16 %v429
    %v1906 = vunpack.c.l.b16 %v430
    %v1907 = vunpack.c.h.b16 %v430
    %v1908 = vunpack.c.l.b16 %v431
    %v1909 = vunpack.c.h.b16 %v431
    %v1910 = vunpack.c.l.b16 %v432
    %v1911 = vunpack.c.h.b16 %v432
    %v1912 = vunpack.c.l.b16 %v433
    %v1913 = vunpack.c.h.b16 %v433
    %v1914 = vunpack.c.l.b16 %v434
    %v1915 = vunpack.c.h.b16 %v434
    %v1916 = vunpack.c.l.b16 %v435
    %v1917 = vunpack.c.h.b16 %v435
    %v1918 = vunpack.c.l.b16 %v436
    %v1919 = vunpack.c.h.b16 %v436
    %v1920 = vunpack.c.l.b16 %v437
    %v1921 = vunpack.c.h.b16 %v437
    %v1922 = vunpack.c.l.b16 %v438
    %v1923 = vunpack.c.h.b16 %v438
    %v1924 = vunpack.c.l.b16 %v439
    %v1925 = vunpack.c.h.b16 %v439
    %v1926 = vunpack.c.l.b16 %v440
    %v1927 = vunpack.c.h.b16 %v440
    %v1928 = vunpack.c.l.b16 %v441
    %v1929 = vunpack.c.h.b16 %v441
    %v1930 = vunpack.c.l.b16 %v442
    %v1931 = vunpack.c.h.b16 %v442
    %v1932 = vunpack.c.l.b16 %v443
    %v1933 = vunpack.c.h.b16 %v443
    %v1934 = vunpack.c.l.b16 %v444
    %v1935 = vunpack.c.h.b16 %v444
    %v1936 = vunpack.c.l.b16 %v445
    %v1937 = vunpack.c.h.b16 %v445
    %v1938 = vunpack.c.l.b16 %v446
    %v1939 = vunpack.c.h.b16 %v446
    %v1940 = vunpack.c.l.b16 %v447
    %v1941 = vunpack.c.h.b16 %v447
    %v1942 = vunpack.c.l.b16 %v448
    %v1943 = vunpack.c.h.b16 %v448
    %v1944 = vunpack.c.l.b16 %v449
    %v1945 = vunpack.c.h.b16 %v449
    %v1946 = vunpack.c.l.b16 %v450
    %v1947 = vunpack.c.h.b16 %v450
    %v1948 = vunpack.c.l.b16 %v451
    %v1949 = vunpack.c.h.b16 %v451
    %v1950 = vunpack.c.l.b16 %v452
    %v1951 = vunpack.c.h.b16 %v452
    %v1952 = vunpack.c.l.b16 %v453
    %v1953 = vunpack.c.h.b16 %v453
    %v1954 = vunpack.c.l.b16 %v454
    %v1955 = vunpack.c.h.b16 %v454
    %v1956 = vunpack.c.l.b16 %v455
    %v1957 = vunpack.c.h.b16 %v455
    %v1958 = vunpack.c.l.b16 %v456
    %v1959 = vunpack.c.h.b16 %v456
    %v1960 = vunpack.c.l.b16 %v457
    %v1961 = vunpack.c.h.b16 %v457
    %v1962 = vunpack.c.l.b16 %v458
    %v1963 = vunpack.c.h.b16 %v458
    %v1964 = vunpack.c.l.b16 %v459
    %v1965 = vunpack.c.h.b16 %v459
    %v1966 = vunpack.c.l.b16 %v460
    %v1967 = vunpack.c.h.b16 %v460
    %v1968 = vunpack.c.l.b16 %v461
    %v1969 = vunpack.c.h.b16 %v461
    %v1970 = vunpack.c.l.b16 %v462
    %v1971 = vunpack.c.h.b16 %v462
    %v1972 = vunpack.c.l.b16 %v463
    %v1973 = vunpack.c.h.b16 %v463
    %v1974 = vunpack.c.l.b16 %v464
    %v1975 = vunpack.c.h.b16 %v464
    %v1976 = vunpack.c.l.b16 %v465
    %v1977 = vunpack.c.h.b16 %v465
    %v1978 = vunpack.c.l.b16 %v466
    %v1979 = vunpack.c.h.b16 %v466
    %v1980 = vunpack.c.l.b16 %v467
    %v1981 = vunpack.c.h.b16 %v467
    %v1982 = vunpack.c.l.b16 %v468
    %v1983 = vunpack.c.h.b16 %v468
    %v1984 = vunpack.c.l.b16 %v469
    %v1985 = vunpack.c.h.b16 %v469
    %v1986 = vunpack.c.l.b16 %v470
    %v1987 = vunpack.c.h.b16 %v470
    %v1988 = vunpack.c.l.b16 %v471
    %v1989 = vunpack.c.h.b16 %v471
    %v1990 = vunpack.c.l.b16 %v472
    %v1991 = vunpack.c.h.b16 %v472
    %v1992 = vunpack.c.l.b16 %v473
    %v1993 = vunpack.c.h.b16 %v473
    %v1994 = vunpack.c.l.b16 %v474
    %v1995 = vunpack.c.h.b16 %v474
    %v1996 = vunpack.c.l.b16 %v475
    %v1997 = vunpack.c.h.b16 %v475
    %v1998 = vunpack.c.l.b16 %v476
    %v1999 = vunpack.c.h.b16 %v476
    %v2000 = vunpack.c.l.b16 %v477
    %v2001 = vunpack.c.h.b16 %v477
    %v2002 = vunpack.c.l.b16 %v478
    %v2003 = vunpack.c.h.b16 %v478
    %v2004 = vunpack.c.l.b16 %v479
    %v2005 = vunpack.c.h.b16 %v479
    %v2006 = vunpack.c.l.b16 %v480
    %v2007 = vunpack.c.h.b16 %v480
    %v2008 = vunpack.c.l.b16 %v481
    %v2009 = vunpack.c.h.b16 %v481
    %v2010 = vunpack.c.l.b16 %v482
    %v2011 = vunpack.c.h.b16 %v482
    %v2012 = vunpack.c.l.b16 %v483
    %v2013 = vunpack.c.h.b16 %v483
    %v2014 = vunpack.c.l.b16 %v484
    %v2015 = vunpack.c.h.b16 %v484
    %v2016 = vunpack.c.l.b16 %v485
    %v2017 = vunpack.c.h.b16 %v485
    %v2018 = vunpack.c.l.b16 %v486
    %v2019 = vunpack.c.h.b16 %v486
    %v2020 = vunpack.c.l.b16 %v487
    %v2021 = vunpack.c.h.b16 %v487
    %v2022 = vunpack.c.l.b16 %v488
    %v2023 = vunpack.c.h.b16 %v488
    %v2024 = vunpack.c.l.b16 %v489
    %v2025 = vunpack.c.h.b16 %v489
    %v2026 = vunpack.c.l.b16 %v490
    %v2027 = vunpack.c.h.b16 %v490
    %v2028 = vunpack.c.l.b16 %v491
    %v2029 = vunpack.c.h.b16 %v491
    %v2030 = vunpack.c.l.b16 %v492
    %v2031 = vunpack.c.h.b16 %v492
    %v2032 = vunpack.c.l.b16 %v493
    %v2033 = vunpack.c.h.b16 %v493
    %v2034 = vunpack.c.l.b16 %v494
    %v2035 = vunpack.c.h.b16 %v494
    %v2036 = vunpack.c.l.b16 %v495
    %v2037 = vunpack.c.h.b16 %v495
    %v2038 = vunpack.c.l.b16 %v496
    %v2039 = vunpack.c.h.b16 %v496
    %v2040 = vunpack.c.l.b16 %v497
    %v2041 = vunpack.c.h.b16 %v497
    %v2042 = vunpack.c.l.b16 %v498
    %v2043 = vunpack.c.h.b16 %v498
    %v2044 = vunpack.c.l.b16 %v499
    %v2045 = vunpack.c.h.b16 %v499
    %v2046 = vunpack.c.l.b16 %v500
    %v2047 = vunpack.c.h.b16 %v500
    %v2048 = vunpack.c.l.b16 %v501
    %v2049 = vunpack.c.h.b16 %v501
    %v2050 = vunpack.c.l.b16 %v502
    %v2051 = vunpack.c.h.b16 %v502
    %v2052 = vunpack.c.l.b16 %v503
    %v2053 = vunpack.c.h.b16 %v503
    %v2054 = vunpack.c.l.b16 %v504
    %v2055 = vunpack.c.h.b16 %v504
    %v2056 = vunpack.c.l.b16 %v505
    %v2057 = vunpack.c.h.b16 %v505
    %v2058 = vunpack.c.l.b16 %v506
    %v2059 = vunpack.c.h.b16 %v506
    %v2060 = vunpack.c.l.b16 %v507
    %v2061 = vunpack.c.h.b16 %v507
    %v2062 = vunpack.c.l.b16 %v508
    %v2063 = vunpack.c.h.b16 %v508
    %v2064 = vunpack.c.l.b16 %v509
    %v2065 = vunpack.c.h.b16 %v509
    %v2066 = vunpack.c.l.b16 %v510
    %v2067 = vunpack.c.h.b16 %v510
    %v2068 = vunpack.c.l.b16 %v511
    %v2069 = vunpack.c.h.b16 %v511
    %v2070 = vunpack.c.l.b16 %v512
    %v2071 = vunpack.c.h.b16 %v512
    %v2072 = vunpack.c.l.b16 %v513
    %v2073 = vunpack.c.h.b16 %v513
    %v2074 = vunpack.c.l.b16 %v514
    %v2075 = vunpack.c.h.b16 %v514
    %v2076 = vunpack.c.l.b16 %v515
    %v2077 = vunpack.c.h.b16 %v515
    %v2078 = vunpack.c.l.b16 %v516
    %v2079 = vunpack.c.h.b16 %v516
    %v2080 = vunpack.c.l.b16 %v517
    %v2081 = vunpack.c.h.b16 %v517
    %v2082 = vunpack.c.l.b16 %v518
    %v2083 = vunpack.c.h.b16 %v518
    %v2084 = vunpack.c.l.b16 %v519
    %v2085 = vunpack.c.h.b16 %v519
    %v2086 = vunpack.c.l.b16 %v520
    %v2087 = vunpack.c.h.b16 %v520
    %v2088 = vunpack.c.l.b16 %v521
    %v2089 = vunpack.c.h.b16 %v521
    %v2090 = vunpack.c.l.b16 %v522
    %v2091 = vunpack.c.h.b16 %v522
    %v2092 = vunpack.c.l.b16 %v523
    %v2093 = vunpack.c.h.b16 %v523
    %v2094 = vunpack.c.l.b16 %v524
    %v2095 = vunpack.c.h.b16 %v524
    %v2096 = vunpack.c.l.b16 %v525
    %v2097 = vunpack.c.h.b16 %v525
    %v2098 = vunpack.c.l.b16 %v526
    %v2099 = vunpack.c.h.b16 %v526
    %v2100 = vunpack.c.l.b16 %v527
    %v2101 = vunpack.c.h.b16 %v527
    %v2102 = vunpack.c.l.b16 %v528
    %v2103 = vunpack.c.h.b16 %v528
    %v2104 = vunpack.c.l.b16 %v529
    %v2105 = vunpack.c.h.b16 %v529
    %v2106 = vunpack.c.l.b16 %v530
    %v2107 = vunpack.c.h.b16 %v530
    %v2108 = vunpack.c.l.b16 %v531
    %v2109 = vunpack.c.h.b16 %v531
    %v2110 = vunpack.c.l.b16 %v532
    %v2111 = vunpack.c.h.b16 %v532
    %v2112 = vunpack.c.l.b16 %v533
    %v2113 = vunpack.c.h.b16 %v533
    %v2114 = vunpack.c.l.b16 %v534
    %v2115 = vunpack.c.h.b16 %v534
    %v2116 = vunpack.c.l.b16 %v535
    %v2117 = vunpack.c.h.b16 %v535
    %v2118 = vunpack.c.l.b16 %v536
    %v2119 = vunpack.c.h.b16 %v536
    %v2120 = vunpack.c.l.b16 %v537
    %v2121 = vunpack.c.h.b16 %v537
    %v2122 = vunpack.c.l.b16 %v538
    %v2123 = vunpack.c.h.b16 %v538
    %v2124 = vunpack.c.l.b16 %v539
    %v2125 = vunpack.c.h.b16 %v539
    %v2126 = vunpack.c.l.b16 %v540
    %v2127 = vunpack.c.h.b16 %v540
    %v2128 = vunpack.c.l.b16 %v541
    %v2129 = vunpack.c.h.b16 %v541
    %v2130 = vunpack.c.l.b16 %v542
    %v2131 = vunpack.c.h.b16 %v542
    %v2132 = vunpack.c.l.b16 %v543
    %v2133 = vunpack.c.h.b16 %v543
    %v2134 = vunpack.c.l.b16 %v544
    %v2135 = vunpack.c.h.b16 %v544
    %v2136 = vunpack.c.l.b16 %v545
    %v2137 = vunpack.c.h.b16 %v545
    %v2138 = vunpack.c.l.b16 %v546
    %v2139 = vunpack.c.h.b16 %v546
    %v2140 = vunpack.c.l.b16 %v547
    %v2141 = vunpack.c.h.b16 %v547
    %v2142 = vunpack.c.l.b16 %v548
    %v2143 = vunpack.c.h.b16 %v548
    %v2144 = vunpack.c.l.b16 %v549
    %v2145 = vunpack.c.h.b16 %v549
    %v2146 = vunpack.c.l.b16 %v550
    %v2147 = vunpack.c.h.b16 %v550
    %v2148 = vunpack.c.l.b16 %v551
    %v2149 = vunpack.c.h.b16 %v551
    %v2150 = vunpack.c.l.b16 %v552
    %v2151 = vunpack.c.h.b16 %v552
    %v2152 = vunpack.c.l.b16 %v553
    %v2153 = vunpack.c.h.b16 %v553
    %v2154 = vunpack.c.l.b16 %v554
    %v2155 = vunpack.c.h.b16 %v554
    %v2156 = vunpack.c.l.b16 %v555
    %v2157 = vunpack.c.h.b16 %v555
    %v2158 = vunpack.c.l.b16 %v556
    %v2159 = vunpack.c.h.b16 %v556
    %v2160 = vunpack.c.l.b16 %v557
    %v2161 = vunpack.c.h.b16 %v557
    %v2162 = vunpack.c.l.b16 %v558
    %v2163 = vunpack.c.h.b16 %v558
    %v2164 = vunpack.c.l.b16 %v559
    %v2165 = vunpack.c.h.b16 %v559
    %v2166 = vunpack.c.l.b16 %v560
    %v2167 = vunpack.c.h.b16 %v560
    %v2168 = vunpack.c.l.b16 %v561
    %v2169 = vunpack.c.h.b16 %v561
    %v2170 = vunpack.c.l.b16 %v562
    %v2171 = vunpack.c.h.b16 %v562
    %v2172 = vunpack.c.l.b16 %v563
    %v2173 = vunpack.c.h.b16 %v563
    %v2174 = vunpack.c.l.b16 %v564
    %v2175 = vunpack.c.h.b16 %v564
    %v2176 = vunpack.c.l.b16 %v565
    %v2177 = vunpack.c.h.b16 %v565
    %v2178 = vunpack.c.l.b16 %v566
    %v2179 = vunpack.c.h.b16 %v566
    %v2180 = vunpack.c.l.b16 %v567
    %v2181 = vunpack.c.h.b16 %v567
    %v2182 = vunpack.c.l.b16 %v568
    %v2183 = vunpack.c.h.b16 %v568
    %v2184 = vunpack.c.l.b16 %v569
    %v2185 = vunpack.c.h.b16 %v569
    %v2186 = vpack.c.b16 %v1170, %v1162
    %v2187 = vpack.c.b16 %v1171, %v1163
    %v2188 = vpack.c.b16 %v1172, %v1164
    %v2189 = vpack.c.b16 %v1173, %v1165
    %v2190 = vpack.c.b16 %v1174, %v1166
    %v2191 = vpack.c.b16 %v1175, %v1167
    %v2192 = vpack.c.b16 %v1176, %v1168
    %v2193 = vpack.c.b16 %v1177, %v1169
    %v2194 = vpack.c.b16 %v1186, %v1178
    %v2195 = vpack.c.b16 %v1187, %v1179
    %v2196 = vpack.c.b16 %v1188, %v1180
    %v2197 = vpack.c.b16 %v1189, %v1181
    %v2198 = vpack.c.b16 %v1190, %v1182
    %v2199 = vpack.c.b16 %v1191, %v1183
    %v2200 = vpack.c.b16 %v1192, %v1184
    %v2201 = vpack.c.b16 %v1193, %v1185
    %v2202 = vpack.c.b16 %v1202, %v1194
    %v2203 = vpack.c.b16 %v1203, %v1195
    %v2204 = vpack.c.b16 %v1204, %v1196
    %v2205 = vpack.c.b16 %v1205, %v1197
    %v2206 = vpack.c.b16 %v1206, %v1198
    %v2207 = vpack.c.b16 %v1207, %v1199
    %v2208 = vpack.c.b16 %v1208, %v1200
    %v2209 = vpack.c.b16 %v1209, %v1201
    %v2210 = vpack.c.b16 %v1218, %v1210
    %v2211 = vpack.c.b16 %v1219, %v1211
    %v2212 = vpack.c.b16 %v1220, %v1212
    %v2213 = vpack.c.b16 %v1221, %v1213
    %v2214 = vpack.c.b16 %v1222, %v1214
    %v2215 = vpack.c.b16 %v1223, %v1215
    %v2216 = vpack.c.b16 %v1224, %v1216
    %v2217 = vpack.c.b16 %v1225, %v1217
    %v2218 = vpack.c.b16 %v1234, %v1226
    %v2219 = vpack.c.b16 %v1235, %v1227
    %v2220 = vpack.c.b16 %v1236, %v1228
    %v2221 = vpack.c.b16 %v1237, %v1229
    %v2222 = vpack.c.b16 %v1238, %v1230
    %v2223 = vpack.c.b16 %v1239, %v1231
    %v2224 = vpack.c.b16 %v1240, %v1232
    %v2225 = vpack.c.b16 %v1241, %v1233
    %v2226 = vpack.c.b16 %v1250, %v1242
    %v2227 = vpack.c.b16 %v1251, %v1243
    %v2228 = vpack.c.b16 %v1252, %v1244
    %v2229 = vpack.c.b16 %v1253, %v1245
    %v2230 = vpack.c.b16 %v1254, %v1246
    %v2231 = vpack.c.b16 %v1255, %v1247
    %v2232 = vpack.c.b16 %v1256, %v1248
    %v2233 = vpack.c.b16 %v1257, %v1249
    %v2234 = vpack.c.b16 %v1266, %v1258
    %v2235 = vpack.c.b16 %v1267, %v1259
    %v2236 = vpack.c.b16 %v1268, %v1260
    %v2237 = vpack.c.b16 %v1269, %v1261
    %v2238 = vpack.c.b16 %v1270, %v1262
    %v2239 = vpack.c.b16 %v1271, %v1263
    %v2240 = vpack.c.b16 %v1272, %v1264
    %v2241 = vpack.c.b16 %v1273, %v1265
    %v2242 = vpack.c.b16 %v1282, %v1274
    %v2243 = vpack.c.b16 %v1283, %v1275
    %v2244 = vpack.c.b16 %v1284, %v1276
    %v2245 = vpack.c.b16 %v1285, %v1277
    %v2246 = vpack.c.b16 %v1286, %v1278
    %v2247 = vpack.c.b16 %v1287, %v1279
    %v2248 = vpack.c.b16 %v1288, %v1280
    %v2249 = vpack.c.b16 %v1289, %v1281
    %v2250 = vpack.c.b16 %v1298, %v1290
    %v2251 = vpack.c.b16 %v1299, %v1291
    %v2252 = vpack.c.b16 %v1300, %v1292
    %v2253 = vpack.c.b16 %v1301, %v1293
    %v2254 = vpack.c.b16 %v1302, %v1294
    %v2255 = vpack.c.b16 %v1303, %v1295
    %v2256 = vpack.c.b16 %v1304, %v1296
    %v2257 = vpack.c.b16 %v1305, %v1297
    %v2258 = vpack.c.b16 %v1314, %v1306
    %v2259 = vpack.c.b16 %v1315, %v1307
    %v2260 = vpack.c.b16 %v1316, %v1308
    %v2261 = vpack.c.b16 %v1317, %v1309
    %v2262 = vpack.c.b16 %v1318, %v1310
    %v2263 = vpack.c.b16 %v1319, %v1311
    %v2264 = vpack.c.b16 %v1320, %v1312
    %v2265 = vpack.c.b16 %v1321, %v1313
    %v2266 = vpack.c.b16 %v1330, %v1322
    %v2267 = vpack.c.b16 %v1331, %v1323
    %v2268 = vpack.c.b16 %v1332, %v1324
    %v2269 = vpack.c.b16 %v1333, %v1325
    %v2270 = vpack.c.b16 %v1334, %v1326
    %v2271 = vpack.c.b16 %v1335, %v1327
    %v2272 = vpack.c.b16 %v1336, %v1328
    %v2273 = vpack.c.b16 %v1337, %v1329
    %v2274 = vpack.c.b16 %v1346, %v1338
    %v2275 = vpack.c.b16 %v1347, %v1339
    %v2276 = vpack.c.b16 %v1348, %v1340
    %v2277 = vpack.c.b16 %v1349, %v1341
    %v2278 = vpack.c.b16 %v1350, %v1342
    %v2279 = vpack.c.b16 %v1351, %v1343
    %v2280 = vpack.c.b16 %v1352, %v1344
    %v2281 = vpack.c.b16 %v1353, %v1345
    %v2282 = vpack.c.b16 %v1362, %v1354
    %v2283 = vpack.c.b16 %v1363, %v1355
    %v2284 = vpack.c.b16 %v1364, %v1356
    %v2285 = vpack.c.b16 %v1365, %v1357
    %v2286 = vpack.c.b16 %v1366, %v1358
    %v2287 = vpack.c.b16 %v1367, %v1359
    %v2288 = vpack.c.b16 %v1368, %v1360
    %v2289 = vpack.c.b16 %v1369, %v1361
    %v2290 = vpack.c.b16 %v1378, %v1370
    %v2291 = vpack.c.b16 %v1379, %v1371
    %v2292 = vpack.c.b16 %v1380, %v1372
    %v2293 = vpack.c.b16 %v1381, %v1373
    %v2294 = vpack.c.b16 %v1382, %v1374
    %v2295 = vpack.c.b16 %v1383, %v1375
    %v2296 = vpack.c.b16 %v1384, %v1376
    %v2297 = vpack.c.b16 %v1385, %v1377
    %v2298 = vpack.c.b16 %v1394, %v1386
    %v2299 = vpack.c.b16 %v1395, %v1387
    %v2300 = vpack.c.b16 %v1396, %v1388
    %v2301 = vpack.c.b16 %v1397, %v1389
    %v2302 = vpack.c.b16 %v1398, %v1390
    %v2303 = vpack.c.b16 %v1399, %v1391
    %v2304 = vpack.c.b16 %v1400, %v1392
    %v2305 = vpack.c.b16 %v1401, %v1393
    %v2306 = vpack.c.b16 %v1410, %v1402
    %v2307 = vpack.c.b16 %v1411, %v1403
    %v2308 = vpack.c.b16 %v1412, %v1404
    %v2309 = vpack.c.b16 %v1413, %v1405
    %v2310 = vpack.c.b16 %v1414, %v1406
    %v2311 = vpack.c.b16 %v1415, %v1407
    %v2312 = vpack.c.b16 %v1416, %v1408
    %v2313 = vpack.c.b16 %v1417, %v1409
    %v2314 = vpack.c.b16 %v1426, %v1418
    %v2315 = vpack.c.b16 %v1427, %v1419
    %v2316 = vpack.c.b16 %v1428, %v1420
    %v2317 = vpack.c.b16 %v1429, %v1421
    %v2318 = vpack.c.b16 %v1430, %v1422
    %v2319 = vpack.c.b16 %v1431, %v1423
    %v2320 = vpack.c.b16 %v1432, %v1424
    %v2321 = vpack.c.b16 %v1433, %v1425
    %v2322 = vpack.c.b16 %v1442, %v1434
    %v2323 = vpack.c.b16 %v1443, %v1435
    %v2324 = vpack.c.b16 %v1444, %v1436
    %v2325 = vpack.c.b16 %v1445, %v1437
    %v2326 = vpack.c.b16 %v1446, %v1438
    %v2327 = vpack.c.b16 %v1447, %v1439
    %v2328 = vpack.c.b16 %v1448, %v1440
    %v2329 = vpack.c.b16 %v1449, %v1441
    %v2330 = vpack.c.b16 %v1458, %v1450
    %v2331 = vpack.c.b16 %v1459, %v1451
    %v2332 = vpack.c.b16 %v1460, %v1452
    %v2333 = vpack.c.b16 %v1461, %v1453
    %v2334 = vpack.c.b16 %v1462, %v1454
    %v2335 = vpack.c.b16 %v1463, %v1455
    %v2336 = vpack.c.b16 %v1464, %v1456
    %v2337 = vpack.c.b16 %v1465, %v1457
    %v2338 = vpack.c.b16 %v1474, %v1466
    %v2339 = vpack.c.b16 %v1475, %v1467
    %v2340 = vpack.c.b16 %v1476, %v1468
    %v2341 = vpack.c.b16 %v1477, %v1469
    %v2342 = vpack.c.b16 %v1478, %v1470
    %v2343 = vpack.c.b16 %v1479, %v1471
    %v2344 = vpack.c.b16 %v1480, %v1472
    %v2345 = vpack.c.b16 %v1481, %v1473
    %v2346 = vpack.c.b16 %v1490, %v1482
    %v2347 = vpack.c.b16 %v1491, %v1483
    %v2348 = vpack.c.b16 %v1492, %v1484
    %v2349 = vpack.c.b16 %v1493, %v1485
    %v2350 = vpack.c.b16 %v1494, %v1486
    %v2351 = vpack.c.b16 %v1495, %v1487
    %v2352 = vpack.c.b16 %v1496, %v1488
    %v2353 = vpack.c.b16 %v1497, %v1489
    %v2354 = vpack.c.b16 %v1506, %v1498
    %v2355 = vpack.c.b16 %v1507, %v1499
    %v2356 = vpack.c.b16 %v1508, %v1500
    %v2357 = vpack.c.b16 %v1509, %v1501
    %v2358 = vpack.c.b16 %v1510, %v1502
    %v2359 = vpack.c.b16 %v1511, %v1503
    %v2360 = vpack.c.b16 %v1512, %v1504
    %v2361 = vpack.c.b16 %v1513, %v1505
    %v2362 = vpack.c.b16 %v1522, %v1514
    %v2363 = vpack.c.b16 %v1523, %v1515
    %v2364 = vpack.c.b16 %v1524, %v1516
    %v2365 = vpack.c.b16 %v1525, %v1517
    %v2366 = vpack.c.b16 %v1526, %v1518
    %v2367 = vpack.c.b16 %v1527, %v1519
    %v2368 = vpack.c.b16 %v1528, %v1520
    %v2369 = vpack.c.b16 %v1529, %v1521
    %v2370 = vpack.c.b16 %v1538, %v1530
    %v2371 = vpack.c.b16 %v1539, %v1531
    %v2372 = vpack.c.b16 %v1540, %v1532
    %v2373 = vpack.c.b16 %v1541, %v1533
    %v2374 = vpack.c.b16 %v1542, %v1534
    %v2375 = vpack.c.b16 %v1543, %v1535
    %v2376 = vpack.c.b16 %v1544, %v1536
    %v2377 = vpack.c.b16 %v1545, %v1537
    %v2378 = vpack.c.b16 %v1554, %v1546
    %v2379 = vpack.c.b16 %v1555, %v1547
    %v2380 = vpack.c.b16 %v1556, %v1548
    %v2381 = vpack.c.b16 %v1557, %v1549
    %v2382 = vpack.c.b16 %v1558, %v1550
    %v2383 = vpack.c.b16 %v1559, %v1551
    %v2384 = vpack.c.b16 %v1560, %v1552
    %v2385 = vpack.c.b16 %v1561, %v1553
    %v2386 = vpack.c.b16 %v1570, %v1562
    %v2387 = vpack.c.b16 %v1571, %v1563
    %v2388 = vpack.c.b16 %v1572, %v1564
    %v2389 = vpack.c.b16 %v1573, %v1565
    %v2390 = vpack.c.b16 %v1574, %v1566
    %v2391 = vpack.c.b16 %v1575, %v1567
    %v2392 = vpack.c.b16 %v1576, %v1568
    %v2393 = vpack.c.b16 %v1577, %v1569
    %v2394 = vpack.c.b16 %v1586, %v1578
    %v2395 = vpack.c.b16 %v1587, %v1579
    %v2396 = vpack.c.b16 %v1588, %v1580
    %v2397 = vpack.c.b16 %v1589, %v1581
    %v2398 = vpack.c.b16 %v1590, %v1582
    %v2399 = vpack.c.b16 %v1591, %v1583
    %v2400 = vpack.c.b16 %v1592, %v1584
    %v2401 = vpack.c.b16 %v1593, %v1585
    %v2402 = vpack.c.b16 %v1602, %v1594
    %v2403 = vpack.c.b16 %v1603, %v1595
    %v2404 = vpack.c.b16 %v1604, %v1596
    %v2405 = vpack.c.b16 %v1605, %v1597
    %v2406 = vpack.c.b16 %v1606, %v1598
    %v2407 = vpack.c.b16 %v1607, %v1599
    %v2408 = vpack.c.b16 %v1608, %v1600
    %v2409 = vpack.c.b16 %v1609, %v1601
    %v2410 = vpack.c.b16 %v1618, %v1610
    %v2411 = vpack.c.b16 %v1619, %v1611
    %v2412 = vpack.c.b16 %v1620, %v1612
    %v2413 = vpack.c.b16 %v1621, %v1613
    %v2414 = vpack.c.b16 %v1622, %v1614
    %v2415 = vpack.c.b16 %v1623, %v1615
    %v2416 = vpack.c.b16 %v1624, %v1616
    %v2417 = vpack.c.b16 %v1625, %v1617
    %v2418 = vpack.c.b16 %v1634, %v1626
    %v2419 = vpack.c.b16 %v1635, %v1627
    %v2420 = vpack.c.b16 %v1636, %v1628
    %v2421 = vpack.c.b16 %v1637, %v1629
    %v2422 = vpack.c.b16 %v1638, %v1630
    %v2423 = vpack.c.b16 %v1639, %v1631
    %v2424 = vpack.c.b16 %v1640, %v1632
    %v2425 = vpack.c.b16 %v1641, %v1633
    %v2426 = vpack.c.b16 %v1650, %v1642
    %v2427 = vpack.c.b16 %v1651, %v1643
    %v2428 = vpack.c.b16 %v1652, %v1644
    %v2429 = vpack.c.b16 %v1653, %v1645
    %v2430 = vpack.c.b16 %v1654, %v1646
    %v2431 = vpack.c.b16 %v1655, %v1647
    %v2432 = vpack.c.b16 %v1656, %v1648
    %v2433 = vpack.c.b16 %v1657, %v1649
    %v2434 = vpack.c.b16 %v1666, %v1658
    %v2435 = vpack.c.b16 %v1667, %v1659
    %v2436 = vpack.c.b16 %v1668, %v1660
    %v2437 = vpack.c.b16 %v1669, %v1661
    %v2438 = vpack.c.b16 %v1670, %v1662
    %v2439 = vpack.c.b16 %v1671, %v1663
    %v2440 = vpack.c.b16 %v1672, %v1664
    %v2441 = vpack.c.b16 %v1673, %v1665
    %v2442 = vpack.c.b16 %v1682, %v1674
    %v2443 = vpack.c.b16 %v1683, %v1675
    %v2444 = vpack.c.b16 %v1684, %v1676
    %v2445 = vpack.c.b16 %v1685, %v1677
    %v2446 = vpack.c.b16 %v1686, %v1678
    %v2447 = vpack.c.b16 %v1687, %v1679
    %v2448 = vpack.c.b16 %v1688, %v1680
    %v2449 = vpack.c.b16 %v1689, %v1681
    %v2450 = vpack.c.b16 %v1698, %v1690
    %v2451 = vpack.c.b16 %v1699, %v1691
    %v2452 = vpack.c.b16 %v1700, %v1692
    %v2453 = vpack.c.b16 %v1701, %v1693
    %v2454 = vpack.c.b16 %v1702, %v1694
    %v2455 = vpack.c.b16 %v1703, %v1695
    %v2456 = vpack.c.b16 %v1704, %v1696
    %v2457 = vpack.c.b16 %v1705, %v1697
    %v2458 = vpack.c.b16 %v1714, %v1706
    %v2459 = vpack.c.b16 %v1715, %v1707
    %v2460 = vpack.c.b16 %v1716, %v1708
    %v2461 = vpack.c.b16 %v1717, %v1709
    %v2462 = vpack.c.b16 %v1718, %v1710
    %v2463 = vpack.c.b16 %v1719, %v1711
    %v2464 = vpack.c.b16 %v1720, %v1712
    %v2465 = vpack.c.b16 %v1721, %v1713
    %v2466 = vpack.c.b16 %v1730, %v1722
    %v2467 = vpack.c.b16 %v1731, %v1723
    %v2468 = vpack.c.b16 %v1732, %v1724
    %v2469 = vpack.c.b16 %v1733, %v1725
    %v2470 = vpack.c.b16 %v1734, %v1726
    %v2471 = vpack.c.b16 %v1735, %v1727
    %v2472 = vpack.c.b16 %v1736, %v1728
    %v2473 = vpack.c.b16 %v1737, %v1729
    %v2474 = vpack.c.b16 %v1746, %v1738
    %v2475 = vpack.c.b16 %v1747, %v1739
    %v2476 = vpack.c.b16 %v1748, %v1740
    %v2477 = vpack.c.b16 %v1749, %v1741
    %v2478 = vpack.c.b16 %v1750, %v1742
    %v2479 = vpack.c.b16 %v1751, %v1743
    %v2480 = vpack.c.b16 %v1752, %v1744
    %v2481 = vpack.c.b16 %v1753, %v1745
    %v2482 = vpack.c.b16 %v1762, %v1754
    %v2483 = vpack.c.b16 %v1763, %v1755
    %v2484 = vpack.c.b16 %v1764, %v1756
    %v2485 = vpack.c.b16 %v1765, %v1757
    %v2486 = vpack.c.b16 %v1766, %v1758
    %v2487 = vpack.c.b16 %v1767, %v1759
    %v2488 = vpack.c.b16 %v1768, %v1760
    %v2489 = vpack.c.b16 %v1769, %v1761
    %v2490 = vpack.c.b16 %v1778, %v1770
    %v2491 = vpack.c.b16 %v1779, %v1771
    %v2492 = vpack.c.b16 %v1780, %v1772
    %v2493 = vpack.c.b16 %v1781, %v1773
    %v2494 = vpack.c.b16 %v1782, %v1774
    %v2495 = vpack.c.b16 %v1783, %v1775
    %v2496 = vpack.c.b16 %v1784, %v1776
    %v2497 = vpack.c.b16 %v1785, %v1777
    %v2498 = vpack.c.b16 %v1794, %v1786
    %v2499 = vpack.c.b16 %v1795, %v1787
    %v2500 = vpack.c.b16 %v1796, %v1788
    %v2501 = vpack.c.b16 %v1797, %v1789
    %v2502 = vpack.c.b16 %v1798, %v1790
    %v2503 = vpack.c.b16 %v1799, %v1791
    %v2504 = vpack.c.b16 %v1800, %v1792
    %v2505 = vpack.c.b16 %v1801, %v1793
    %v2506 = vpack.c.b16 %v1810, %v1802
    %v2507 = vpack.c.b16 %v1811, %v1803
    %v2508 = vpack.c.b16 %v1812, %v1804
    %v2509 = vpack.c.b16 %v1813, %v1805
    %v2510 = vpack.c.b16 %v1814, %v1806
    %v2511 = vpack.c.b16 %v1815, %v1807
    %v2512 = vpack.c.b16 %v1816, %v1808
    %v2513 = vpack.c.b16 %v1817, %v1809
    %v2514 = vpack.c.b16 %v1826, %v1818
    %v2515 = vpack.c.b16 %v1827, %v1819
    %v2516 = vpack.c.b16 %v1828, %v1820
    %v2517 = vpack.c.b16 %v1829, %v1821
    %v2518 = vpack.c.b16 %v1830, %v1822
    %v2519 = vpack.c.b16 %v1831, %v1823
    %v2520 = vpack.c.b16 %v1832, %v1824
    %v2521 = vpack.c.b16 %v1833, %v1825
    %v2522 = vpack.c.b16 %v1842, %v1834
    %v2523 = vpack.c.b16 %v1843, %v1835
    %v2524 = vpack.c.b16 %v1844, %v1836
    %v2525 = vpack.c.b16 %v1845, %v1837
    %v2526 = vpack.c.b16 %v1846, %v1838
    %v2527 = vpack.c.b16 %v1847, %v1839
    %v2528 = vpack.c.b16 %v1848, %v1840
    %v2529 = vpack.c.b16 %v1849, %v1841
    %v2530 = vpack.c.b16 %v1858, %v1850
    %v2531 = vpack.c.b16 %v1859, %v1851
    %v2532 = vpack.c.b16 %v1860, %v1852
    %v2533 = vpack.c.b16 %v1861, %v1853
    %v2534 = vpack.c.b16 %v1862, %v1854
    %v2535 = vpack.c.b16 %v1863, %v1855
    %v2536 = vpack.c.b16 %v1864, %v1856
    %v2537 = vpack.c.b16 %v1865, %v1857
    %v2538 = vpack.c.b16 %v1874, %v1866
    %v2539 = vpack.c.b16 %v1875, %v1867
    %v2540 = vpack.c.b16 %v1876, %v1868
    %v2541 = vpack.c.b16 %v1877, %v1869
    %v2542 = vpack.c.b16 %v1878, %v1870
    %v2543 = vpack.c.b16 %v1879, %v1871
    %v2544 = vpack.c.b16 %v1880, %v1872
    %v2545 = vpack.c.b16 %v1881, %v1873
    %v2546 = vpack.c.b16 %v1890, %v1882
    %v2547 = vpack.c.b16 %v1891, %v1883
    %v2548 = vpack.c.b16 %v1892, %v1884
    %v2549 = vpack.c.b16 %v1893, %v1885
    %v2550 = vpack.c.b16 %v1894, %v1886
    %v2551 = vpack.c.b16 %v1895, %v1887
    %v2552 = vpack.c.b16 %v1896, %v1888
    %v2553 = vpack.c.b16 %v1897, %v1889
    %v2554 = vpack.c.b16 %v1906, %v1898
    %v2555 = vpack.c.b16 %v1907, %v1899
    %v2556 = vpack.c.b16 %v1908, %v1900
    %v2557 = vpack.c.b16 %v1909, %v1901
    %v2558 = vpack.c.b16 %v1910, %v1902
    %v2559 = vpack.c.b16 %v1911, %v1903
    %v2560 = vpack.c.b16 %v1912, %v1904
    %v2561 = vpack.c.b16 %v1913, %v1905
    %v2562 = vpack.c.b16 %v1922, %v1914
    %v2563 = vpack.c.b16 %v1923, %v1915
    %v2564 = vpack.c.b16 %v1924, %v1916
    %v2565 = vpack.c.b16 %v1925, %v1917
    %v2566 = vpack.c.b16 %v1926, %v1918
    %v2567 = vpack.c.b16 %v1927, %v1919
    %v2568 = vpack.c.b16 %v1928, %v1920
    %v2569 = vpack.c.b16 %v1929, %v1921
    %v2570 = vpack.c.b16 %v1938, %v1930
    %v2571 = vpack.c.b16 %v1939, %v1931
    %v2572 = vpack.c.b16 %v1940, %v1932
    %v2573 = vpack.c.b16 %v1941, %v1933
    %v2574 = vpack.c.b16 %v1942, %v1934
    %v2575 = vpack.c.b16 %v1943, %v1935
    %v2576 = vpack.c.b16 %v1944, %v1936
    %v2577 = vpack.c.b16 %v1945, %v1937
    %v2578 = vpack.c.b16 %v1954, %v1946
    %v2579 = vpack.c.b16 %v1955, %v1947
    %v2580 = vpack.c.b16 %v1956, %v1948
    %v2581 = vpack.c.b16 %v1957, %v1949
    %v2582 = vpack.c.b16 %v1958, %v1950
    %v2583 = vpack.c.b16 %v1959, %v1951
    %v2584 = vpack.c.b16 %v1960, %v1952
    %v2585 = vpack.c.b16 %v1961, %v1953
    %v2586 = vpack.c.b16 %v1970, %v1962
    %v2587 = vpack.c.b16 %v1971, %v1963
    %v2588 = vpack.c.b16 %v1972, %v1964
    %v2589 = vpack.c.b16 %v1973, %v1965
    %v2590 = vpack.c.b16 %v1974, %v1966
    %v2591 = vpack.c.b16 %v1975, %v1967
    %v2592 = vpack.c.b16 %v1976, %v1968
    %v2593 = vpack.c.b16 %v1977, %v1969
    %v2594 = vpack.c.b16 %v1986, %v1978
    %v2595 = vpack.c.b16 %v1987, %v1979
    %v2596 = vpack.c.b16 %v1988, %v1980
    %v2597 = vpack.c.b16 %v1989, %v1981
    %v2598 = vpack.c.b16 %v1990, %v1982
    %v2599 = vpack.c.b16 %v1991, %v1983
    %v2600 = vpack.c.b16 %v1992, %v1984
    %v2601 = vpack.c.b16 %v1993, %v1985
    %v2602 = vpack.c.b16 %v2002, %v1994
    %v2603 = vpack.c.b16 %v2003, %v1995
    %v2604 = vpack.c.b16 %v2004, %v1996
    %v2605 = vpack.c.b16 %v2005, %v1997
    %v2606 = vpack.c.b16 %v2006, %v1998
    %v2607 = vpack.c.b16 %v2007, %v1999
    %v2608 = vpack.c.b16 %v2008, %v2000
    %v2609 = vpack.c.b16 %v2009, %v2001
    %v2610 = vpack.c.b16 %v2018, %v2010
    %v2611 = vpack.c.b16 %v2019, %v2011
    %v2612 = vpack.c.b16 %v2020, %v2012
    %v2613 = vpack.c.b16 %v2021, %v2013
    %v2614 = vpack.c.b16 %v2022, %v2014
    %v2615 = vpack.c.b16 %v2023, %v2015
    %v2616 = vpack.c.b16 %v2024, %v2016
    %v2617 = vpack.c.b16 %v2025, %v2017
    %v2618 = vpack.c.b16 %v2034, %v2026
    %v2619 = vpack.c.b16 %v2035, %v2027
    %v2620 = vpack.c.b16 %v2036, %v2028
    %v2621 = vpack.c.b16 %v2037, %v2029
    %v2622 = vpack.c.b16 %v2038, %v2030
    %v2623 = vpack.c.b16 %v2039, %v2031
    %v2624 = vpack.c.b16 %v2040, %v2032
    %v2625 = vpack.c.b16 %v2041, %v2033
    %v2626 = vpack.c.b16 %v2050, %v2042
    %v2627 = vpack.c.b16 %v2051, %v2043
    %v2628 = vpack.c.b16 %v2052, %v2044
    %v2629 = vpack.c.b16 %v2053, %v2045
    %v2630 = vpack.c.b16 %v2054, %v2046
    %v2631 = vpack.c.b16 %v2055, %v2047
    %v2632 = vpack.c.b16 %v2056, %v2048
    %v2633 = vpack.c.b16 %v2057, %v2049
    %v2634 = vpack.c.b16 %v2066, %v2058
    %v2635 = vpack.c.b16 %v2067, %v2059
    %v2636 = vpack.c.b16 %v2068, %v2060
    %v2637 = vpack.c.b16 %v2069, %v2061
    %v2638 = vpack.c.b16 %v2070, %v2062
    %v2639 = vpack.c.b16 %v2071, %v2063
    %v2640 = vpack.c.b16 %v2072, %v2064
    %v2641 = vpack.c.b16 %v2073, %v2065
    %v2642 = vpack.c.b16 %v2082, %v2074
    %v2643 = vpack.c.b16 %v2083, %v2075
    %v2644 = vpack.c.b16 %v2084, %v2076
    %v2645 = vpack.c.b16 %v2085, %v2077
    %v2646 = vpack.c.b16 %v2086, %v2078
    %v2647 = vpack.c.b16 %v2087, %v2079
    %v2648 = vpack.c.b16 %v2088, %v2080
    %v2649 = vpack.c.b16 %v2089, %v2081
    %v2650 = vpack.c.b16 %v2098, %v2090
    %v2651 = vpack.c.b16 %v2099, %v2091
    %v2652 = vpack.c.b16 %v2100, %v2092
    %v2653 = vpack.c.b16 %v2101, %v2093
    %v2654 = vpack.c.b16 %v2102, %v2094
    %v2655 = vpack.c.b16 %v2103, %v2095
    %v2656 = vpack.c.b16 %v2104, %v2096
    %v2657 = vpack.c.b16 %v2105, %v2097
    %v2658 = vpack.c.b16 %v2114, %v2106
    %v2659 = vpack.c.b16 %v2115, %v2107
    %v2660 = vpack.c.b16 %v2116, %v2108
    %v2661 = vpack.c.b16 %v2117, %v2109
    %v2662 = vpack.c.b16 %v2118, %v2110
    %v2663 = vpack.c.b16 %v2119, %v2111
    %v2664 = vpack.c.b16 %v2120, %v2112
    %v2665 = vpack.c.b16 %v2121, %v2113
    %v2666 = vpack.c.b16 %v2130, %v2122
    %v2667 = vpack.c.b16 %v2131, %v2123
    %v2668 = vpack.c.b16 %v2132, %v2124
    %v2669 = vpack.c.b16 %v2133, %v2125
    %v2670 = vpack.c.b16 %v2134, %v2126
    %v2671 = vpack.c.b16 %v2135, %v2127
    %v2672 = vpack.c.b16 %v2136, %v2128
    %v2673 = vpack.c.b16 %v2137, %v2129
    %v2674 = vpack.c.b16 %v2146, %v2138
    %v2675 = vpack.c.b16 %v2147, %v2139
    %v2676 = vpack.c.b16 %v2148, %v2140
    %v2677 = vpack.c.b16 %v2149, %v2141
    %v2678 = vpack.c.b16 %v2150, %v2142
    %v2679 = vpack.c.b16 %v2151, %v2143
    %v2680 = vpack.c.b16 %v2152, %v2144
    %v2681 = vpack.c.b16 %v2153, %v2145
    %v2682 = vpack.c.b16 %v2162, %v2154
    %v2683 = vpack.c.b16 %v2163, %v2155
    %v2684 = vpack.c.b16 %v2164, %v2156
    %v2685 = vpack.c.b16 %v2165, %v2157
    %v2686 = vpack.c.b16 %v2166, %v2158
    %v2687 = vpack.c.b16 %v2167, %v2159
    %v2688 = vpack.c.b16 %v2168, %v2160
    %v2689 = vpack.c.b16 %v2169, %v2161
    %v2690 = vpack.c.b16 %v2178, %v2170
    %v2691 = vpack.c.b16 %v2179, %v2171
    %v2692 = vpack.c.b16 %v2180, %v2172
    %v2693 = vpack.c.b16 %v2181, %v2173
    %v2694 = vpack.c.b16 %v2182, %v2174
    %v2695 = vpack.c.b16 %v2183, %v2175
    %v2696 = vpack.c.b16 %v2184, %v2176
    %v2697 = vpack.c.b16 %v2185, %v2177
    %3210 = vmatprep.subr.bf16.mxu0 %v2187
    %3211 = vmatpush1.bf16.msra.mxu0 %v2186
    %3212 = vmatprep.subr.bf16.mxu0 %v2195
    %3213 = vmatpush1.bf16.msra.mxu0 %v2194
    %3214 = vmatprep.subr.bf16.mxu0 %v2203
    %3215 = vmatpush1.bf16.msra.mxu0 %v2202
    %3216 = vmatprep.subr.bf16.mxu0 %v2211
    %3217 = vmatpush1.bf16.msra.mxu0 %v2210
    %3218 = vmatprep.subr.bf16.mxu0 %v2219
    %3219 = vmatpush1.bf16.msra.mxu0 %v2218
    %3220 = vmatprep.subr.bf16.mxu0 %v2227
    %3221 = vmatpush1.bf16.msra.mxu0 %v2226
    %3222 = vmatprep.subr.bf16.mxu0 %v2235
    %3223 = vmatpush1.bf16.msra.mxu0 %v2234
    %3224 = vmatprep.subr.bf16.mxu0 %v2243
    %3225 = vmatpush1.bf16.msra.mxu0 %v2242
    %3226 = vmatprep.subr.bf16.mxu0 %v2251
    %3227 = vmatpush1.bf16.msra.mxu0 %v2250
    %3228 = vmatprep.subr.bf16.mxu0 %v2259
    %3229 = vmatpush1.bf16.msra.mxu0 %v2258
    %3230 = vmatprep.subr.bf16.mxu0 %v2267
    %3231 = vmatpush1.bf16.msra.mxu0 %v2266
    %3232 = vmatprep.subr.bf16.mxu0 %v2275
    %3233 = vmatpush1.bf16.msra.mxu0 %v2274
    %3234 = vmatprep.subr.bf16.mxu0 %v2283
    %3235 = vmatpush1.bf16.msra.mxu0 %v2282
    %3236 = vmatprep.subr.bf16.mxu0 %v2291
    %3237 = vmatpush1.bf16.msra.mxu0 %v2290
    %3238 = vmatprep.subr.bf16.mxu0 %v2299
    %3239 = vmatpush1.bf16.msra.mxu0 %v2298
    %3240 = vmatprep.subr.bf16.mxu0 %v2307
    %3241 = vmatpush1.bf16.msra.mxu0 %v2306
    %3242 = vmatprep.mubr.bf16.mxu0 %v619
    %3243 = vmatmul.mubr.bf16.gmra.mrb[0].mxu0 %v618
    %v3244 = vpop.f32.mrb[0].mxu0
    %v3245 = vadd.f32 0.0, %v3244
    %v3246 = vpop.f32.mrb[0].mxu0
    %v3247 = vadd.f32 0.0, %v3246
    %v3248 = vpop.f32.mrb[0].mxu0
    %v3249 = vadd.f32 0.0, %v3248
    %v3250 = vpop.f32.mrb[0].mxu0
    %v3251 = vadd.f32 0.0, %v3250
    %3252 = vmatprep.mubr.bf16.mxu0 %v627
    %3253 = vmatmul.mubr.bf16.gmra.mrb[0].mxu0 %v626
    %v3254 = vpop.f32.mrb[0].mxu0
    %v3255 = vadd.f32 0.0, %v3254
    %v3256 = vpop.f32.mrb[0].mxu0
    %v3257 = vadd.f32 0.0, %v3256
    %v3258 = vpop.f32.mrb[0].mxu0
    %v3259 = vadd.f32 0.0, %v3258
    %v3260 = vpop.f32.mrb[0].mxu0
    %v3261 = vadd.f32 0.0, %v3260
    %3262 = vdwg.mxu0
    %3263 = vmatprep.subr.bf16.mxu0 %v2315
    %3264 = vmatpush1.bf16.msra.mxu0 %v2314
    %3265 = vmatprep.subr.bf16.mxu0 %v2323
    %3266 = vmatpush1.bf16.msra.mxu0 %v2322
    %3267 = vmatprep.subr.bf16.mxu0 %v2331
    %3268 = vmatpush1.bf16.msra.mxu0 %v2330
    %3269 = vmatprep.subr.bf16.mxu0 %v2339
    %3270 = vmatpush1.bf16.msra.mxu0 %v2338
    %3271 = vmatprep.subr.bf16.mxu0 %v2347
    %3272 = vmatpush1.bf16.msra.mxu0 %v2346
    %3273 = vmatprep.subr.bf16.mxu0 %v2355
    %3274 = vmatpush1.bf16.msra.mxu0 %v2354
    %3275 = vmatprep.subr.bf16.mxu0 %v2363
    %3276 = vmatpush1.bf16.msra.mxu0 %v2362
    %3277 = vmatprep.subr.bf16.mxu0 %v2371
    %3278 = vmatpush1.bf16.msra.mxu0 %v2370
    %3279 = vmatprep.subr.bf16.mxu0 %v2379
    %3280 = vmatpush1.bf16.msra.mxu0 %v2378
    %3281 = vmatprep.subr.bf16.mxu0 %v2387
    %3282 = vmatpush1.bf16.msra.mxu0 %v2386
    %3283 = vmatprep.subr.bf16.mxu0 %v2395
    %3284 = vmatpush1.bf16.msra.mxu0 %v2394
    %3285 = vmatprep.subr.bf16.mxu0 %v2403
    %3286 = vmatpush1.bf16.msra.mxu0 %v2402
    %3287 = vmatprep.subr.bf16.mxu0 %v2411
    %3288 = vmatpush1.bf16.msra.mxu0 %v2410
    %3289 = vmatprep.subr.bf16.mxu0 %v2419
    %3290 = vmatpush1.bf16.msra.mxu0 %v2418
    %3291 = vmatprep.subr.bf16.mxu0 %v2427
    %3292 = vmatpush1.bf16.msra.mxu0 %v2426
    %3293 = vmatprep.subr.bf16.mxu0 %v2435
    %3294 = vmatpush1.bf16.msra.mxu0 %v2434
    %3295 = vmatprep.mubr.bf16.mxu0 %v621
    %3296 = vmatmul.mubr.bf16.gmra.mrb[0].mxu0 %v620
    %v3297 = vpop.f32.mrb[0].mxu0
    %v3298 = vadd.f32 %v3245, %v3297
    %v3299 = vpop.f32.mrb[0].mxu0
    %v3300 = vadd.f32 %v3247, %v3299
    %v3301 = vpop.f32.mrb[0].mxu0
    %v3302 = vadd.f32 %v3249, %v3301
    %v3303 = vpop.f32.mrb[0].mxu0
    %v3304 = vadd.f32 %v3251, %v3303
    %3305 = vmatprep.mubr.bf16.mxu0 %v629
    %3306 = vmatmul.mubr.bf16.gmra.mrb[0].mxu0 %v628
    %v3307 = vpop.f32.mrb[0].mxu0
    %v3308 = vadd.f32 %v3255, %v3307
    %v3309 = vpop.f32.mrb[0].mxu0
    %v3310 = vadd.f32 %v3257, %v3309
    %v3311 = vpop.f32.mrb[0].mxu0
    %v3312 = vadd.f32 %v3259, %v3311
    %v3313 = vpop.f32.mrb[0].mxu0
    %v3314 = vadd.f32 %v3261, %v3313
    %3315 = vdwg.mxu0
    %3316 = vmatprep.subr.bf16.mxu0 %v2443
    %3317 = vmatpush1.bf16.msra.mxu0 %v2442
    %3318 = vmatprep.subr.bf16.mxu0 %v2451
    %3319 = vmatpush1.bf16.msra.mxu0 %v2450
    %3320 = vmatprep.subr.bf16.mxu0 %v2459
    %3321 = vmatpush1.bf16.msra.mxu0 %v2458
    %3322 = vmatprep.subr.bf16.mxu0 %v2467
    %3323 = vmatpush1.bf16.msra.mxu0 %v2466
    %3324 = vmatprep.subr.bf16.mxu0 %v2475
    %3325 = vmatpush1.bf16.msra.mxu0 %v2474
    %3326 = vmatprep.subr.bf16.mxu0 %v2483
    %3327 = vmatpush1.bf16.msra.mxu0 %v2482
    %3328 = vmatprep.subr.bf16.mxu0 %v2491
    %3329 = vmatpush1.bf16.msra.mxu0 %v2490
    %3330 = vmatprep.subr.bf16.mxu0 %v2499
    %3331 = vmatpush1.bf16.msra.mxu0 %v2498
    %3332 = vmatprep.subr.bf16.mxu0 %v2507
    %3333 = vmatpush1.bf16.msra.mxu0 %v2506
    %3334 = vmatprep.subr.bf16.mxu0 %v2515
    %3335 = vmatpush1.bf16.msra.mxu0 %v2514
    %3336 = vmatprep.subr.bf16.mxu0 %v2523
    %3337 = vmatpush1.bf16.msra.mxu0 %v2522
    %3338 = vmatprep.subr.bf16.mxu0 %v2531
    %3339 = vmatpush1.bf16.msra.mxu0 %v2530
    %3340 = vmatprep.subr.bf16.mxu0 %v2539
    %3341 = vmatpush1.bf16.msra.mxu0 %v2538
    %3342 = vmatprep.subr.bf16.mxu0 %v2547
    %3343 = vmatpush1.bf16.msra.mxu0 %v2546
    %3344 = vmatprep.subr.bf16.mxu0 %v2555
    %3345 = vmatpush1.bf16.msra.mxu0 %v2554
    %3346 = vmatprep.subr.bf16.mxu0 %v2563
    %3347 = vmatpush1.bf16.msra.mxu0 %v2562
    %3348 = vmatprep.mubr.bf16.mxu0 %v623
    %3349 = vmatmul.mubr.bf16.gmra.mrb[0].mxu0 %v622
    %v3350 = vpop.f32.mrb[0].mxu0
    %v3351 = vadd.f32 %v3298, %v3350
    %v3352 = vpop.f32.mrb[0].mxu0
    %v3353 = vadd.f32 %v3300, %v3352
    %v3354 = vpop.f32.mrb[0].mxu0
    %v3355 = vadd.f32 %v3302, %v3354
    %v3356 = vpop.f32.mrb[0].mxu0
    %v3357 = vadd.f32 %v3304, %v3356
    %3358 = vmatprep.mubr.bf16.mxu0 %v631
    %3359 = vmatmul.mubr.bf16.gmra.mrb[0].mxu0 %v630
    %v3360 = vpop.f32.mrb[0].mxu0
    %v3361 = vadd.f32 %v3308, %v3360
    %v3362 = vpop.f32.mrb[0].mxu0
    %v3363 = vadd.f32 %v3310, %v3362
    %v3364 = vpop.f32.mrb[0].mxu0
    %v3365 = vadd.f32 %v3312, %v3364
    %v3366 = vpop.f32.mrb[0].mxu0
    %v3367 = vadd.f32 %v3314, %v3366
    %3368 = vdwg.mxu0
    %3369 = vmatprep.subr.bf16.mxu0 %v2571
    %3370 = vmatpush1.bf16.msra.mxu0 %v2570
    %3371 = vmatprep.subr.bf16.mxu0 %v2579
    %3372 = vmatpush1.bf16.msra.mxu0 %v2578
    %3373 = vmatprep.subr.bf16.mxu0 %v2587
    %3374 = vmatpush1.bf16.msra.mxu0 %v2586
    %3375 = vmatprep.subr.bf16.mxu0 %v2595
    %3376 = vmatpush1.bf16.msra.mxu0 %v2594
    %3377 = vmatprep.subr.bf16.mxu0 %v2603
    %3378 = vmatpush1.bf16.msra.mxu0 %v2602
    %3379 = vmatprep.subr.bf16.mxu0 %v2611
    %3380 = vmatpush1.bf16.msra.mxu0 %v2610
    %3381 = vmatprep.subr.bf16.mxu0 %v2619
    %3382 = vmatpush1.bf16.msra.mxu0 %v2618
    %3383 = vmatprep.subr.bf16.mxu0 %v2627
    %3384 = vmatpush1.bf16.msra.mxu0 %v2626
    %3385 = vmatprep.subr.bf16.mxu0 %v2635
    %3386 = vmatpush1.bf16.msra.mxu0 %v2634
    %3387 = vmatprep.subr.bf16.mxu0 %v2643
    %3388 = vmatpush1.bf16.msra.mxu0 %v2642
    %3389 = vmatprep.subr.bf16.mxu0 %v2651
    %3390 = vmatpush1.bf16.msra.mxu0 %v2650
    %3391 = vmatprep.subr.bf16.mxu0 %v2659
    %3392 = vmatpush1.bf16.msra.mxu0 %v2658
    %3393 = vmatprep.subr.bf16.mxu0 %v2667
    %3394 = vmatpush1.bf16.msra.mxu0 %v2666
    %3395 = vmatprep.subr.bf16.mxu0 %v2675
    %3396 = vmatpush1.bf16.msra.mxu0 %v2674
    %3397 = vmatprep.subr.bf16.mxu0 %v2683
    %3398 = vmatpush1.bf16.msra.mxu0 %v2682
    %3399 = vmatprep.subr.bf16.mxu0 %v2691
    %3400 = vmatpush1.bf16.msra.mxu0 %v2690
    %3401 = vmatprep.mubr.bf16.mxu0 %v625
    %3402 = vmatmul.mubr.bf16.gmra.mrb[0].mxu0 %v624
    %v3403 = vpop.f32.mrb[0].mxu0
    %v3404 = vadd.f32 %v3351, %v3403
    %v3405 = vpop.f32.mrb[0].mxu0
    %v3406 = vadd.f32 %v3353, %v3405
    %v3407 = vpop.f32.mrb[0].mxu0
    %v3408 = vadd.f32 %v3355, %v3407
    %v3409 = vpop.f32.mrb[0].mxu0
    %v3410 = vadd.f32 %v3357, %v3409
    %3411 = vmatprep.mubr.bf16.mxu0 %v633
    %3412 = vmatmul.mubr.bf16.gmra.mrb[0].mxu0 %v632
    %v3413 = vpop.f32.mrb[0].mxu0
    %v3414 = vadd.f32 %v3361, %v3413
    %v3415 = vpop.f32.mrb[0].mxu0
    %v3416 = vadd.f32 %v3363, %v3415
    %v3417 = vpop.f32.mrb[0].mxu0
    %v3418 = vadd.f32 %v3365, %v3417
    %v3419 = vpop.f32.mrb[0].mxu0
    %v3420 = vadd.f32 %v3367, %v3419
    %3421 = vdwg.mxu0
    %3422 = vmatprep.subr.bf16.mxu0 %v2189
    %3423 = vmatpush1.bf16.msra.mxu0 %v2188
    %3424 = vmatprep.subr.bf16.mxu0 %v2197
    %3425 = vmatpush1.bf16.msra.mxu0 %v2196
    %3426 = vmatprep.subr.bf16.mxu0 %v2205
    %3427 = vmatpush1.bf16.msra.mxu0 %v2204
    %3428 = vmatprep.subr.bf16.mxu0 %v2213
    %3429 = vmatpush1.bf16.msra.mxu0 %v2212
    %3430 = vmatprep.subr.bf16.mxu0 %v2221
    %3431 = vmatpush1.bf16.msra.mxu0 %v2220
    %3432 = vmatprep.subr.bf16.mxu0 %v2229
    %3433 = vmatpush1.bf16.msra.mxu0 %v2228
    %3434 = vmatprep.subr.bf16.mxu0 %v2237
    %3435 = vmatpush1.bf16.msra.mxu0 %v2236
    %3436 = vmatprep.subr.bf16.mxu0 %v2245
    %3437 = vmatpush1.bf16.msra.mxu0 %v2244
    %3438 = vmatprep.subr.bf16.mxu0 %v2253
    %3439 = vmatpush1.bf16.msra.mxu0 %v2252
    %3440 = vmatprep.subr.bf16.mxu0 %v2261
    %3441 = vmatpush1.bf16.msra.mxu0 %v2260
    %3442 = vmatprep.subr.bf16.mxu0 %v2269
    %3443 = vmatpush1.bf16.msra.mxu0 %v2268
    %3444 = vmatprep.subr.bf16.mxu0 %v2277
    %3445 = vmatpush1.bf16.msra.mxu0 %v2276
    %3446 = vmatprep.subr.bf16.mxu0 %v2285
    %3447 = vmatpush1.bf16.msra.mxu0 %v2284
    %3448 = vmatprep.subr.bf16.mxu0 %v2293
    %3449 = vmatpush1.bf16.msra.mxu0 %v2292
    %3450 = vmatprep.subr.bf16.mxu0 %v2301
    %3451 = vmatpush1.bf16.msra.mxu0 %v2300
    %3452 = vmatprep.subr.bf16.mxu0 %v2309
    %3453 = vmatpush1.bf16.msra.mxu0 %v2308
    %3454 = vmatprep.mubr.bf16.mxu0 %v619
    %3455 = vmatmul.mubr.bf16.gmra.mrb[0].mxu0 %v618
    %v3456 = vpop.f32.mrb[0].mxu0
    %v3457 = vadd.f32 0.0, %v3456
    %v3458 = vpop.f32.mrb[0].mxu0
    %v3459 = vadd.f32 0.0, %v3458
    %v3460 = vpop.f32.mrb[0].mxu0
    %v3461 = vadd.f32 0.0, %v3460
    %v3462 = vpop.f32.mrb[0].mxu0
    %v3463 = vadd.f32 0.0, %v3462
    %3464 = vmatprep.mubr.bf16.mxu0 %v627
    %3465 = vmatmul.mubr.bf16.gmra.mrb[0].mxu0 %v626
    %v3466 = vpop.f32.mrb[0].mxu0
    %v3467 = vadd.f32 0.0, %v3466
    %v3468 = vpop.f32.mrb[0].mxu0
    %v3469 = vadd.f32 0.0, %v3468
    %v3470 = vpop.f32.mrb[0].mxu0
    %v3471 = vadd.f32 0.0, %v3470
    %v3472 = vpop.f32.mrb[0].mxu0
    %v3473 = vadd.f32 0.0, %v3472
    %3474 = vdwg.mxu0
    %3475 = vmatprep.subr.bf16.mxu0 %v2317
    %3476 = vmatpush1.bf16.msra.mxu0 %v2316
    %3477 = vmatprep.subr.bf16.mxu0 %v2325
    %3478 = vmatpush1.bf16.msra.mxu0 %v2324
    %3479 = vmatprep.subr.bf16.mxu0 %v2333
    %3480 = vmatpush1.bf16.msra.mxu0 %v2332
    %3481 = vmatprep.subr.bf16.mxu0 %v2341
    %3482 = vmatpush1.bf16.msra.mxu0 %v2340
    %3483 = vmatprep.subr.bf16.mxu0 %v2349
    %3484 = vmatpush1.bf16.msra.mxu0 %v2348
    %3485 = vmatprep.subr.bf16.mxu0 %v2357
    %3486 = vmatpush1.bf16.msra.mxu0 %v2356
    %3487 = vmatprep.subr.bf16.mxu0 %v2365
    %3488 = vmatpush1.bf16.msra.mxu0 %v2364
    %3489 = vmatprep.subr.bf16.mxu0 %v2373
    %3490 = vmatpush1.bf16.msra.mxu0 %v2372
    %3491 = vmatprep.subr.bf16.mxu0 %v2381
    %3492 = vmatpush1.bf16.msra.mxu0 %v2380
    %3493 = vmatprep.subr.bf16.mxu0 %v2389
    %3494 = vmatpush1.bf16.msra.mxu0 %v2388
    %3495 = vmatprep.subr.bf16.mxu0 %v2397
    %3496 = vmatpush1.bf16.msra.mxu0 %v2396
    %3497 = vmatprep.subr.bf16.mxu0 %v2405
    %3498 = vmatpush1.bf16.msra.mxu0 %v2404
    %3499 = vmatprep.subr.bf16.mxu0 %v2413
    %3500 = vmatpush1.bf16.msra.mxu0 %v2412
    %3501 = vmatprep.subr.bf16.mxu0 %v2421
    %3502 = vmatpush1.bf16.msra.mxu0 %v2420
    %3503 = vmatprep.subr.bf16.mxu0 %v2429
    %3504 = vmatpush1.bf16.msra.mxu0 %v2428
    %3505 = vmatprep.subr.bf16.mxu0 %v2437
    %3506 = vmatpush1.bf16.msra.mxu0 %v2436
    %3507 = vmatprep.mubr.bf16.mxu0 %v621
    %3508 = vmatmul.mubr.bf16.gmra.mrb[0].mxu0 %v620
    %v3509 = vpop.f32.mrb[0].mxu0
    %v3510 = vadd.f32 %v3457, %v3509
    %v3511 = vpop.f32.mrb[0].mxu0
    %v3512 = vadd.f32 %v3459, %v3511
    %v3513 = vpop.f32.mrb[0].mxu0
    %v3514 = vadd.f32 %v3461, %v3513
    %v3515 = vpop.f32.mrb[0].mxu0
    %v3516 = vadd.f32 %v3463, %v3515
    %3517 = vmatprep.mubr.bf16.mxu0 %v629
    %3518 = vmatmul.mubr.bf16.gmra.mrb[0].mxu0 %v628
    %v3519 = vpop.f32.mrb[0].mxu0
    %v3520 = vadd.f32 %v3467, %v3519
    %v3521 = vpop.f32.mrb[0].mxu0
    %v3522 = vadd.f32 %v3469, %v3521
    %v3523 = vpop.f32.mrb[0].mxu0
    %v3524 = vadd.f32 %v3471, %v3523
    %v3525 = vpop.f32.mrb[0].mxu0
    %v3526 = vadd.f32 %v3473, %v3525
    %3527 = vdwg.mxu0
    %3528 = vmatprep.subr.bf16.mxu0 %v2445
    %3529 = vmatpush1.bf16.msra.mxu0 %v2444
    %3530 = vmatprep.subr.bf16.mxu0 %v2453
    %3531 = vmatpush1.bf16.msra.mxu0 %v2452
    %3532 = vmatprep.subr.bf16.mxu0 %v2461
    %3533 = vmatpush1.bf16.msra.mxu0 %v2460
    %3534 = vmatprep.subr.bf16.mxu0 %v2469
    %3535 = vmatpush1.bf16.msra.mxu0 %v2468
    %3536 = vmatprep.subr.bf16.mxu0 %v2477
    %3537 = vmatpush1.bf16.msra.mxu0 %v2476
    %3538 = vmatprep.subr.bf16.mxu0 %v2485
    %3539 = vmatpush1.bf16.msra.mxu0 %v2484
    %3540 = vmatprep.subr.bf16.mxu0 %v2493
    %3541 = vmatpush1.bf16.msra.mxu0 %v2492
    %3542 = vmatprep.subr.bf16.mxu0 %v2501
    %3543 = vmatpush1.bf16.msra.mxu0 %v2500
    %3544 = vmatprep.subr.bf16.mxu0 %v2509
    %3545 = vmatpush1.bf16.msra.mxu0 %v2508
    %3546 = vmatprep.subr.bf16.mxu0 %v2517
    %3547 = vmatpush1.bf16.msra.mxu0 %v2516
    %3548 = vmatprep.subr.bf16.mxu0 %v2525
    %3549 = vmatpush1.bf16.msra.mxu0 %v2524
    %3550 = vmatprep.subr.bf16.mxu0 %v2533
    %3551 = vmatpush1.bf16.msra.mxu0 %v2532
    %3552 = vmatprep.subr.bf16.mxu0 %v2541
    %3553 = vmatpush1.bf16.msra.mxu0 %v2540
    %3554 = vmatprep.subr.bf16.mxu0 %v2549
    %3555 = vmatpush1.bf16.msra.mxu0 %v2548
    %3556 = vmatprep.subr.bf16.mxu0 %v2557
    %3557 = vmatpush1.bf16.msra.mxu0 %v2556
    %3558 = vmatprep.subr.bf16.mxu0 %v2565
    %3559 = vmatpush1.bf16.msra.mxu0 %v2564
    %3560 = vmatprep.mubr.bf16.mxu0 %v623
    %3561 = vmatmul.mubr.bf16.gmra.mrb[0].mxu0 %v622
    %v3562 = vpop.f32.mrb[0].mxu0
    %v3563 = vadd.f32 %v3510, %v3562
    %v3564 = vpop.f32.mrb[0].mxu0
    %v3565 = vadd.f32 %v3512, %v3564
    %v3566 = vpop.f32.mrb[0].mxu0
    %v3567 = vadd.f32 %v3514, %v3566
    %v3568 = vpop.f32.mrb[0].mxu0
    %v3569 = vadd.f32 %v3516, %v3568
    %3570 = vmatprep.mubr.bf16.mxu0 %v631
    %3571 = vmatmul.mubr.bf16.gmra.mrb[0].mxu0 %v630
    %v3572 = vpop.f32.mrb[0].mxu0
    %v3573 = vadd.f32 %v3520, %v3572
    %v3574 = vpop.f32.mrb[0].mxu0
    %v3575 = vadd.f32 %v3522, %v3574
    %v3576 = vpop.f32.mrb[0].mxu0
    %v3577 = vadd.f32 %v3524, %v3576
    %v3578 = vpop.f32.mrb[0].mxu0
    %v3579 = vadd.f32 %v3526, %v3578
    %3580 = vdwg.mxu0
    %3581 = vmatprep.subr.bf16.mxu0 %v2573
    %3582 = vmatpush1.bf16.msra.mxu0 %v2572
    %3583 = vmatprep.subr.bf16.mxu0 %v2581
    %3584 = vmatpush1.bf16.msra.mxu0 %v2580
    %3585 = vmatprep.subr.bf16.mxu0 %v2589
    %3586 = vmatpush1.bf16.msra.mxu0 %v2588
    %3587 = vmatprep.subr.bf16.mxu0 %v2597
    %3588 = vmatpush1.bf16.msra.mxu0 %v2596
    %3589 = vmatprep.subr.bf16.mxu0 %v2605
    %3590 = vmatpush1.bf16.msra.mxu0 %v2604
    %3591 = vmatprep.subr.bf16.mxu0 %v2613
    %3592 = vmatpush1.bf16.msra.mxu0 %v2612
    %3593 = vmatprep.subr.bf16.mxu0 %v2621
    %3594 = vmatpush1.bf16.msra.mxu0 %v2620
    %3595 = vmatprep.subr.bf16.mxu0 %v2629
    %3596 = vmatpush1.bf16.msra.mxu0 %v2628
    %3597 = vmatprep.subr.bf16.mxu0 %v2637
    %3598 = vmatpush1.bf16.msra.mxu0 %v2636
    %3599 = vmatprep.subr.bf16.mxu0 %v2645
    %3600 = vmatpush1.bf16.msra.mxu0 %v2644
    %3601 = vmatprep.subr.bf16.mxu0 %v2653
    %3602 = vmatpush1.bf16.msra.mxu0 %v2652
    %3603 = vmatprep.subr.bf16.mxu0 %v2661
    %3604 = vmatpush1.bf16.msra.mxu0 %v2660
    %3605 = vmatprep.subr.bf16.mxu0 %v2669
    %3606 = vmatpush1.bf16.msra.mxu0 %v2668
    %3607 = vmatprep.subr.bf16.mxu0 %v2677
    %3608 = vmatpush1.bf16.msra.mxu0 %v2676
    %3609 = vmatprep.subr.bf16.mxu0 %v2685
    %3610 = vmatpush1.bf16.msra.mxu0 %v2684
    %3611 = vmatprep.subr.bf16.mxu0 %v2693
    %3612 = vmatpush1.bf16.msra.mxu0 %v2692
    %3613 = vmatprep.mubr.bf16.mxu0 %v625
    %3614 = vmatmul.mubr.bf16.gmra.mrb[0].mxu0 %v624
    %v3615 = vpop.f32.mrb[0].mxu0
    %v3616 = vadd.f32 %v3563, %v3615
    %v3617 = vpop.f32.mrb[0].mxu0
    %v3618 = vadd.f32 %v3565, %v3617
    %v3619 = vpop.f32.mrb[0].mxu0
    %v3620 = vadd.f32 %v3567, %v3619
    %v3621 = vpop.f32.mrb[0].mxu0
    %v3622 = vadd.f32 %v3569, %v3621
    %3623 = vmatprep.mubr.bf16.mxu0 %v633
    %3624 = vmatmul.mubr.bf16.gmra.mrb[0].mxu0 %v632
    %v3625 = vpop.f32.mrb[0].mxu0
    %v3626 = vadd.f32 %v3573, %v3625
    %v3627 = vpop.f32.mrb[0].mxu0
    %v3628 = vadd.f32 %v3575, %v3627
    %v3629 = vpop.f32.mrb[0].mxu0
    %v3630 = vadd.f32 %v3577, %v3629
    %v3631 = vpop.f32.mrb[0].mxu0
    %v3632 = vadd.f32 %v3579, %v3631
    %3633 = vdwg.mxu0
    %3634 = vmatprep.subr.bf16.mxu0 %v2191
    %3635 = vmatpush1.bf16.msra.mxu0 %v2190
    %3636 = vmatprep.subr.bf16.mxu0 %v2199
    %3637 = vmatpush1.bf16.msra.mxu0 %v2198
    %3638 = vmatprep.subr.bf16.mxu0 %v2207
    %3639 = vmatpush1.bf16.msra.mxu0 %v2206
    %3640 = vmatprep.subr.bf16.mxu0 %v2215
    %3641 = vmatpush1.bf16.msra.mxu0 %v2214
    %3642 = vmatprep.subr.bf16.mxu0 %v2223
    %3643 = vmatpush1.bf16.msra.mxu0 %v2222
    %3644 = vmatprep.subr.bf16.mxu0 %v2231
    %3645 = vmatpush1.bf16.msra.mxu0 %v2230
    %3646 = vmatprep.subr.bf16.mxu0 %v2239
    %3647 = vmatpush1.bf16.msra.mxu0 %v2238
    %3648 = vmatprep.subr.bf16.mxu0 %v2247
    %3649 = vmatpush1.bf16.msra.mxu0 %v2246
    %3650 = vmatprep.subr.bf16.mxu0 %v2255
    %3651 = vmatpush1.bf16.msra.mxu0 %v2254
    %3652 = vmatprep.subr.bf16.mxu0 %v2263
    %3653 = vmatpush1.bf16.msra.mxu0 %v2262
    %3654 = vmatprep.subr.bf16.mxu0 %v2271
    %3655 = vmatpush1.bf16.msra.mxu0 %v2270
    %3656 = vmatprep.subr.bf16.mxu0 %v2279
    %3657 = vmatpush1.bf16.msra.mxu0 %v2278
    %3658 = vmatprep.subr.bf16.mxu0 %v2287
    %3659 = vmatpush1.bf16.msra.mxu0 %v2286
    %3660 = vmatprep.subr.bf16.mxu0 %v2295
    %3661 = vmatpush1.bf16.msra.mxu0 %v2294
    %3662 = vmatprep.subr.bf16.mxu0 %v2303
    %3663 = vmatpush1.bf16.msra.mxu0 %v2302
    %3664 = vmatprep.subr.bf16.mxu0 %v2311
    %3665 = vmatpush1.bf16.msra.mxu0 %v2310
    %3666 = vmatprep.mubr.bf16.mxu0 %v619
    %3667 = vmatmul.mubr.bf16.gmra.mrb[0].mxu0 %v618
    %v3668 = vpop.f32.mrb[0].mxu0
    %v3669 = vadd.f32 0.0, %v3668
    %v3670 = vpop.f32.mrb[0].mxu0
    %v3671 = vadd.f32 0.0, %v3670
    %v3672 = vpop.f32.mrb[0].mxu0
    %v3673 = vadd.f32 0.0, %v3672
    %v3674 = vpop.f32.mrb[0].mxu0
    %v3675 = vadd.f32 0.0, %v3674
    %3676 = vmatprep.mubr.bf16.mxu0 %v627
    %3677 = vmatmul.mubr.bf16.gmra.mrb[0].mxu0 %v626
    %v3678 = vpop.f32.mrb[0].mxu0
    %v3679 = vadd.f32 0.0, %v3678
    %v3680 = vpop.f32.mrb[0].mxu0
    %v3681 = vadd.f32 0.0, %v3680
    %v3682 = vpop.f32.mrb[0].mxu0
    %v3683 = vadd.f32 0.0, %v3682
    %v3684 = vpop.f32.mrb[0].mxu0
    %v3685 = vadd.f32 0.0, %v3684
    %3686 = vdwg.mxu0
    %3687 = vmatprep.subr.bf16.mxu0 %v2319
    %3688 = vmatpush1.bf16.msra.mxu0 %v2318
    %3689 = vmatprep.subr.bf16.mxu0 %v2327
    %3690 = vmatpush1.bf16.msra.mxu0 %v2326
    %3691 = vmatprep.subr.bf16.mxu0 %v2335
    %3692 = vmatpush1.bf16.msra.mxu0 %v2334
    %3693 = vmatprep.subr.bf16.mxu0 %v2343
    %3694 = vmatpush1.bf16.msra.mxu0 %v2342
    %3695 = vmatprep.subr.bf16.mxu0 %v2351
    %3696 = vmatpush1.bf16.msra.mxu0 %v2350
    %3697 = vmatprep.subr.bf16.mxu0 %v2359
    %3698 = vmatpush1.bf16.msra.mxu0 %v2358
    %3699 = vmatprep.subr.bf16.mxu0 %v2367
    %3700 = vmatpush1.bf16.msra.mxu0 %v2366
    %3701 = vmatprep.subr.bf16.mxu0 %v2375
    %3702 = vmatpush1.bf16.msra.mxu0 %v2374
    %3703 = vmatprep.subr.bf16.mxu0 %v2383
    %3704 = vmatpush1.bf16.msra.mxu0 %v2382
    %3705 = vmatprep.subr.bf16.mxu0 %v2391
    %3706 = vmatpush1.bf16.msra.mxu0 %v2390
    %3707 = vmatprep.subr.bf16.mxu0 %v2399
    %3708 = vmatpush1.bf16.msra.mxu0 %v2398
    %3709 = vmatprep.subr.bf16.mxu0 %v2407
    %3710 = vmatpush1.bf16.msra.mxu0 %v2406
    %3711 = vmatprep.subr.bf16.mxu0 %v2415
    %3712 = vmatpush1.bf16.msra.mxu0 %v2414
    %3713 = vmatprep.subr.bf16.mxu0 %v2423
    %3714 = vmatpush1.bf16.msra.mxu0 %v2422
    %3715 = vmatprep.subr.bf16.mxu0 %v2431
    %3716 = vmatpush1.bf16.msra.mxu0 %v2430
    %3717 = vmatprep.subr.bf16.mxu0 %v2439
    %3718 = vmatpush1.bf16.msra.mxu0 %v2438
    %3719 = vmatprep.mubr.bf16.mxu0 %v621
    %3720 = vmatmul.mubr.bf16.gmra.mrb[0].mxu0 %v620
    %v3721 = vpop.f32.mrb[0].mxu0
    %v3722 = vadd.f32 %v3669, %v3721
    %v3723 = vpop.f32.mrb[0].mxu0
    %v3724 = vadd.f32 %v3671, %v3723
    %v3725 = vpop.f32.mrb[0].mxu0
    %v3726 = vadd.f32 %v3673, %v3725
    %v3727 = vpop.f32.mrb[0].mxu0
    %v3728 = vadd.f32 %v3675, %v3727
    %3729 = vmatprep.mubr.bf16.mxu0 %v629
    %3730 = vmatmul.mubr.bf16.gmra.mrb[0].mxu0 %v628
    %v3731 = vpop.f32.mrb[0].mxu0
    %v3732 = vadd.f32 %v3679, %v3731
    %v3733 = vpop.f32.mrb[0].mxu0
    %v3734 = vadd.f32 %v3681, %v3733
    %v3735 = vpop.f32.mrb[0].mxu0
    %v3736 = vadd.f32 %v3683, %v3735
    %v3737 = vpop.f32.mrb[0].mxu0
    %v3738 = vadd.f32 %v3685, %v3737
    %3739 = vdwg.mxu0
    %3740 = vmatprep.subr.bf16.mxu0 %v2447
    %3741 = vmatpush1.bf16.msra.mxu0 %v2446
    %3742 = vmatprep.subr.bf16.mxu0 %v2455
    %3743 = vmatpush1.bf16.msra.mxu0 %v2454
    %3744 = vmatprep.subr.bf16.mxu0 %v2463
    %3745 = vmatpush1.bf16.msra.mxu0 %v2462
    %3746 = vmatprep.subr.bf16.mxu0 %v2471
    %3747 = vmatpush1.bf16.msra.mxu0 %v2470
    %3748 = vmatprep.subr.bf16.mxu0 %v2479
    %3749 = vmatpush1.bf16.msra.mxu0 %v2478
    %3750 = vmatprep.subr.bf16.mxu0 %v2487
    %3751 = vmatpush1.bf16.msra.mxu0 %v2486
    %3752 = vmatprep.subr.bf16.mxu0 %v2495
    %3753 = vmatpush1.bf16.msra.mxu0 %v2494
    %3754 = vmatprep.subr.bf16.mxu0 %v2503
    %3755 = vmatpush1.bf16.msra.mxu0 %v2502
    %3756 = vmatprep.subr.bf16.mxu0 %v2511
    %3757 = vmatpush1.bf16.msra.mxu0 %v2510
    %3758 = vmatprep.subr.bf16.mxu0 %v2519
    %3759 = vmatpush1.bf16.msra.mxu0 %v2518
    %3760 = vmatprep.subr.bf16.mxu0 %v2527
    %3761 = vmatpush1.bf16.msra.mxu0 %v2526
    %3762 = vmatprep.subr.bf16.mxu0 %v2535
    %3763 = vmatpush1.bf16.msra.mxu0 %v2534
    %3764 = vmatprep.subr.bf16.mxu0 %v2543
    %3765 = vmatpush1.bf16.msra.mxu0 %v2542
    %3766 = vmatprep.subr.bf16.mxu0 %v2551
    %3767 = vmatpush1.bf16.msra.mxu0 %v2550
    %3768 = vmatprep.subr.bf16.mxu0 %v2559
    %3769 = vmatpush1.bf16.msra.mxu0 %v2558
    %3770 = vmatprep.subr.bf16.mxu0 %v2567
    %3771 = vmatpush1.bf16.msra.mxu0 %v2566
    %3772 = vmatprep.mubr.bf16.mxu0 %v623
    %3773 = vmatmul.mubr.bf16.gmra.mrb[0].mxu0 %v622
    %v3774 = vpop.f32.mrb[0].mxu0
    %v3775 = vadd.f32 %v3722, %v3774
    %v3776 = vpop.f32.mrb[0].mxu0
    %v3777 = vadd.f32 %v3724, %v3776
    %v3778 = vpop.f32.mrb[0].mxu0
    %v3779 = vadd.f32 %v3726, %v3778
    %v3780 = vpop.f32.mrb[0].mxu0
    %v3781 = vadd.f32 %v3728, %v3780
    %3782 = vmatprep.mubr.bf16.mxu0 %v631
    %3783 = vmatmul.mubr.bf16.gmra.mrb[0].mxu0 %v630
    %v3784 = vpop.f32.mrb[0].mxu0
    %v3785 = vadd.f32 %v3732, %v3784
    %v3786 = vpop.f32.mrb[0].mxu0
    %v3787 = vadd.f32 %v3734, %v3786
    %v3788 = vpop.f32.mrb[0].mxu0
    %v3789 = vadd.f32 %v3736, %v3788
    %v3790 = vpop.f32.mrb[0].mxu0
    %v3791 = vadd.f32 %v3738, %v3790
    %3792 = vdwg.mxu0
    %3793 = vmatprep.subr.bf16.mxu0 %v2575
    %3794 = vmatpush1.bf16.msra.mxu0 %v2574
    %3795 = vmatprep.subr.bf16.mxu0 %v2583
    %3796 = vmatpush1.bf16.msra.mxu0 %v2582
    %3797 = vmatprep.subr.bf16.mxu0 %v2591
    %3798 = vmatpush1.bf16.msra.mxu0 %v2590
    %3799 = vmatprep.subr.bf16.mxu0 %v2599
    %3800 = vmatpush1.bf16.msra.mxu0 %v2598
    %3801 = vmatprep.subr.bf16.mxu0 %v2607
    %3802 = vmatpush1.bf16.msra.mxu0 %v2606
    %3803 = vmatprep.subr.bf16.mxu0 %v2615
    %3804 = vmatpush1.bf16.msra.mxu0 %v2614
    %3805 = vmatprep.subr.bf16.mxu0 %v2623
    %3806 = vmatpush1.bf16.msra.mxu0 %v2622
    %3807 = vmatprep.subr.bf16.mxu0 %v2631
    %3808 = vmatpush1.bf16.msra.mxu0 %v2630
    %3809 = vmatprep.subr.bf16.mxu0 %v2639
    %3810 = vmatpush1.bf16.msra.mxu0 %v2638
    %3811 = vmatprep.subr.bf16.mxu0 %v2647
    %3812 = vmatpush1.bf16.msra.mxu0 %v2646
    %3813 = vmatprep.subr.bf16.mxu0 %v2655
    %3814 = vmatpush1.bf16.msra.mxu0 %v2654
    %3815 = vmatprep.subr.bf16.mxu0 %v2663
    %3816 = vmatpush1.bf16.msra.mxu0 %v2662
    %3817 = vmatprep.subr.bf16.mxu0 %v2671
    %3818 = vmatpush1.bf16.msra.mxu0 %v2670
    %3819 = vmatprep.subr.bf16.mxu0 %v2679
    %3820 = vmatpush1.bf16.msra.mxu0 %v2678
    %3821 = vmatprep.subr.bf16.mxu0 %v2687
    %3822 = vmatpush1.bf16.msra.mxu0 %v2686
    %3823 = vmatprep.subr.bf16.mxu0 %v2695
    %3824 = vmatpush1.bf16.msra.mxu0 %v2694
    %3825 = vmatprep.mubr.bf16.mxu0 %v625
    %3826 = vmatmul.mubr.bf16.gmra.mrb[0].mxu0 %v624
    %v3827 = vpop.f32.mrb[0].mxu0
    %v3828 = vadd.f32 %v3775, %v3827
    %v3829 = vpop.f32.mrb[0].mxu0
    %v3830 = vadd.f32 %v3777, %v3829
    %v3831 = vpop.f32.mrb[0].mxu0
    %v3832 = vadd.f32 %v3779, %v3831
    %v3833 = vpop.f32.mrb[0].mxu0
    %v3834 = vadd.f32 %v3781, %v3833
    %3835 = vmatprep.mubr.bf16.mxu0 %v633
    %3836 = vmatmul.mubr.bf16.gmra.mrb[0].mxu0 %v632
    %v3837 = vpop.f32.mrb[0].mxu0
    %v3838 = vadd.f32 %v3785, %v3837
    %v3839 = vpop.f32.mrb[0].mxu0
    %v3840 = vadd.f32 %v3787, %v3839
    %v3841 = vpop.f32.mrb[0].mxu0
    %v3842 = vadd.f32 %v3789, %v3841
    %v3843 = vpop.f32.mrb[0].mxu0
    %v3844 = vadd.f32 %v3791, %v3843
    %3845 = vdwg.mxu0
    %3846 = vmatprep.subr.bf16.mxu0 %v2193
    %3847 = vmatpush1.bf16.msra.mxu0 %v2192
    %3848 = vmatprep.subr.bf16.mxu0 %v2201
    %3849 = vmatpush1.bf16.msra.mxu0 %v2200
    %3850 = vmatprep.subr.bf16.mxu0 %v2209
    %3851 = vmatpush1.bf16.msra.mxu0 %v2208
    %3852 = vmatprep.subr.bf16.mxu0 %v2217
    %3853 = vmatpush1.bf16.msra.mxu0 %v2216
    %3854 = vmatprep.subr.bf16.mxu0 %v2225
    %3855 = vmatpush1.bf16.msra.mxu0 %v2224
    %3856 = vmatprep.subr.bf16.mxu0 %v2233
    %3857 = vmatpush1.bf16.msra.mxu0 %v2232
    %3858 = vmatprep.subr.bf16.mxu0 %v2241
    %3859 = vmatpush1.bf16.msra.mxu0 %v2240
    %3860 = vmatprep.subr.bf16.mxu0 %v2249
    %3861 = vmatpush1.bf16.msra.mxu0 %v2248
    %3862 = vmatprep.subr.bf16.mxu0 %v2257
    %3863 = vmatpush1.bf16.msra.mxu0 %v2256
    %3864 = vmatprep.subr.bf16.mxu0 %v2265
    %3865 = vmatpush1.bf16.msra.mxu0 %v2264
    %3866 = vmatprep.subr.bf16.mxu0 %v2273
    %3867 = vmatpush1.bf16.msra.mxu0 %v2272
    %3868 = vmatprep.subr.bf16.mxu0 %v2281
    %3869 = vmatpush1.bf16.msra.mxu0 %v2280
    %3870 = vmatprep.subr.bf16.mxu0 %v2289
    %3871 = vmatpush1.bf16.msra.mxu0 %v2288
    %3872 = vmatprep.subr.bf16.mxu0 %v2297
    %3873 = vmatpush1.bf16.msra.mxu0 %v2296
    %3874 = vmatprep.subr.bf16.mxu0 %v2305
    %3875 = vmatpush1.bf16.msra.mxu0 %v2304
    %3876 = vmatprep.subr.bf16.mxu0 %v2313
    %3877 = vmatpush1.bf16.msra.mxu0 %v2312
    %3878 = vmatprep.mubr.bf16.mxu0 %v619
    %3879 = vmatmul.mubr.bf16.gmra.mrb[0].mxu0 %v618
    %v3880 = vpop.f32.mrb[0].mxu0
    %v3881 = vadd.f32 0.0, %v3880
    %v3882 = vpop.f32.mrb[0].mxu0
    %v3883 = vadd.f32 0.0, %v3882
    %v3884 = vpop.f32.mrb[0].mxu0
    %v3885 = vadd.f32 0.0, %v3884
    %v3886 = vpop.f32.mrb[0].mxu0
    %v3887 = vadd.f32 0.0, %v3886
    %3888 = vmatprep.mubr.bf16.mxu0 %v627
    %3889 = vmatmul.mubr.bf16.gmra.mrb[0].mxu0 %v626
    %v3890 = vpop.f32.mrb[0].mxu0
    %v3891 = vadd.f32 0.0, %v3890
    %v3892 = vpop.f32.mrb[0].mxu0
    %v3893 = vadd.f32 0.0, %v3892
    %v3894 = vpop.f32.mrb[0].mxu0
    %v3895 = vadd.f32 0.0, %v3894
    %v3896 = vpop.f32.mrb[0].mxu0
    %v3897 = vadd.f32 0.0, %v3896
    %3898 = vdwg.mxu0
    %3899 = vmatprep.subr.bf16.mxu0 %v2321
    %3900 = vmatpush1.bf16.msra.mxu0 %v2320
    %3901 = vmatprep.subr.bf16.mxu0 %v2329
    %3902 = vmatpush1.bf16.msra.mxu0 %v2328
    %3903 = vmatprep.subr.bf16.mxu0 %v2337
    %3904 = vmatpush1.bf16.msra.mxu0 %v2336
    %3905 = vmatprep.subr.bf16.mxu0 %v2345
    %3906 = vmatpush1.bf16.msra.mxu0 %v2344
    %3907 = vmatprep.subr.bf16.mxu0 %v2353
    %3908 = vmatpush1.bf16.msra.mxu0 %v2352
    %3909 = vmatprep.subr.bf16.mxu0 %v2361
    %3910 = vmatpush1.bf16.msra.mxu0 %v2360
    %3911 = vmatprep.subr.bf16.mxu0 %v2369
    %3912 = vmatpush1.bf16.msra.mxu0 %v2368
    %3913 = vmatprep.subr.bf16.mxu0 %v2377
    %3914 = vmatpush1.bf16.msra.mxu0 %v2376
    %3915 = vmatprep.subr.bf16.mxu0 %v2385
    %3916 = vmatpush1.bf16.msra.mxu0 %v2384
    %3917 = vmatprep.subr.bf16.mxu0 %v2393
    %3918 = vmatpush1.bf16.msra.mxu0 %v2392
    %3919 = vmatprep.subr.bf16.mxu0 %v2401
    %3920 = vmatpush1.bf16.msra.mxu0 %v2400
    %3921 = vmatprep.subr.bf16.mxu0 %v2409
    %3922 = vmatpush1.bf16.msra.mxu0 %v2408
    %3923 = vmatprep.subr.bf16.mxu0 %v2417
    %3924 = vmatpush1.bf16.msra.mxu0 %v2416
    %3925 = vmatprep.subr.bf16.mxu0 %v2425
    %3926 = vmatpush1.bf16.msra.mxu0 %v2424
    %3927 = vmatprep.subr.bf16.mxu0 %v2433
    %3928 = vmatpush1.bf16.msra.mxu0 %v2432
    %3929 = vmatprep.subr.bf16.mxu0 %v2441
    %3930 = vmatpush1.bf16.msra.mxu0 %v2440
    %3931 = vmatprep.mubr.bf16.mxu0 %v621
    %3932 = vmatmul.mubr.bf16.gmra.mrb[0].mxu0 %v620
    %v3933 = vpop.f32.mrb[0].mxu0
    %v3934 = vadd.f32 %v3881, %v3933
    %v3935 = vpop.f32.mrb[0].mxu0
    %v3936 = vadd.f32 %v3883, %v3935
    %v3937 = vpop.f32.mrb[0].mxu0
    %v3938 = vadd.f32 %v3885, %v3937
    %v3939 = vpop.f32.mrb[0].mxu0
    %v3940 = vadd.f32 %v3887, %v3939
    %3941 = vmatprep.mubr.bf16.mxu0 %v629
    %3942 = vmatmul.mubr.bf16.gmra.mrb[0].mxu0 %v628
    %v3943 = vpop.f32.mrb[0].mxu0
    %v3944 = vadd.f32 %v3891, %v3943
    %v3945 = vpop.f32.mrb[0].mxu0
    %v3946 = vadd.f32 %v3893, %v3945
    %v3947 = vpop.f32.mrb[0].mxu0
    %v3948 = vadd.f32 %v3895, %v3947
    %v3949 = vpop.f32.mrb[0].mxu0
    %v3950 = vadd.f32 %v3897, %v3949
    %3951 = vdwg.mxu0
    %3952 = vmatprep.subr.bf16.mxu0 %v2449
    %3953 = vmatpush1.bf16.msra.mxu0 %v2448
    %3954 = vmatprep.subr.bf16.mxu0 %v2457
    %3955 = vmatpush1.bf16.msra.mxu0 %v2456
    %3956 = vmatprep.subr.bf16.mxu0 %v2465
    %3957 = vmatpush1.bf16.msra.mxu0 %v2464
    %3958 = vmatprep.subr.bf16.mxu0 %v2473
    %3959 = vmatpush1.bf16.msra.mxu0 %v2472
    %3960 = vmatprep.subr.bf16.mxu0 %v2481
    %3961 = vmatpush1.bf16.msra.mxu0 %v2480
    %3962 = vmatprep.subr.bf16.mxu0 %v2489
    %3963 = vmatpush1.bf16.msra.mxu0 %v2488
    %3964 = vmatprep.subr.bf16.mxu0 %v2497
    %3965 = vmatpush1.bf16.msra.mxu0 %v2496
    %3966 = vmatprep.subr.bf16.mxu0 %v2505
    %3967 = vmatpush1.bf16.msra.mxu0 %v2504
    %3968 = vmatprep.subr.bf16.mxu0 %v2513
    %3969 = vmatpush1.bf16.msra.mxu0 %v2512
    %3970 = vmatprep.subr.bf16.mxu0 %v2521
    %3971 = vmatpush1.bf16.msra.mxu0 %v2520
    %3972 = vmatprep.subr.bf16.mxu0 %v2529
    %3973 = vmatpush1.bf16.msra.mxu0 %v2528
    %3974 = vmatprep.subr.bf16.mxu0 %v2537
    %3975 = vmatpush1.bf16.msra.mxu0 %v2536
    %3976 = vmatprep.subr.bf16.mxu0 %v2545
    %3977 = vmatpush1.bf16.msra.mxu0 %v2544
    %3978 = vmatprep.subr.bf16.mxu0 %v2553
    %3979 = vmatpush1.bf16.msra.mxu0 %v2552
    %3980 = vmatprep.subr.bf16.mxu0 %v2561
    %3981 = vmatpush1.bf16.msra.mxu0 %v2560
    %3982 = vmatprep.subr.bf16.mxu0 %v2569
    %3983 = vmatpush1.bf16.msra.mxu0 %v2568
    %3984 = vmatprep.mubr.bf16.mxu0 %v623
    %3985 = vmatmul.mubr.bf16.gmra.mrb[0].mxu0 %v622
    %v3986 = vpop.f32.mrb[0].mxu0
    %v3987 = vadd.f32 %v3934, %v3986
    %v3988 = vpop.f32.mrb[0].mxu0
    %v3989 = vadd.f32 %v3936, %v3988
    %v3990 = vpop.f32.mrb[0].mxu0
    %v3991 = vadd.f32 %v3938, %v3990
    %v3992 = vpop.f32.mrb[0].mxu0
    %v3993 = vadd.f32 %v3940, %v3992
    %3994 = vmatprep.mubr.bf16.mxu0 %v631
    %3995 = vmatmul.mubr.bf16.gmra.mrb[0].mxu0 %v630
    %v3996 = vpop.f32.mrb[0].mxu0
    %v3997 = vadd.f32 %v3944, %v3996
    %v3998 = vpop.f32.mrb[0].mxu0
    %v3999 = vadd.f32 %v3946, %v3998
    %v4000 = vpop.f32.mrb[0].mxu0
    %v4001 = vadd.f32 %v3948, %v4000
    %v4002 = vpop.f32.mrb[0].mxu0
    %v4003 = vadd.f32 %v3950, %v4002
    %4004 = vdwg.mxu0
    %4005 = vmatprep.subr.bf16.mxu0 %v2577
    %4006 = vmatpush1.bf16.msra.mxu0 %v2576
    %4007 = vmatprep.subr.bf16.mxu0 %v2585
    %4008 = vmatpush1.bf16.msra.mxu0 %v2584
    %4009 = vmatprep.subr.bf16.mxu0 %v2593
    %4010 = vmatpush1.bf16.msra.mxu0 %v2592
    %4011 = vmatprep.subr.bf16.mxu0 %v2601
    %4012 = vmatpush1.bf16.msra.mxu0 %v2600
    %4013 = vmatprep.subr.bf16.mxu0 %v2609
    %4014 = vmatpush1.bf16.msra.mxu0 %v2608
    %4015 = vmatprep.subr.bf16.mxu0 %v2617
    %4016 = vmatpush1.bf16.msra.mxu0 %v2616
    %4017 = vmatprep.subr.bf16.mxu0 %v2625
    %4018 = vmatpush1.bf16.msra.mxu0 %v2624
    %4019 = vmatprep.subr.bf16.mxu0 %v2633
    %4020 = vmatpush1.bf16.msra.mxu0 %v2632
    %4021 = vmatprep.subr.bf16.mxu0 %v2641
    %4022 = vmatpush1.bf16.msra.mxu0 %v2640
    %4023 = vmatprep.subr.bf16.mxu0 %v2649
    %4024 = vmatpush1.bf16.msra.mxu0 %v2648
    %4025 = vmatprep.subr.bf16.mxu0 %v2657
    %4026 = vmatpush1.bf16.msra.mxu0 %v2656
    %4027 = vmatprep.subr.bf16.mxu0 %v2665
    %4028 = vmatpush1.bf16.msra.mxu0 %v2664
    %4029 = vmatprep.subr.bf16.mxu0 %v2673
    %4030 = vmatpush1.bf16.msra.mxu0 %v2672
    %4031 = vmatprep.subr.bf16.mxu0 %v2681
    %4032 = vmatpush1.bf16.msra.mxu0 %v2680
    %4033 = vmatprep.subr.bf16.mxu0 %v2689
    %4034 = vmatpush1.bf16.msra.mxu0 %v2688
    %4035 = vmatprep.subr.bf16.mxu0 %v2697
    %4036 = vmatpush1.bf16.msra.mxu0 %v2696
    %4037 = vmatprep.mubr.bf16.mxu0 %v625
    %4038 = vmatmul.mubr.bf16.gmra.mrb[0].mxu0 %v624
    %v4039 = vpop.f32.mrb[0].mxu0
    %v4040 = vadd.f32 %v3987, %v4039
    %v4041 = vpop.f32.mrb[0].mxu0
    %v4042 = vadd.f32 %v3989, %v4041
    %v4043 = vpop.f32.mrb[0].mxu0
    %v4044 = vadd.f32 %v3991, %v4043
    %v4045 = vpop.f32.mrb[0].mxu0
    %v4046 = vadd.f32 %v3993, %v4045
    %4047 = vmatprep.mubr.bf16.mxu0 %v633
    %4048 = vmatmul.mubr.bf16.gmra.mrb[0].mxu0 %v632
    %v4049 = vpop.f32.mrb[0].mxu0
    %v4050 = vadd.f32 %v3997, %v4049
    %v4051 = vpop.f32.mrb[0].mxu0
    %v4052 = vadd.f32 %v3999, %v4051
    %v4053 = vpop.f32.mrb[0].mxu0
    %v4054 = vadd.f32 %v4001, %v4053
    %v4055 = vpop.f32.mrb[0].mxu0
    %v4056 = vadd.f32 %v4003, %v4055
    %4057 = vdwg.mxu0
    %v4058 = vmul.f32 %v3404, %v3404
    %v4059 = vmul.f32 %v3406, %v3406
    %v4060 = vmul.f32 %v3616, %v3616
    %v4061 = vmul.f32 %v3618, %v3618
    %v4062 = vmul.f32 %v3408, %v3408
    %v4063 = vmul.f32 %v3410, %v3410
    %v4064 = vmul.f32 %v3620, %v3620
    %v4065 = vmul.f32 %v3622, %v3622
    %v4066 = vmul.f32 %v3414, %v3414
    %v4067 = vmul.f32 %v3416, %v3416
    %v4068 = vmul.f32 %v3626, %v3626
    %v4069 = vmul.f32 %v3628, %v3628
    %v4070 = vmul.f32 %v3418, %v3418
    %v4071 = vmul.f32 %v3420, %v3420
    %v4072 = vmul.f32 %v3630, %v3630
    %v4073 = vmul.f32 %v3632, %v3632
    %v4074 = vmul.f32 %v3828, %v3828
    %v4075 = vmul.f32 %v3830, %v3830
    %v4076 = vmul.f32 %v4040, %v4040
    %v4077 = vmul.f32 %v4042, %v4042
    %v4078 = vmul.f32 %v3832, %v3832
    %v4079 = vmul.f32 %v3834, %v3834
    %v4080 = vmul.f32 %v4044, %v4044
    %v4081 = vmul.f32 %v4046, %v4046
    %v4082 = vmul.f32 %v3838, %v3838
    %v4083 = vmul.f32 %v3840, %v3840
    %v4084 = vmul.f32 %v4050, %v4050
    %v4085 = vmul.f32 %v4052, %v4052
    %v4086 = vmul.f32 %v3842, %v3842
    %v4087 = vmul.f32 %v3844, %v3844
    %v4088 = vmul.f32 %v4054, %v4054
    %v4089 = vmul.f32 %v4056, %v4056
    %v4090 = vadd.f32 %v4058, %v4074
    %v4091 = vadd.f32 %v4059, %v4075
    %v4092 = vadd.f32 %v4060, %v4076
    %v4093 = vadd.f32 %v4061, %v4077
    %v4094 = vadd.f32 %v4062, %v4078
    %v4095 = vadd.f32 %v4063, %v4079
    %v4096 = vadd.f32 %v4064, %v4080
    %v4097 = vadd.f32 %v4065, %v4081
    %v4098 = vadd.f32 %v4066, %v4082
    %v4099 = vadd.f32 %v4067, %v4083
    %v4100 = vadd.f32 %v4068, %v4084
    %v4101 = vadd.f32 %v4069, %v4085
    %v4102 = vadd.f32 %v4070, %v4086
    %v4103 = vadd.f32 %v4071, %v4087
    %v4104 = vadd.f32 %v4072, %v4088
    %v4105 = vadd.f32 %v4073, %v4089
    %v4106 = vld [vmem:[#allocation4] sm:$0xff]
    %v4107 = vld [vmem:[#allocation4 + $0x8] sm:$0xff]
    %v4108 = vld [vmem:[#allocation4 + $0x10] sm:$0xff]
    %v4109 = vld [vmem:[#allocation4 + $0x18] sm:$0xff]
    %v4110 = vld [vmem:[#allocation4 + $0x20] sm:$0xff]
    %v4111 = vld [vmem:[#allocation4 + $0x28] sm:$0xff]
    %v4112 = vld [vmem:[#allocation4 + $0x30] sm:$0xff]
    %v4113 = vld [vmem:[#allocation4 + $0x38] sm:$0xff]
    %v4114 = vld [vmem:[#allocation4 + $0x40] sm:$0xff]
    %v4115 = vld [vmem:[#allocation4 + $0x48] sm:$0xff]
    %v4116 = vld [vmem:[#allocation4 + $0x50] sm:$0xff]
    %v4117 = vld [vmem:[#allocation4 + $0x58] sm:$0xff]
    %v4118 = vld [vmem:[#allocation4 + $0x60] sm:$0xff]
    %v4119 = vld [vmem:[#allocation4 + $0x68] sm:$0xff]
    %v4120 = vld [vmem:[#allocation4 + $0x70] sm:$0xff]
    %v4121 = vld [vmem:[#allocation4 + $0x78] sm:$0xff]
    %v4122 = vld [vmem:[#allocation4 + $0x80] sm:$0xff]
    %v4123 = vld [vmem:[#allocation4 + $0x88] sm:$0xff]
    %v4124 = vld [vmem:[#allocation4 + $0x90] sm:$0xff]
    %v4125 = vld [vmem:[#allocation4 + $0x98] sm:$0xff]
    %v4126 = vld [vmem:[#allocation4 + $0xa0] sm:$0xff]
    %v4127 = vld [vmem:[#allocation4 + $0xa8] sm:$0xff]
    %v4128 = vld [vmem:[#allocation4 + $0xb0] sm:$0xff]
    %v4129 = vld [vmem:[#allocation4 + $0xb8] sm:$0xff]
    %v4130 = vld [vmem:[#allocation4 + $0xc0] sm:$0xff]
    %v4131 = vld [vmem:[#allocation4 + $0xc8] sm:$0xff]
    %v4132 = vld [vmem:[#allocation4 + $0xd0] sm:$0xff]
    %v4133 = vld [vmem:[#allocation4 + $0xd8] sm:$0xff]
    %v4134 = vld [vmem:[#allocation4 + $0xe0] sm:$0xff]
    %v4135 = vld [vmem:[#allocation4 + $0xe8] sm:$0xff]
    %v4136 = vld [vmem:[#allocation4 + $0xf0] sm:$0xff]
    %v4137 = vld [vmem:[#allocation4 + $0xf8] sm:$0xff]
    %v4138 = vld [vmem:[#allocation4 + $0x100] sm:$0xff]
    %v4139 = vld [vmem:[#allocation4 + $0x108] sm:$0xff]
    %v4140 = vld [vmem:[#allocation4 + $0x110] sm:$0xff]
    %v4141 = vld [vmem:[#allocation4 + $0x118] sm:$0xff]
    %v4142 = vld [vmem:[#allocation4 + $0x120] sm:$0xff]
    %v4143 = vld [vmem:[#allocation4 + $0x128] sm:$0xff]
    %v4144 = vld [vmem:[#allocation4 + $0x130] sm:$0xff]
    %v4145 = vld [vmem:[#allocation4 + $0x138] sm:$0xff]
    %v4146 = vld [vmem:[#allocation4 + $0x140] sm:$0xff]
    %v4147 = vld [vmem:[#allocation4 + $0x148] sm:$0xff]
    %v4148 = vld [vmem:[#allocation4 + $0x150] sm:$0xff]
    %v4149 = vld [vmem:[#allocation4 + $0x158] sm:$0xff]
    %v4150 = vld [vmem:[#allocation4 + $0x160] sm:$0xff]
    %v4151 = vld [vmem:[#allocation4 + $0x168] sm:$0xff]
    %v4152 = vld [vmem:[#allocation4 + $0x170] sm:$0xff]
    %v4153 = vld [vmem:[#allocation4 + $0x178] sm:$0xff]
    %v4154 = vld [vmem:[#allocation4 + $0x180] sm:$0xff]
    %v4155 = vld [vmem:[#allocation4 + $0x188] sm:$0xff]
    %v4156 = vld [vmem:[#allocation4 + $0x190] sm:$0xff]
    %v4157 = vld [vmem:[#allocation4 + $0x198] sm:$0xff]
    %v4158 = vld [vmem:[#allocation4 + $0x1a0] sm:$0xff]
    %v4159 = vld [vmem:[#allocation4 + $0x1a8] sm:$0xff]
    %v4160 = vld [vmem:[#allocation4 + $0x1b0] sm:$0xff]
    %v4161 = vld [vmem:[#allocation4 + $0x1b8] sm:$0xff]
    %v4162 = vld [vmem:[#allocation4 + $0x1c0] sm:$0xff]
    %v4163 = vld [vmem:[#allocation4 + $0x1c8] sm:$0xff]
    %v4164 = vld [vmem:[#allocation4 + $0x1d0] sm:$0xff]
    %v4165 = vld [vmem:[#allocation4 + $0x1d8] sm:$0xff]
    %v4166 = vld [vmem:[#allocation4 + $0x1e0] sm:$0xff]
    %v4167 = vld [vmem:[#allocation4 + $0x1e8] sm:$0xff]
    %v4168 = vld [vmem:[#allocation4 + $0x1f0] sm:$0xff]
    %v4169 = vld [vmem:[#allocation4 + $0x1f8] sm:$0xff]
    %4170 = vmatprep.subr.mxu0 0.0
    %4171 = vmatpush1.msra.mxu0 %v4106
    %4172 = vmatprep.subr.mxu0 0.0
    %4173 = vmatpush1.msra.mxu0 %v4107
    %4174 = vmatprep.subr.mxu0 0.0
    %4175 = vmatpush1.msra.mxu0 %v4108
    %4176 = vmatprep.subr.mxu0 0.0
    %4177 = vmatpush1.msra.mxu0 %v4109
    %4178 = vmatprep.subr.mxu0 0.0
    %4179 = vmatpush1.msra.mxu0 %v4110
    %4180 = vmatprep.subr.mxu0 0.0
    %4181 = vmatpush1.msra.mxu0 %v4111
    %4182 = vmatprep.subr.mxu0 0.0
    %4183 = vmatpush1.msra.mxu0 %v4112
    %4184 = vmatprep.subr.mxu0 0.0
    %4185 = vmatpush1.msra.mxu0 %v4113
    %4186 = vmatprep.subr.mxu0 0.0
    %4187 = vmatpush1.msra.mxu0 %v4114
    %4188 = vmatprep.subr.mxu0 0.0
    %4189 = vmatpush1.msra.mxu0 %v4115
    %4190 = vmatprep.subr.mxu0 0.0
    %4191 = vmatpush1.msra.mxu0 %v4116
    %4192 = vmatprep.subr.mxu0 0.0
    %4193 = vmatpush1.msra.mxu0 %v4117
    %4194 = vmatprep.subr.mxu0 0.0
    %4195 = vmatpush1.msra.mxu0 %v4118
    %4196 = vmatprep.subr.mxu0 0.0
    %4197 = vmatpush1.msra.mxu0 %v4119
    %4198 = vmatprep.subr.mxu0 0.0
    %4199 = vmatpush1.msra.mxu0 %v4120
    %4200 = vmatprep.subr.mxu0 0.0
    %4201 = vmatpush1.msra.mxu0 %v4121
    %4202 = vmatprep.subr.mxu0 0.0
    %4203 = vmatpush1.msra.mxu0 %v4122
    %4204 = vmatprep.subr.mxu0 0.0
    %4205 = vmatpush1.msra.mxu0 %v4123
    %4206 = vmatprep.subr.mxu0 0.0
    %4207 = vmatpush1.msra.mxu0 %v4124
    %4208 = vmatprep.subr.mxu0 0.0
    %4209 = vmatpush1.msra.mxu0 %v4125
    %4210 = vmatprep.subr.mxu0 0.0
    %4211 = vmatpush1.msra.mxu0 %v4126
    %4212 = vmatprep.subr.mxu0 0.0
    %4213 = vmatpush1.msra.mxu0 %v4127
    %4214 = vmatprep.subr.mxu0 0.0
    %4215 = vmatpush1.msra.mxu0 %v4128
    %4216 = vmatprep.subr.mxu0 0.0
    %4217 = vmatpush1.msra.mxu0 %v4129
    %4218 = vmatprep.subr.mxu0 0.0
    %4219 = vmatpush1.msra.mxu0 %v4130
    %4220 = vmatprep.subr.mxu0 0.0
    %4221 = vmatpush1.msra.mxu0 %v4131
    %4222 = vmatprep.subr.mxu0 0.0
    %4223 = vmatpush1.msra.mxu0 %v4132
    %4224 = vmatprep.subr.mxu0 0.0
    %4225 = vmatpush1.msra.mxu0 %v4133
    %4226 = vmatprep.subr.mxu0 0.0
    %4227 = vmatpush1.msra.mxu0 %v4134
    %4228 = vmatprep.subr.mxu0 0.0
    %4229 = vmatpush1.msra.mxu0 %v4135
    %4230 = vmatprep.subr.mxu0 0.0
    %4231 = vmatpush1.msra.mxu0 %v4136
    %4232 = vmatprep.subr.mxu0 0.0
    %4233 = vmatpush1.msra.mxu0 %v4137
    %4234 = vmatprep.mubr.f32.mxu0 %v4091
    %4235 = vmatmul.mubr.f32.gmra.mrb[0].mxu0 %v4090
    %v4236 = vpop.f32.mrb[0].mxu0
    %v4237 = vadd.f32 0.0, %v4236
    %v4238 = vpop.f32.mrb[0].mxu0
    %4239 = vmatprep.mubr.f32.mxu0 %v4095
    %4240 = vmatmul.mubr.f32.gmra.mrb[0].mxu0 %v4094
    %v4241 = vpop.f32.mrb[0].mxu0
    %v4242 = vadd.f32 0.0, %v4241
    %v4243 = vpop.f32.mrb[0].mxu0
    %4244 = vmatprep.mubr.f32.mxu0 %v4099
    %4245 = vmatmul.mubr.f32.gmra.mrb[0].mxu0 %v4098
    %v4246 = vpop.f32.mrb[0].mxu0
    %v4247 = vadd.f32 0.0, %v4246
    %v4248 = vpop.f32.mrb[0].mxu0
    %4249 = vmatprep.mubr.f32.mxu0 %v4103
    %4250 = vmatmul.mubr.f32.gmra.mrb[0].mxu0 %v4102
    %v4251 = vpop.f32.mrb[0].mxu0
    %v4252 = vadd.f32 0.0, %v4251
    %v4253 = vpop.f32.mrb[0].mxu0
    %4254 = vdwg.mxu0
    %4255 = vmatprep.subr.mxu0 0.0
    %4256 = vmatpush1.msra.mxu0 %v4138
    %4257 = vmatprep.subr.mxu0 0.0
    %4258 = vmatpush1.msra.mxu0 %v4139
    %4259 = vmatprep.subr.mxu0 0.0
    %4260 = vmatpush1.msra.mxu0 %v4140
    %4261 = vmatprep.subr.mxu0 0.0
    %4262 = vmatpush1.msra.mxu0 %v4141
    %4263 = vmatprep.subr.mxu0 0.0
    %4264 = vmatpush1.msra.mxu0 %v4142
    %4265 = vmatprep.subr.mxu0 0.0
    %4266 = vmatpush1.msra.mxu0 %v4143
    %4267 = vmatprep.subr.mxu0 0.0
    %4268 = vmatpush1.msra.mxu0 %v4144
    %4269 = vmatprep.subr.mxu0 0.0
    %4270 = vmatpush1.msra.mxu0 %v4145
    %4271 = vmatprep.subr.mxu0 0.0
    %4272 = vmatpush1.msra.mxu0 %v4146
    %4273 = vmatprep.subr.mxu0 0.0
    %4274 = vmatpush1.msra.mxu0 %v4147
    %4275 = vmatprep.subr.mxu0 0.0
    %4276 = vmatpush1.msra.mxu0 %v4148
    %4277 = vmatprep.subr.mxu0 0.0
    %4278 = vmatpush1.msra.mxu0 %v4149
    %4279 = vmatprep.subr.mxu0 0.0
    %4280 = vmatpush1.msra.mxu0 %v4150
    %4281 = vmatprep.subr.mxu0 0.0
    %4282 = vmatpush1.msra.mxu0 %v4151
    %4283 = vmatprep.subr.mxu0 0.0
    %4284 = vmatpush1.msra.mxu0 %v4152
    %4285 = vmatprep.subr.mxu0 0.0
    %4286 = vmatpush1.msra.mxu0 %v4153
    %4287 = vmatprep.subr.mxu0 0.0
    %4288 = vmatpush1.msra.mxu0 %v4154
    %4289 = vmatprep.subr.mxu0 0.0
    %4290 = vmatpush1.msra.mxu0 %v4155
    %4291 = vmatprep.subr.mxu0 0.0
    %4292 = vmatpush1.msra.mxu0 %v4156
    %4293 = vmatprep.subr.mxu0 0.0
    %4294 = vmatpush1.msra.mxu0 %v4157
    %4295 = vmatprep.subr.mxu0 0.0
    %4296 = vmatpush1.msra.mxu0 %v4158
    %4297 = vmatprep.subr.mxu0 0.0
    %4298 = vmatpush1.msra.mxu0 %v4159
    %4299 = vmatprep.subr.mxu0 0.0
    %4300 = vmatpush1.msra.mxu0 %v4160
    %4301 = vmatprep.subr.mxu0 0.0
    %4302 = vmatpush1.msra.mxu0 %v4161
    %4303 = vmatprep.subr.mxu0 0.0
    %4304 = vmatpush1.msra.mxu0 %v4162
    %4305 = vmatprep.subr.mxu0 0.0
    %4306 = vmatpush1.msra.mxu0 %v4163
    %4307 = vmatprep.subr.mxu0 0.0
    %4308 = vmatpush1.msra.mxu0 %v4164
    %4309 = vmatprep.subr.mxu0 0.0
    %4310 = vmatpush1.msra.mxu0 %v4165
    %4311 = vmatprep.subr.mxu0 0.0
    %4312 = vmatpush1.msra.mxu0 %v4166
    %4313 = vmatprep.subr.mxu0 0.0
    %4314 = vmatpush1.msra.mxu0 %v4167
    %4315 = vmatprep.subr.mxu0 0.0
    %4316 = vmatpush1.msra.mxu0 %v4168
    %4317 = vmatprep.subr.mxu0 0.0
    %4318 = vmatpush1.msra.mxu0 %v4169
    %4319 = vmatprep.mubr.f32.mxu0 %v4093
    %4320 = vmatmul.mubr.f32.gmra.mrb[0].mxu0 %v4092
    %v4321 = vpop.f32.mrb[0].mxu0
    %v4322 = vadd.f32 %v4237, %v4321
    %v4323 = vpop.f32.mrb[0].mxu0
    %4324 = vmatprep.mubr.f32.mxu0 %v4097
    %4325 = vmatmul.mubr.f32.gmra.mrb[0].mxu0 %v4096
    %v4326 = vpop.f32.mrb[0].mxu0
    %v4327 = vadd.f32 %v4242, %v4326
    %v4328 = vpop.f32.mrb[0].mxu0
    %4329 = vmatprep.mubr.f32.mxu0 %v4101
    %4330 = vmatmul.mubr.f32.gmra.mrb[0].mxu0 %v4100
    %v4331 = vpop.f32.mrb[0].mxu0
    %v4332 = vadd.f32 %v4247, %v4331
    %v4333 = vpop.f32.mrb[0].mxu0
    %4334 = vmatprep.mubr.f32.mxu0 %v4105
    %4335 = vmatmul.mubr.f32.gmra.mrb[0].mxu0 %v4104
    %v4336 = vpop.f32.mrb[0].mxu0
    %v4337 = vadd.f32 %v4252, %v4336
    %v4338 = vpop.f32.mrb[0].mxu0
    %4339 = vdwg.mxu0
    %4340 = vst [vmem:[%s3] sm:$0xff] %v4322
    %4341 = vst [vmem:[%s3 + $0x8] sm:$0xff] %v4327
    %4342 = vst [vmem:[%s3 + $0x10] sm:$0xff] %v4332
    %4343 = vst [vmem:[%s3 + $0x18] sm:$0xff] %v4337
    // Predicated region
    $region22: #{mel_spectrogram_3channel.1} parent=1 // pred_check
      _
    $region23: #{mel_spectrogram_3channel.1} parent=1 // pred_check_branch
      %4345 = sbr.rel (0) target = $region25
    $region24: #{mel_spectrogram_3channel.1} parent=1 // pred_region
      _
    $region25: #{mel_spectrogram_3channel.1} parent=1 // pred_fallthru
      _
    // Predicated region
    $region26: #{mel_spectrogram_3channel.1} parent=1 // pred_check
      _
    $region27: #{mel_spectrogram_3channel.1} parent=1 // pred_check_branch
      %4347 = sbr.rel (0) target = $region29
    $region28: #{mel_spectrogram_3channel.1} parent=1 // pred_region
      _
    $region29: #{mel_spectrogram_3channel.1} parent=1 // pred_fallthru
      _
    %4348 = vsyncpa [#allocation3], 1
    %4349 = vsyncpa [#allocation5], 1

</llo_original>
